<compile_context>
chip_gen: v7x
topology: tpu7x:2x2x1
jax: 0.10.0
libtpu: 0.0.40
codegen_flags: <defaults>
</compile_context>

<pallas_src>
import functools

import jax
import jax.numpy as jnp
from jax.experimental import pallas as pl
from jax.experimental.pallas import tpu as pltpu


def _round_up(x, m):
    return (x + m - 1) // m * m


def _conv_bn_relu_kernel(x_ref, w_ref, shift_ref, o_ref, *,
                         kh_size, kw_size, tile_h, wo_pad, cin_pad, cout_pad):
    # x_ref:     (1, hp_pad, wp_pad, cin_pad)   bf16  whole padded image of batch b
    # w_ref:     (KH*KW, cin_pad, cout_pad)     bf16  BN-folded conv weights (per tap)
    # shift_ref: (1, cout_pad)                  f32   folded conv-bias + BN shift
    # o_ref:     (1, tile_h*wo_pad, cout_pad)   f32   output row tile (flattened H,W)
    row0 = pl.multiple_of(pl.program_id(1) * tile_h, tile_h)

    acc = None
    # KxK conv as KH*KW shifted-window matmuls on the MXU (2-D dots, f32 accumulate).
    for kh in range(kh_size):
        for kw in range(kw_size):
            xs = x_ref[0, pl.ds(row0 + kh, tile_h), pl.ds(kw, wo_pad), :]
            # (tile_h, wo_pad, cin_pad) -> (tile_h*wo_pad, cin_pad):
            # wo_pad is a multiple of 8 and the lane dim is unchanged, so this
            # merge of major dims is layout-preserving.
            patch = xs.reshape(tile_h * wo_pad, cin_pad)
            d = jnp.dot(patch, w_ref[kh * kw_size + kw],
                        preferred_element_type=jnp.float32)
            acc = d if acc is None else acc + d

    # Folded bias/BN + ReLU epilogue, kept in f32.
    y = jnp.maximum(acc + shift_ref[...], 0.0)
    o_ref[0] = y.astype(o_ref.dtype)


def conv_layer_forward(x_nchw, weight, bias, bn_gamma, bn_beta, bn_mean, bn_var,
                       *, stride=1, padding=0, eps=1e-5):
    """ConvLayer forward. x_nchw: (N, Cin, H, W). weight: (Cout, Cin, KH, KW)."""
    assert stride == 1, "kernel implemented for stride=1 (module default)"
    n, cin, h, w = x_nchw.shape
    cout, cin_w, kh, kw = weight.shape
    assert cin == cin_w

    # ---------------- parameter prep (wrapper-side, not hot path) -------------
    scale = bn_gamma / jnp.sqrt(bn_var + eps)                 # (Cout,)
    w_folded = weight * scale[:, None, None, None]            # W' = W * scale
    shift = (bias - bn_mean) * scale + bn_beta                # shift' = (b - mu)*s + beta

    cin_pad = _round_up(cin, 16)                              # bf16 sublane packing
    cout_pad = _round_up(cout, 128)                           # lane-dense output / MXU cols

    w_hwio = jnp.transpose(w_folded, (2, 3, 1, 0))            # (KH, KW, Cin, Cout)
    w_hwio = jnp.pad(w_hwio, ((0, 0), (0, 0),
                              (0, cin_pad - cin), (0, cout_pad - cout)))
    w_packed = w_hwio.reshape(kh * kw, cin_pad, cout_pad).astype(jnp.bfloat16)

    shift_p = jnp.pad(shift, (0, cout_pad - cout)).reshape(1, cout_pad)
    shift_p = shift_p.astype(jnp.float32)

    # ---------------- input layout + alignment padding ------------------------
    x = jnp.transpose(x_nchw, (0, 2, 3, 1))                   # NHWC
    if padding > 0:
        x = jnp.pad(x, ((0, 0), (padding, padding), (padding, padding), (0, 0)))
    hp, wp = x.shape[1], x.shape[2]
    ho, wo = hp - kh + 1, wp - kw + 1
    assert ho > 0 and wo > 0

    wo_pad = _round_up(wo, 8)
    wp_pad = wo_pad + kw - 1
    w_bytes = kh * kw * cin_pad * cout_pad * 2

    # Adaptive row-tile: multiple of 8, target ~512 flattened output rows per
    # step (MXU M-efficiency), bounded by the image height and a VMEM budget.
    th_cap = _round_up(ho, 8)
    th = min(th_cap, max(8, _round_up(max(1, 512 // wo_pad), 8)))

    def _vmem_estimate(th_):
        ho_p = _round_up(ho, th_)
        hp_p = ho_p + kh - 1
        x_blk = hp_p * wp_pad * cin_pad * 2
        o_blk = th_ * wo_pad * cout_pad * 4
        # double-buffered blocks + weights + live accumulator + shift
        return 2 * x_blk + 2 * w_bytes + 2 * o_blk + o_blk + 2 * cout_pad * 4

    vmem_budget = 24 * 1024 * 1024
    while th > 8 and _vmem_estimate(th) > vmem_budget:
        th -= 8

    ho_pad = _round_up(ho, th)
    hp_pad = ho_pad + kh - 1

    x = jnp.pad(x, ((0, 0), (0, hp_pad - hp), (0, wp_pad - wp), (0, cin_pad - cin)))
    x = x.astype(jnp.bfloat16)

    grid = (n, ho_pad // th)

    kernel = functools.partial(_conv_bn_relu_kernel,
                               kh_size=kh, kw_size=kw, tile_h=th,
                               wo_pad=wo_pad, cin_pad=cin_pad, cout_pad=cout_pad)

    vmem_needed = _vmem_estimate(th)
    vmem_limit = int(min(48 * 1024 * 1024, max(8 * 1024 * 1024, 2 * vmem_needed)))

    flops = 2 * n * ho * wo * kh * kw * cin * cout
    bytes_accessed = (x.size * 2 + w_packed.size * 2
                      + n * ho_pad * wo_pad * cout_pad * 4 + shift_p.size * 4)

    out_flat = pl.pallas_call(
        kernel,
        out_shape=jax.ShapeDtypeStruct((n, ho_pad * wo_pad, cout_pad), jnp.float32),
        grid_spec=pltpu.PrefetchScalarGridSpec(
            num_scalar_prefetch=0,
            grid=grid,
            in_specs=[
                # whole (padded) image of batch b, resident across the row-tile axis
                pl.BlockSpec((1, hp_pad, wp_pad, cin_pad), lambda b, r: (b, 0, 0, 0)),
                pl.BlockSpec((kh * kw, cin_pad, cout_pad), lambda b, r: (0, 0, 0)),
                pl.BlockSpec((1, cout_pad), lambda b, r: (0, 0)),
            ],
            out_specs=pl.BlockSpec((1, th * wo_pad, cout_pad), lambda b, r: (b, r, 0)),
        ),
        compiler_params=pltpu.CompilerParams(
            dimension_semantics=("parallel", "parallel"),
            vmem_limit_bytes=vmem_limit),
        cost_estimate=pl.CostEstimate(flops=flops, transcendentals=0,
                                      bytes_accessed=bytes_accessed),
    )(x, w_packed, shift_p)

    out = out_flat.reshape(n, ho_pad, wo_pad, cout_pad)[:, :ho, :wo, :cout]
    return jnp.transpose(out, (0, 3, 1, 2))                   # back to NCHW


# ------------------------------ references -----------------------------------
def _reference_f32(x, weight, bias, gamma, beta, mean, var, eps=1e-5, padding=0):
    """Exact module semantics in f32 (Conv2d + BatchNorm2d(eval) + ReLU)."""
    out = jax.lax.conv_general_dilated(
        x, weight, (1, 1), [(padding, padding), (padding, padding)],
        dimension_numbers=("NCHW", "OIHW", "NCHW"))
    out = out + bias[None, :, None, None]
    scale = gamma / jnp.sqrt(var + eps)
    shift = beta - mean * scale
    return jnp.maximum(out * scale[None, :, None, None] + shift[None, :, None, None], 0.0)


def _reference_bf16(x, weight, bias, gamma, beta, mean, var, eps=1e-5, padding=0):
    """Same numerics as the kernel: BN-folded bf16 weights/inputs, f32 accumulate."""
    scale = gamma / jnp.sqrt(var + eps)
    w_f = (weight * scale[:, None, None, None]).astype(jnp.bfloat16).astype(jnp.float32)
    x_f = x.astype(jnp.bfloat16).astype(jnp.float32)
    shift = (bias - mean) * scale + beta
    out = jax.lax.conv_general_dilated(
        x_f, w_f, (1, 1), [(padding, padding), (padding, padding)],
        dimension_numbers=("NCHW", "OIHW", "NCHW"))
    return jnp.maximum(out + shift[None, :, None, None], 0.0)


if __name__ == "__main__":
    # Module config (defaults): kernel_size=3, stride=1, dilation=1, groups=1,
    # bias=True, dropout=0.0 (identity), norm=BatchNorm2d (eval), act=ReLU.
    N, Cin, H, W = 2, 4, 16, 16
    Cout, K = 8, 3

    key = jax.random.PRNGKey(0)
    k_x, k_w, k_b, k_g, k_be, k_m, k_v = jax.random.split(key, 7)

    x = jax.random.normal(k_x, (N, Cin, H, W), dtype=jnp.float32)
    weight = jax.random.normal(k_w, (Cout, Cin, K, K), dtype=jnp.float32) * 0.1
    bias = jax.random.normal(k_b, (Cout,), dtype=jnp.float32) * 0.1
    bn_gamma = 1.0 + 0.1 * jax.random.normal(k_g, (Cout,), dtype=jnp.float32)
    bn_beta = 0.1 * jax.random.normal(k_be, (Cout,), dtype=jnp.float32)
    bn_mean = 0.1 * jax.random.normal(k_m, (Cout,), dtype=jnp.float32)
    bn_var = jnp.abs(1.0 + 0.1 * jax.random.normal(k_v, (Cout,), dtype=jnp.float32))

    for padding in (0, 1):   # cover both the unpadded and padded conv paths
        out = conv_layer_forward(x, weight, bias, bn_gamma, bn_beta, bn_mean, bn_var,
                                 stride=1, padding=padding)
        out = jax.block_until_ready(out)

        ho = H + 2 * padding - K + 1
        assert out.shape == (N, Cout, ho, ho), out.shape

        # Tight check vs. a reference with identical (bf16-rounded, BN-folded) numerics.
        ref_b = _reference_bf16(x, weight, bias, bn_gamma, bn_beta, bn_mean, bn_var,
                                padding=padding)
        err_b = float(jnp.max(jnp.abs(out - ref_b)))
        assert jnp.allclose(out, ref_b, atol=2e-4, rtol=2e-4), err_b

        # Loose check vs. the exact f32 module semantics (bf16 MXU tolerance).
        ref_f = _reference_f32(x, weight, bias, bn_gamma, bn_beta, bn_mean, bn_var,
                               padding=padding)
        err_f = float(jnp.max(jnp.abs(out - ref_f)))
        assert jnp.allclose(out, ref_f, atol=5e-2, rtol=5e-2), err_f

    print("KERNEL_OK")
</pallas_src>

<mosaic_0001>
module attributes {stable_mosaic.version = 11 : i64} {
  func.func @_conv_bn_relu_kernel(%arg0: i32, %arg1: i32, %arg2: memref<1x18x18x16xbf16, #tpu.memory_space<vmem>>, %arg3: memref<9x16x128xbf16, #tpu.memory_space<vmem>>, %arg4: memref<1x128xf32, #tpu.memory_space<vmem>>, %arg5: memref<1x256x128xf32, #tpu.memory_space<vmem>>) attributes {dimension_semantics = [#tpu.dimension_semantics<parallel>, #tpu.dimension_semantics<parallel>], iteration_bounds = array<i64: 2, 1>, scalar_prefetch = 0 : i64, scratch_operands = 0 : i64, tpu.core_type = #tpu.core_type<tc>, window_params = [{transform_indices = @transform_0, window_bounds = array<i64: 1, 18, 18, 16>}, {pipeline_mode = #tpu.pipeline_mode<synchronous>, transform_indices = @transform_1, window_bounds = array<i64: 9, 16, 128>}, {pipeline_mode = #tpu.pipeline_mode<synchronous>, transform_indices = @transform_2, window_bounds = array<i64: 1, 128>}, {transform_indices = @transform_3, window_bounds = array<i64: 1, 256, 128>}]} {
    %c16_i32 = arith.constant 16 : i32
    %0 = arith.muli %arg1, %c16_i32 : i32
    %1 = tpu.assume_multiple %0, 16 : i32
    %c0_i32 = arith.constant 0 : i32
    %2 = arith.addi %1, %c0_i32 : i32
    %c0 = arith.constant 0 : index
    %3 = arith.index_cast %2 : i32 to index
    %c0_0 = arith.constant 0 : index
    %c0_1 = arith.constant 0 : index
    %4 = vector.load %arg2[%c0, %3, %c0_0, %c0_1] : memref<1x18x18x16xbf16, #tpu.memory_space<vmem>>, vector<1x16x16x16xbf16>
    %5 = vector.shape_cast %4 : vector<1x16x16x16xbf16> to vector<16x16x16xbf16>
    %6 = vector.shape_cast %5 : vector<16x16x16xbf16> to vector<256x16xbf16>
    %c0_2 = arith.constant 0 : index
    %c0_3 = arith.constant 0 : index
    %c0_4 = arith.constant 0 : index
    %7 = vector.load %arg3[%c0_2, %c0_3, %c0_4] : memref<9x16x128xbf16, #tpu.memory_space<vmem>>, vector<1x16x128xbf16>
    %8 = vector.shape_cast %7 : vector<1x16x128xbf16> to vector<16x128xbf16>
    %cst = arith.constant dense<0.000000e+00> : vector<256x128xf32>
    %9 = tpu.matmul %6, %8, %cst {dimension_numbers = #tpu.dot_dimension_numbers<[1], [0], [0], [1], [0, 0, 1, 1], [], []>} : vector<256x16xbf16>, vector<16x128xbf16>, vector<256x128xf32> -> vector<256x128xf32>
    %c0_i32_5 = arith.constant 0 : i32
    %10 = arith.addi %1, %c0_i32_5 : i32
    %c0_6 = arith.constant 0 : index
    %11 = arith.index_cast %10 : i32 to index
    %c1 = arith.constant 1 : index
    %c0_7 = arith.constant 0 : index
    %12 = vector.load %arg2[%c0_6, %11, %c1, %c0_7] : memref<1x18x18x16xbf16, #tpu.memory_space<vmem>>, vector<1x16x16x16xbf16>
    %13 = vector.shape_cast %12 : vector<1x16x16x16xbf16> to vector<16x16x16xbf16>
    %14 = vector.shape_cast %13 : vector<16x16x16xbf16> to vector<256x16xbf16>
    %c1_8 = arith.constant 1 : index
    %c0_9 = arith.constant 0 : index
    %c0_10 = arith.constant 0 : index
    %15 = vector.load %arg3[%c1_8, %c0_9, %c0_10] : memref<9x16x128xbf16, #tpu.memory_space<vmem>>, vector<1x16x128xbf16>
    %16 = vector.shape_cast %15 : vector<1x16x128xbf16> to vector<16x128xbf16>
    %cst_11 = arith.constant dense<0.000000e+00> : vector<256x128xf32>
    %17 = tpu.matmul %14, %16, %cst_11 {dimension_numbers = #tpu.dot_dimension_numbers<[1], [0], [0], [1], [0, 0, 1, 1], [], []>} : vector<256x16xbf16>, vector<16x128xbf16>, vector<256x128xf32> -> vector<256x128xf32>
    %18 = arith.addf %9, %17 : vector<256x128xf32>
    %c0_i32_12 = arith.constant 0 : i32
    %19 = arith.addi %1, %c0_i32_12 : i32
    %c0_13 = arith.constant 0 : index
    %20 = arith.index_cast %19 : i32 to index
    %c2 = arith.constant 2 : index
    %c0_14 = arith.constant 0 : index
    %21 = vector.load %arg2[%c0_13, %20, %c2, %c0_14] : memref<1x18x18x16xbf16, #tpu.memory_space<vmem>>, vector<1x16x16x16xbf16>
    %22 = vector.shape_cast %21 : vector<1x16x16x16xbf16> to vector<16x16x16xbf16>
    %23 = vector.shape_cast %22 : vector<16x16x16xbf16> to vector<256x16xbf16>
    %c2_15 = arith.constant 2 : index
    %c0_16 = arith.constant 0 : index
    %c0_17 = arith.constant 0 : index
    %24 = vector.load %arg3[%c2_15, %c0_16, %c0_17] : memref<9x16x128xbf16, #tpu.memory_space<vmem>>, vector<1x16x128xbf16>
    %25 = vector.shape_cast %24 : vector<1x16x128xbf16> to vector<16x128xbf16>
    %cst_18 = arith.constant dense<0.000000e+00> : vector<256x128xf32>
    %26 = tpu.matmul %23, %25, %cst_18 {dimension_numbers = #tpu.dot_dimension_numbers<[1], [0], [0], [1], [0, 0, 1, 1], [], []>} : vector<256x16xbf16>, vector<16x128xbf16>, vector<256x128xf32> -> vector<256x128xf32>
    %27 = arith.addf %18, %26 : vector<256x128xf32>
    %c1_i32 = arith.constant 1 : i32
    %28 = arith.addi %1, %c1_i32 : i32
    %c0_19 = arith.constant 0 : index
    %29 = arith.index_cast %28 : i32 to index
    %c0_20 = arith.constant 0 : index
    %c0_21 = arith.constant 0 : index
    %30 = vector.load %arg2[%c0_19, %29, %c0_20, %c0_21] : memref<1x18x18x16xbf16, #tpu.memory_space<vmem>>, vector<1x16x16x16xbf16>
    %31 = vector.shape_cast %30 : vector<1x16x16x16xbf16> to vector<16x16x16xbf16>
    %32 = vector.shape_cast %31 : vector<16x16x16xbf16> to vector<256x16xbf16>
    %c3 = arith.constant 3 : index
    %c0_22 = arith.constant 0 : index
    %c0_23 = arith.constant 0 : index
    %33 = vector.load %arg3[%c3, %c0_22, %c0_23] : memref<9x16x128xbf16, #tpu.memory_space<vmem>>, vector<1x16x128xbf16>
    %34 = vector.shape_cast %33 : vector<1x16x128xbf16> to vector<16x128xbf16>
    %cst_24 = arith.constant dense<0.000000e+00> : vector<256x128xf32>
    %35 = tpu.matmul %32, %34, %cst_24 {dimension_numbers = #tpu.dot_dimension_numbers<[1], [0], [0], [1], [0, 0, 1, 1], [], []>} : vector<256x16xbf16>, vector<16x128xbf16>, vector<256x128xf32> -> vector<256x128xf32>
    %36 = arith.addf %27, %35 : vector<256x128xf32>
    %c1_i32_25 = arith.constant 1 : i32
    %37 = arith.addi %1, %c1_i32_25 : i32
    %c0_26 = arith.constant 0 : index
    %38 = arith.index_cast %37 : i32 to index
    %c1_27 = arith.constant 1 : index
    %c0_28 = arith.constant 0 : index
    %39 = vector.load %arg2[%c0_26, %38, %c1_27, %c0_28] : memref<1x18x18x16xbf16, #tpu.memory_space<vmem>>, vector<1x16x16x16xbf16>
    %40 = vector.shape_cast %39 : vector<1x16x16x16xbf16> to vector<16x16x16xbf16>
    %41 = vector.shape_cast %40 : vector<16x16x16xbf16> to vector<256x16xbf16>
    %c4 = arith.constant 4 : index
    %c0_29 = arith.constant 0 : index
    %c0_30 = arith.constant 0 : index
    %42 = vector.load %arg3[%c4, %c0_29, %c0_30] : memref<9x16x128xbf16, #tpu.memory_space<vmem>>, vector<1x16x128xbf16>
    %43 = vector.shape_cast %42 : vector<1x16x128xbf16> to vector<16x128xbf16>
    %cst_31 = arith.constant dense<0.000000e+00> : vector<256x128xf32>
    %44 = tpu.matmul %41, %43, %cst_31 {dimension_numbers = #tpu.dot_dimension_numbers<[1], [0], [0], [1], [0, 0, 1, 1], [], []>} : vector<256x16xbf16>, vector<16x128xbf16>, vector<256x128xf32> -> vector<256x128xf32>
    %45 = arith.addf %36, %44 : vector<256x128xf32>
    %c1_i32_32 = arith.constant 1 : i32
    %46 = arith.addi %1, %c1_i32_32 : i32
    %c0_33 = arith.constant 0 : index
    %47 = arith.index_cast %46 : i32 to index
    %c2_34 = arith.constant 2 : index
    %c0_35 = arith.constant 0 : index
    %48 = vector.load %arg2[%c0_33, %47, %c2_34, %c0_35] : memref<1x18x18x16xbf16, #tpu.memory_space<vmem>>, vector<1x16x16x16xbf16>
    %49 = vector.shape_cast %48 : vector<1x16x16x16xbf16> to vector<16x16x16xbf16>
    %50 = vector.shape_cast %49 : vector<16x16x16xbf16> to vector<256x16xbf16>
    %c5 = arith.constant 5 : index
    %c0_36 = arith.constant 0 : index
    %c0_37 = arith.constant 0 : index
    %51 = vector.load %arg3[%c5, %c0_36, %c0_37] : memref<9x16x128xbf16, #tpu.memory_space<vmem>>, vector<1x16x128xbf16>
    %52 = vector.shape_cast %51 : vector<1x16x128xbf16> to vector<16x128xbf16>
    %cst_38 = arith.constant dense<0.000000e+00> : vector<256x128xf32>
    %53 = tpu.matmul %50, %52, %cst_38 {dimension_numbers = #tpu.dot_dimension_numbers<[1], [0], [0], [1], [0, 0, 1, 1], [], []>} : vector<256x16xbf16>, vector<16x128xbf16>, vector<256x128xf32> -> vector<256x128xf32>
    %54 = arith.addf %45, %53 : vector<256x128xf32>
    %c2_i32 = arith.constant 2 : i32
    %55 = arith.addi %1, %c2_i32 : i32
    %c0_39 = arith.constant 0 : index
    %56 = arith.index_cast %55 : i32 to index
    %c0_40 = arith.constant 0 : index
    %c0_41 = arith.constant 0 : index
    %57 = vector.load %arg2[%c0_39, %56, %c0_40, %c0_41] : memref<1x18x18x16xbf16, #tpu.memory_space<vmem>>, vector<1x16x16x16xbf16>
    %58 = vector.shape_cast %57 : vector<1x16x16x16xbf16> to vector<16x16x16xbf16>
    %59 = vector.shape_cast %58 : vector<16x16x16xbf16> to vector<256x16xbf16>
    %c6 = arith.constant 6 : index
    %c0_42 = arith.constant 0 : index
    %c0_43 = arith.constant 0 : index
    %60 = vector.load %arg3[%c6, %c0_42, %c0_43] : memref<9x16x128xbf16, #tpu.memory_space<vmem>>, vector<1x16x128xbf16>
    %61 = vector.shape_cast %60 : vector<1x16x128xbf16> to vector<16x128xbf16>
    %cst_44 = arith.constant dense<0.000000e+00> : vector<256x128xf32>
    %62 = tpu.matmul %59, %61, %cst_44 {dimension_numbers = #tpu.dot_dimension_numbers<[1], [0], [0], [1], [0, 0, 1, 1], [], []>} : vector<256x16xbf16>, vector<16x128xbf16>, vector<256x128xf32> -> vector<256x128xf32>
    %63 = arith.addf %54, %62 : vector<256x128xf32>
    %c2_i32_45 = arith.constant 2 : i32
    %64 = arith.addi %1, %c2_i32_45 : i32
    %c0_46 = arith.constant 0 : index
    %65 = arith.index_cast %64 : i32 to index
    %c1_47 = arith.constant 1 : index
    %c0_48 = arith.constant 0 : index
    %66 = vector.load %arg2[%c0_46, %65, %c1_47, %c0_48] : memref<1x18x18x16xbf16, #tpu.memory_space<vmem>>, vector<1x16x16x16xbf16>
    %67 = vector.shape_cast %66 : vector<1x16x16x16xbf16> to vector<16x16x16xbf16>
    %68 = vector.shape_cast %67 : vector<16x16x16xbf16> to vector<256x16xbf16>
    %c7 = arith.constant 7 : index
    %c0_49 = arith.constant 0 : index
    %c0_50 = arith.constant 0 : index
    %69 = vector.load %arg3[%c7, %c0_49, %c0_50] : memref<9x16x128xbf16, #tpu.memory_space<vmem>>, vector<1x16x128xbf16>
    %70 = vector.shape_cast %69 : vector<1x16x128xbf16> to vector<16x128xbf16>
    %cst_51 = arith.constant dense<0.000000e+00> : vector<256x128xf32>
    %71 = tpu.matmul %68, %70, %cst_51 {dimension_numbers = #tpu.dot_dimension_numbers<[1], [0], [0], [1], [0, 0, 1, 1], [], []>} : vector<256x16xbf16>, vector<16x128xbf16>, vector<256x128xf32> -> vector<256x128xf32>
    %72 = arith.addf %63, %71 : vector<256x128xf32>
    %c2_i32_52 = arith.constant 2 : i32
    %73 = arith.addi %1, %c2_i32_52 : i32
    %c0_53 = arith.constant 0 : index
    %74 = arith.index_cast %73 : i32 to index
    %c2_54 = arith.constant 2 : index
    %c0_55 = arith.constant 0 : index
    %75 = vector.load %arg2[%c0_53, %74, %c2_54, %c0_55] : memref<1x18x18x16xbf16, #tpu.memory_space<vmem>>, vector<1x16x16x16xbf16>
    %76 = vector.shape_cast %75 : vector<1x16x16x16xbf16> to vector<16x16x16xbf16>
    %77 = vector.shape_cast %76 : vector<16x16x16xbf16> to vector<256x16xbf16>
    %c8 = arith.constant 8 : index
    %c0_56 = arith.constant 0 : index
    %c0_57 = arith.constant 0 : index
    %78 = vector.load %arg3[%c8, %c0_56, %c0_57] : memref<9x16x128xbf16, #tpu.memory_space<vmem>>, vector<1x16x128xbf16>
    %79 = vector.shape_cast %78 : vector<1x16x128xbf16> to vector<16x128xbf16>
    %cst_58 = arith.constant dense<0.000000e+00> : vector<256x128xf32>
    %80 = tpu.matmul %77, %79, %cst_58 {dimension_numbers = #tpu.dot_dimension_numbers<[1], [0], [0], [1], [0, 0, 1, 1], [], []>} : vector<256x16xbf16>, vector<16x128xbf16>, vector<256x128xf32> -> vector<256x128xf32>
    %81 = arith.addf %72, %80 : vector<256x128xf32>
    %c0_59 = arith.constant 0 : index
    %c0_60 = arith.constant 0 : index
    %82 = vector.load %arg4[%c0_59, %c0_60] : memref<1x128xf32, #tpu.memory_space<vmem>>, vector<1x128xf32>
    %83 = vector.broadcast %82 : vector<1x128xf32> to vector<256x128xf32>
    %84 = arith.addf %81, %83 : vector<256x128xf32>
    %cst_61 = arith.constant 0.000000e+00 : f32
    %85 = vector.broadcast %cst_61 : f32 to vector<256x128xf32>
    %86 = arith.maximumf %84, %85 : vector<256x128xf32>
    %c0_62 = arith.constant 0 : index
    %c0_63 = arith.constant 0 : index
    %c0_64 = arith.constant 0 : index
    %87 = vector.load %arg5[%c0_62, %c0_63, %c0_64] : memref<1x256x128xf32, #tpu.memory_space<vmem>>, vector<1x256x128xf32>
    %88 = vector.shape_cast %87 : vector<1x256x128xf32> to vector<256x128xf32>
    %89 = vector.shape_cast %86 : vector<256x128xf32> to vector<1x256x128xf32>
    tpu.vector_store %arg5[%c0_62, %c0_63, %c0_64], %89 {strides = array<i32>} : memref<1x256x128xf32, #tpu.memory_space<vmem>>, vector<1x256x128xf32>,
    return
  }
  func.func @transform_0(%arg0: i32, %arg1: i32) -> (i32, i32, i32, i32) {
    %c0_i32 = arith.constant 0 : i32
    %c0_i32_0 = arith.constant 0 : i32
    %c0_i32_1 = arith.constant 0 : i32
    %c0_i32_2 = arith.constant 0 : i32
    return %arg0, %c0_i32, %c0_i32_0, %c0_i32_1 : i32, i32, i32, i32
  }
  func.func @transform_1(%arg0: i32, %arg1: i32) -> (i32, i32, i32) {
    %c0_i32 = arith.constant 0 : i32
    %c0_i32_0 = arith.constant 0 : i32
    %c0_i32_1 = arith.constant 0 : i32
    %c0_i32_2 = arith.constant 0 : i32
    return %c0_i32, %c0_i32_0, %c0_i32_1 : i32, i32, i32
  }
  func.func @transform_2(%arg0: i32, %arg1: i32) -> (i32, i32) {
    %c0_i32 = arith.constant 0 : i32
    %c0_i32_0 = arith.constant 0 : i32
    %c0_i32_1 = arith.constant 0 : i32
    return %c0_i32, %c0_i32_0 : i32, i32
  }
  func.func @transform_3(%arg0: i32, %arg1: i32) -> (i32, i32, i32) {
    %c0_i32 = arith.constant 0 : i32
    %c0_i32_0 = arith.constant 0 : i32
    return %arg0, %arg1, %c0_i32 : i32, i32, i32
  }
}

</mosaic_0001>

<llo_original>
// kernel: tpu_custom_call.1
$region0: #{tpu_custom_call.1}
  #allocation0 [shape = 'u32[]', space=smem, size = 0x4, offset = 0x4, fixed_abs, tag = 'smem constant byte address 0x4 - core index']
  #allocation1 [shape = 'u32[144,128]{1,0:T(1,128)}', space=vmem, size = 0x12000, scoped, tag = 'internal scratch']
  %s0 = inlined_call_operand.vmem [shape: bf16[2,18,18,16], index: 0, kind: input, shape index: {}]
  %s1 = inlined_call_operand.vmem [shape: bf16[9,16,128], index: 1, kind: input, shape index: {}]
  %s2 = inlined_call_operand.vmem [shape: f32[1,128], index: 2, kind: input, shape index: {}]
  %s3 = inlined_call_operand.hbm [shape: f32[2,256,128], index: 3, kind: output, shape index: {}]
  %s4 = sld [smem:[#allocation0]]
  $region45: #{tpu_custom_call.1} parent=0
    _
  %s6 = ssub.s32 1, %s4
  %s7 = scalar_select 0, %s6, %s4
  $region1: #{tpu_custom_call.1} parent=0
    #allocation2 [shape = 'u8[262144]{0}', space=vmem, size = 0x40000, scoped, tag = 'output window, operand 0']
    #allocation3 [shape = 's32[2]{0}', space=sflag, size = 0x8, scoped, tag = 'scoped memory for tpu_custom_call.1']
    %8 = vsyncpa [#allocation3], 0
    %s9 = scalar_lea.sflag [#allocation3], 1
    %10 = vsyncpa %s9, 0
    loop: start=0, step=1, limit=4
    $region2: #{tpu_custom_call.1} parent=1 // loop_pre_header
      _
    $region3: #{tpu_custom_call.1} parent=1 // loop_header
      %s12 = sphi 0, %s16
      %p13 = scmp.ge.s32.totalorder %s12, 4
      %s19 = sphi 0, %s31
      %s20 = sphi 0, %s27
      %s21 = sphi 0, %s19
      %s22 = sphi 0, %s20
      %s23 = sphi 0, %s21
      %s24 = sphi 0, %s22
      %s34 = sphi 0, %s36
      %s37 = sphi 0, %s34
      %s38 = sphi 0, %s37
      %s54 = sphi 0, %s38
      %s58 = sphi 0, %s58
      %s60 = sphi 0, %s58
      %s61 = sphi 0, %s60
      %s75 = sphi 0, %s61
      %s79 = sphi 0, %s79
      %s81 = sphi 0, %s79
      %s82 = sphi 0, %s81
      %s96 = sphi 0, %s82
      %s104 = sphi 0, %s106
      %s107 = sphi 0, %s104
      %s108 = sphi 0, %s107
      %s124 = sphi 0, %s108
    $region4: #{tpu_custom_call.1} parent=1 // loop_header_branch
      %15 = sbr.rel (%p13) target = $region8
    $region5: #{tpu_custom_call.1} parent=1 // loop_body
      %s17 = ssub.s32 %s12, 1
      %s18 = ssub.s32 %s12, 2
      %s25 = sadd.s32 1, %s20
      %p26 = scmp.ge.s32.totalorder %s25, 1
      %s27 = scalar_select %p26, 0, %s25
      %s28 = sadd.s32 1, %s19
      %s29 = scalar_select %p26, %s28, %s19
      %p30 = scmp.ge.s32.totalorder %s29, 2
      %s31 = scalar_select %p30, 0, %s29
      %s32 = ssub.s32 %s19, %s31
      %p33 = scmp.eq.s32.totalorder %s32, 0
      %s35 = sadd.s32 %s34, 1
      %s36 = scalar_select %p33, %s34, %s35
      %p39 = pneg %p33
      %p40 = scmp.eq.s32.totalorder %s12, 1
      %p41 = por %p39, %p40
      %p42 = scmp.ne.s32.totalorder %s34, %s37
      %p43 = scmp.eq.s32.totalorder %s12, 0
      %p44 = por %p42, %p43
      %p45 = scmp.ne.s32.totalorder %s34, %s37
      %p46 = scmp.eq.s32.totalorder %s17, 1
      %p47 = por %p45, %p46
      %p48 = scmp.ne.s32.totalorder %s37, %s38
      %p49 = scmp.eq.s32.totalorder %s17, 0
      %p50 = por %p48, %p49
      %p51 = scmp.ne.s32.totalorder %s37, %s38
      %p52 = scmp.eq.s32.totalorder %s18, 1
      %p53 = por %p51, %p52
      %p55 = scmp.ne.s32.totalorder %s38, %s54
      %p56 = scmp.eq.s32.totalorder %s18, 0
      %p57 = por %p55, %p56
      %s59 = sadd.s32 %s58, 1
      %p62 = scmp.eq.s32.totalorder %s12, 1
      %p63 = scmp.ne.s32.totalorder %s58, %s60
      %p64 = scmp.eq.s32.totalorder %s12, 0
      %p65 = por %p63, %p64
      %p66 = scmp.ne.s32.totalorder %s58, %s60
      %p67 = scmp.eq.s32.totalorder %s17, 1
      %p68 = por %p66, %p67
      %p69 = scmp.ne.s32.totalorder %s60, %s61
      %p70 = scmp.eq.s32.totalorder %s17, 0
      %p71 = por %p69, %p70
      %p72 = scmp.ne.s32.totalorder %s60, %s61
      %p73 = scmp.eq.s32.totalorder %s18, 1
      %p74 = por %p72, %p73
      %p76 = scmp.ne.s32.totalorder %s61, %s75
      %p77 = scmp.eq.s32.totalorder %s18, 0
      %p78 = por %p76, %p77
      %s80 = sadd.s32 %s79, 1
      %p83 = scmp.eq.s32.totalorder %s12, 1
      %p84 = scmp.ne.s32.totalorder %s79, %s81
      %p85 = scmp.eq.s32.totalorder %s12, 0
      %p86 = por %p84, %p85
      %p87 = scmp.ne.s32.totalorder %s79, %s81
      %p88 = scmp.eq.s32.totalorder %s17, 1
      %p89 = por %p87, %p88
      %p90 = scmp.ne.s32.totalorder %s81, %s82
      %p91 = scmp.eq.s32.totalorder %s17, 0
      %p92 = por %p90, %p91
      %p93 = scmp.ne.s32.totalorder %s81, %s82
      %p94 = scmp.eq.s32.totalorder %s18, 1
      %p95 = por %p93, %p94
      %p97 = scmp.ne.s32.totalorder %s82, %s96
      %p98 = scmp.eq.s32.totalorder %s18, 0
      %p99 = por %p97, %p98
      %s100 = ssub.s32 %s19, %s31
      %s101 = ssub.s32 %s20, %s27
      %s102 = sor.u32 %s100, %s101
      %p103 = scmp.eq.s32.totalorder %s102, 0
      %s105 = sadd.s32 %s104, 1
      %s106 = scalar_select %p103, %s104, %s105
      %p109 = pneg %p103
      %p110 = scmp.eq.s32.totalorder %s12, 1
      %p111 = por %p109, %p110
      %p112 = scmp.ne.s32.totalorder %s104, %s107
      %p113 = scmp.eq.s32.totalorder %s12, 0
      %p114 = por %p112, %p113
      %p115 = scmp.ne.s32.totalorder %s104, %s107
      %p116 = scmp.eq.s32.totalorder %s17, 1
      %p117 = por %p115, %p116
      %p118 = scmp.ne.s32.totalorder %s107, %s108
      %p119 = scmp.eq.s32.totalorder %s17, 0
      %p120 = por %p118, %p119
      %p121 = scmp.ne.s32.totalorder %s107, %s108
      %p122 = scmp.eq.s32.totalorder %s18, 1
      %p123 = por %p121, %p122
      %p125 = scmp.ne.s32.totalorder %s108, %s124
      %p126 = scmp.eq.s32.totalorder %s18, 0
      %p127 = por %p125, %p126
      %p128 = scmp.le.s32.totalorder 1, %s12
      %p129 = scmp.lt.s32.totalorder %s12, 3
      %p130 = pnand %p128, %p129
      %p131 = pneg %p130
      // Predicated region
      $region9: #{tpu_custom_call.1} parent=5 // pred_check
        _
      $region10: #{tpu_custom_call.1} parent=5 // pred_check_branch
        %133 = sbr.rel (%p130) target = $region12
      $region11: #{tpu_custom_call.1} parent=5 // pred_region
        %s134 = ssub.s32 %s12, 1
        // Predicated region
        $region13: #{tpu_custom_call.1} parent=11 // pred_check
          %p135 = pneg %p71
        $region14: #{tpu_custom_call.1} parent=11 // pred_check_branch
          %137 = sbr.rel (%p135) target = $region16
        $region15: #{tpu_custom_call.1} parent=11 // pred_region
          _
        $region16: #{tpu_custom_call.1} parent=11 // pred_fallthru
          _
        // Predicated region
        $region17: #{tpu_custom_call.1} parent=11 // pred_check
          %p138 = pneg %p92
        $region18: #{tpu_custom_call.1} parent=11 // pred_check_branch
          %140 = sbr.rel (%p138) target = $region20
        $region19: #{tpu_custom_call.1} parent=11 // pred_region
          _
        $region20: #{tpu_custom_call.1} parent=11 // pred_fallthru
          _
      $region12: #{tpu_custom_call.1} parent=5 // pred_fallthru
        _
      %p141 = scmp.lt.s32.totalorder %s12, 2
      // Predicated region
      $region21: #{tpu_custom_call.1} parent=5 // pred_check
        %p142 = pneg %p141
      $region22: #{tpu_custom_call.1} parent=5 // pred_check_branch
        %144 = sbr.rel (%p142) target = $region24
      $region23: #{tpu_custom_call.1} parent=5 // pred_region
        // Predicated region
        $region25: #{tpu_custom_call.1} parent=23 // pred_check
          %p145 = pneg %p44
        $region26: #{tpu_custom_call.1} parent=23 // pred_check_branch
          %147 = sbr.rel (%p145) target = $region28
        $region27: #{tpu_custom_call.1} parent=23 // pred_region
          %p148 = scmp.lt.s32.totalorder %s19, 1
          %s149 = scalar_select %p148, %s19, 1
          %s150 = smul.addr %s149, 54
          %s151 = smul.addr %s150, 4
          %s152 = scalar_lea.vmem %s0, %s151
        $region28: #{tpu_custom_call.1} parent=23 // pred_fallthru
          _
      $region24: #{tpu_custom_call.1} parent=5 // pred_fallthru
        _
      %p153 = scmp.le.s32.totalorder 1, %s12
      %p154 = scmp.lt.s32.totalorder %s12, 3
      %p155 = pnand %p153, %p154
      %p156 = pneg %p155
      // Predicated region
      $region29: #{tpu_custom_call.1} parent=5 // pred_check
        _
      $region30: #{tpu_custom_call.1} parent=5 // pred_check_branch
        %158 = sbr.rel (%p155) target = $region32
      $region31: #{tpu_custom_call.1} parent=5 // pred_region
        %s159 = ssub.s32 %s12, 1
        %p160 = scmp.lt.s32.totalorder %s21, 1
        %s161 = scalar_select %p160, %s21, 1
        %s162 = smul.addr %s161, 54
        %s163 = smul.addr %s162, 4
        %s164 = scalar_lea.vmem %s0, %s163
        %p165 = pneg %p50
        %p166 = pneg %p47
        %p167 = pneg %p71
        %p168 = pneg %p68
        %p169 = pneg %p92
        %p170 = pneg %p89
        %p171 = pneg %p120
        %p172 = pneg %p117
        %s173 = sand.u32 %s107, 1
        %s174 = scalar_lea.sflag [#allocation3], %s173
        %s175 = sand.u32 %s107, 1
        %s176 = smul.addr %s175, 256
        %s177 = scalar_lea.vmem [#allocation2], %s176
        %p178 = scmp.lt.s32.totalorder %s21, 1
        %s179 = scalar_select %p178, %s21, 1
        %s180 = smul.addr %s179, 54
        %s181 = smul.addr %s180, 4
        %s182 = scalar_lea.vmem %s0, %s181
        %s183 = smul.u32 32, %s22
        %s185 = smul.u32 %s22, 16
        %s186 = smul.u32 %s185, 3
        %s187 = smul.addr %s186, 4
        %s188 = scalar_lea.vmem %s182, %s187
        %v189 = vld [vmem:[%s188] sm:$0xf]
        %v190 = vld [vmem:[%s188 + $0x4] sm:$0xf]
        %v191 = vld [vmem:[%s188 + $0xc] sm:$0xf]
        %v192 = vld [vmem:[%s188 + $0x10] sm:$0xf]
        %v193 = vld [vmem:[%s188 + $0x18] sm:$0xf]
        %v194 = vld [vmem:[%s188 + $0x1c] sm:$0xf]
        %v195 = vld [vmem:[%s188 + $0x24] sm:$0xf]
        %v196 = vld [vmem:[%s188 + $0x28] sm:$0xf]
        %v197 = vld [vmem:[%s188 + $0x30] sm:$0xf]
        %v198 = vld [vmem:[%s188 + $0x34] sm:$0xf]
        %v199 = vld [vmem:[%s188 + $0x3c] sm:$0xf]
        %v200 = vld [vmem:[%s188 + $0x40] sm:$0xf]
        %v201 = vld [vmem:[%s188 + $0x48] sm:$0xf]
        %v202 = vld [vmem:[%s188 + $0x4c] sm:$0xf]
        %v203 = vld [vmem:[%s188 + $0x54] sm:$0xf]
        %v204 = vld [vmem:[%s188 + $0x58] sm:$0xf]
        %v205 = vld [vmem:[%s188 + $0x60] sm:$0xf]
        %v206 = vld [vmem:[%s188 + $0x64] sm:$0xf]
        %v207 = vld [vmem:[%s188 + $0x6c] sm:$0xf]
        %v208 = vld [vmem:[%s188 + $0x70] sm:$0xf]
        %v209 = vld [vmem:[%s188 + $0x78] sm:$0xf]
        %v210 = vld [vmem:[%s188 + $0x7c] sm:$0xf]
        %v211 = vld [vmem:[%s188 + $0x84] sm:$0xf]
        %v212 = vld [vmem:[%s188 + $0x88] sm:$0xf]
        %v213 = vld [vmem:[%s188 + $0x90] sm:$0xf]
        %v214 = vld [vmem:[%s188 + $0x94] sm:$0xf]
        %v215 = vld [vmem:[%s188 + $0x9c] sm:$0xf]
        %v216 = vld [vmem:[%s188 + $0xa0] sm:$0xf]
        %v217 = vld [vmem:[%s188 + $0xa8] sm:$0xf]
        %v218 = vld [vmem:[%s188 + $0xac] sm:$0xf]
        %v219 = vld [vmem:[%s188 + $0xb4] sm:$0xf]
        %v220 = vld [vmem:[%s188 + $0xb8] sm:$0xf]
        %v221 = vld [vmem:[%s1] sm:$0xf]
        %v222 = vld [vmem:[%s1 + $0x4] sm:$0xf]
        %v223 = vld [vmem:[%s188 + $0x8] sm:$0x1]
        %v224 = vld [vmem:[%s188 + $0x14] sm:$0x1]
        %v225 = vld [vmem:[%s188 + $0x20] sm:$0x1]
        %v226 = vld [vmem:[%s188 + $0x2c] sm:$0x1]
        %v227 = vld [vmem:[%s188 + $0x38] sm:$0x1]
        %v228 = vld [vmem:[%s188 + $0x44] sm:$0x1]
        %v229 = vld [vmem:[%s188 + $0x50] sm:$0x1]
        %v230 = vld [vmem:[%s188 + $0x5c] sm:$0x1]
        %v231 = vld [vmem:[%s188 + $0x68] sm:$0x1]
        %v232 = vld [vmem:[%s188 + $0x74] sm:$0x1]
        %v233 = vld [vmem:[%s188 + $0x80] sm:$0x1]
        %v234 = vld [vmem:[%s188 + $0x8c] sm:$0x1]
        %v235 = vld [vmem:[%s188 + $0x98] sm:$0x1]
        %v236 = vld [vmem:[%s188 + $0xa4] sm:$0x1]
        %v237 = vld [vmem:[%s188 + $0xb0] sm:$0x1]
        %v238 = vld [vmem:[%s188 + $0xbc] sm:$0x1]
        %vm239 = vsmask.f32 3328
        %vm240 = vsmask.f32 7440
        %vm241 = vmor %vm239, %vm240
        %v243 = vshrl.u32 %v189, 16
        %v245 = vrot.slane %v243, 4
        %v246 = vshll.u32 %v189, 16
        %v248 = vrot.slane %v246, 5
        %v249 = vor.u32 %v245, %v248
        %v250 = vrot.slane %v249, 4
        %v252 = vshll.u32 %v190, 16
        %v254 = vrot.slane %v252, 5
        %v255 = vsel %vm241, %v250, %v254
        %v256 = vshrl.u32 %v190, 16
        %v258 = vrot.slane %v256, 4
        %v259 = vor.u32 %v258, %v254
        %v260 = vrot.slane %v259, 4
        %v262 = vshll.u32 %v223, 16
        %v264 = vrot.slane %v262, 5
        %v265 = vsel %vm241, %v260, %v264
        %v267 = vshrl.u32 %v191, 16
        %v269 = vrot.slane %v267, 4
        %v270 = vshll.u32 %v191, 16
        %v272 = vrot.slane %v270, 5
        %v273 = vor.u32 %v269, %v272
        %v274 = vrot.slane %v273, 4
        %v276 = vshll.u32 %v192, 16
        %v278 = vrot.slane %v276, 5
        %v279 = vsel %vm241, %v274, %v278
        %v280 = vshrl.u32 %v192, 16
        %v282 = vrot.slane %v280, 4
        %v283 = vor.u32 %v282, %v278
        %v284 = vrot.slane %v283, 4
        %v286 = vshll.u32 %v224, 16
        %v288 = vrot.slane %v286, 5
        %v289 = vsel %vm241, %v284, %v288
        %v291 = vshrl.u32 %v193, 16
        %v293 = vrot.slane %v291, 4
        %v294 = vshll.u32 %v193, 16
        %v296 = vrot.slane %v294, 5
        %v297 = vor.u32 %v293, %v296
        %v298 = vrot.slane %v297, 4
        %v300 = vshll.u32 %v194, 16
        %v302 = vrot.slane %v300, 5
        %v303 = vsel %vm241, %v298, %v302
        %v304 = vshrl.u32 %v194, 16
        %v306 = vrot.slane %v304, 4
        %v307 = vor.u32 %v306, %v302
        %v308 = vrot.slane %v307, 4
        %v310 = vshll.u32 %v225, 16
        %v312 = vrot.slane %v310, 5
        %v313 = vsel %vm241, %v308, %v312
        %v315 = vshrl.u32 %v195, 16
        %v317 = vrot.slane %v315, 4
        %v318 = vshll.u32 %v195, 16
        %v320 = vrot.slane %v318, 5
        %v321 = vor.u32 %v317, %v320
        %v322 = vrot.slane %v321, 4
        %v324 = vshll.u32 %v196, 16
        %v326 = vrot.slane %v324, 5
        %v327 = vsel %vm241, %v322, %v326
        %v328 = vshrl.u32 %v196, 16
        %v330 = vrot.slane %v328, 4
        %v331 = vor.u32 %v330, %v326
        %v332 = vrot.slane %v331, 4
        %v334 = vshll.u32 %v226, 16
        %v336 = vrot.slane %v334, 5
        %v337 = vsel %vm241, %v332, %v336
        %v339 = vshrl.u32 %v197, 16
        %v341 = vrot.slane %v339, 4
        %v342 = vshll.u32 %v197, 16
        %v344 = vrot.slane %v342, 5
        %v345 = vor.u32 %v341, %v344
        %v346 = vrot.slane %v345, 4
        %v348 = vshll.u32 %v198, 16
        %v350 = vrot.slane %v348, 5
        %v351 = vsel %vm241, %v346, %v350
        %v352 = vshrl.u32 %v198, 16
        %v354 = vrot.slane %v352, 4
        %v355 = vor.u32 %v354, %v350
        %v356 = vrot.slane %v355, 4
        %v358 = vshll.u32 %v227, 16
        %v360 = vrot.slane %v358, 5
        %v361 = vsel %vm241, %v356, %v360
        %v363 = vshrl.u32 %v199, 16
        %v365 = vrot.slane %v363, 4
        %v366 = vshll.u32 %v199, 16
        %v368 = vrot.slane %v366, 5
        %v369 = vor.u32 %v365, %v368
        %v370 = vrot.slane %v369, 4
        %v372 = vshll.u32 %v200, 16
        %v374 = vrot.slane %v372, 5
        %v375 = vsel %vm241, %v370, %v374
        %v376 = vshrl.u32 %v200, 16
        %v378 = vrot.slane %v376, 4
        %v379 = vor.u32 %v378, %v374
        %v380 = vrot.slane %v379, 4
        %v382 = vshll.u32 %v228, 16
        %v384 = vrot.slane %v382, 5
        %v385 = vsel %vm241, %v380, %v384
        %v387 = vshrl.u32 %v201, 16
        %v389 = vrot.slane %v387, 4
        %v390 = vshll.u32 %v201, 16
        %v392 = vrot.slane %v390, 5
        %v393 = vor.u32 %v389, %v392
        %v394 = vrot.slane %v393, 4
        %v396 = vshll.u32 %v202, 16
        %v398 = vrot.slane %v396, 5
        %v399 = vsel %vm241, %v394, %v398
        %v400 = vshrl.u32 %v202, 16
        %v402 = vrot.slane %v400, 4
        %v403 = vor.u32 %v402, %v398
        %v404 = vrot.slane %v403, 4
        %v406 = vshll.u32 %v229, 16
        %v408 = vrot.slane %v406, 5
        %v409 = vsel %vm241, %v404, %v408
        %v411 = vshrl.u32 %v203, 16
        %v413 = vrot.slane %v411, 4
        %v414 = vshll.u32 %v203, 16
        %v416 = vrot.slane %v414, 5
        %v417 = vor.u32 %v413, %v416
        %v418 = vrot.slane %v417, 4
        %v420 = vshll.u32 %v204, 16
        %v422 = vrot.slane %v420, 5
        %v423 = vsel %vm241, %v418, %v422
        %v424 = vshrl.u32 %v204, 16
        %v426 = vrot.slane %v424, 4
        %v427 = vor.u32 %v426, %v422
        %v428 = vrot.slane %v427, 4
        %v430 = vshll.u32 %v230, 16
        %v432 = vrot.slane %v430, 5
        %v433 = vsel %vm241, %v428, %v432
        %v435 = vshrl.u32 %v205, 16
        %v437 = vrot.slane %v435, 4
        %v438 = vshll.u32 %v205, 16
        %v440 = vrot.slane %v438, 5
        %v441 = vor.u32 %v437, %v440
        %v442 = vrot.slane %v441, 4
        %v444 = vshll.u32 %v206, 16
        %v446 = vrot.slane %v444, 5
        %v447 = vsel %vm241, %v442, %v446
        %v448 = vshrl.u32 %v206, 16
        %v450 = vrot.slane %v448, 4
        %v451 = vor.u32 %v450, %v446
        %v452 = vrot.slane %v451, 4
        %v454 = vshll.u32 %v231, 16
        %v456 = vrot.slane %v454, 5
        %v457 = vsel %vm241, %v452, %v456
        %v459 = vshrl.u32 %v207, 16
        %v461 = vrot.slane %v459, 4
        %v462 = vshll.u32 %v207, 16
        %v464 = vrot.slane %v462, 5
        %v465 = vor.u32 %v461, %v464
        %v466 = vrot.slane %v465, 4
        %v468 = vshll.u32 %v208, 16
        %v470 = vrot.slane %v468, 5
        %v471 = vsel %vm241, %v466, %v470
        %v472 = vshrl.u32 %v208, 16
        %v474 = vrot.slane %v472, 4
        %v475 = vor.u32 %v474, %v470
        %v476 = vrot.slane %v475, 4
        %v478 = vshll.u32 %v232, 16
        %v480 = vrot.slane %v478, 5
        %v481 = vsel %vm241, %v476, %v480
        %v483 = vshrl.u32 %v209, 16
        %v485 = vrot.slane %v483, 4
        %v486 = vshll.u32 %v209, 16
        %v488 = vrot.slane %v486, 5
        %v489 = vor.u32 %v485, %v488
        %v490 = vrot.slane %v489, 4
        %v492 = vshll.u32 %v210, 16
        %v494 = vrot.slane %v492, 5
        %v495 = vsel %vm241, %v490, %v494
        %v496 = vshrl.u32 %v210, 16
        %v498 = vrot.slane %v496, 4
        %v499 = vor.u32 %v498, %v494
        %v500 = vrot.slane %v499, 4
        %v502 = vshll.u32 %v233, 16
        %v504 = vrot.slane %v502, 5
        %v505 = vsel %vm241, %v500, %v504
        %v507 = vshrl.u32 %v211, 16
        %v509 = vrot.slane %v507, 4
        %v510 = vshll.u32 %v211, 16
        %v512 = vrot.slane %v510, 5
        %v513 = vor.u32 %v509, %v512
        %v514 = vrot.slane %v513, 4
        %v516 = vshll.u32 %v212, 16
        %v518 = vrot.slane %v516, 5
        %v519 = vsel %vm241, %v514, %v518
        %v520 = vshrl.u32 %v212, 16
        %v522 = vrot.slane %v520, 4
        %v523 = vor.u32 %v522, %v518
        %v524 = vrot.slane %v523, 4
        %v526 = vshll.u32 %v234, 16
        %v528 = vrot.slane %v526, 5
        %v529 = vsel %vm241, %v524, %v528
        %v531 = vshrl.u32 %v213, 16
        %v533 = vrot.slane %v531, 4
        %v534 = vshll.u32 %v213, 16
        %v536 = vrot.slane %v534, 5
        %v537 = vor.u32 %v533, %v536
        %v538 = vrot.slane %v537, 4
        %v540 = vshll.u32 %v214, 16
        %v542 = vrot.slane %v540, 5
        %v543 = vsel %vm241, %v538, %v542
        %v544 = vshrl.u32 %v214, 16
        %v546 = vrot.slane %v544, 4
        %v547 = vor.u32 %v546, %v542
        %v548 = vrot.slane %v547, 4
        %v550 = vshll.u32 %v235, 16
        %v552 = vrot.slane %v550, 5
        %v553 = vsel %vm241, %v548, %v552
        %v555 = vshrl.u32 %v215, 16
        %v557 = vrot.slane %v555, 4
        %v558 = vshll.u32 %v215, 16
        %v560 = vrot.slane %v558, 5
        %v561 = vor.u32 %v557, %v560
        %v562 = vrot.slane %v561, 4
        %v564 = vshll.u32 %v216, 16
        %v566 = vrot.slane %v564, 5
        %v567 = vsel %vm241, %v562, %v566
        %v568 = vshrl.u32 %v216, 16
        %v570 = vrot.slane %v568, 4
        %v571 = vor.u32 %v570, %v566
        %v572 = vrot.slane %v571, 4
        %v574 = vshll.u32 %v236, 16
        %v576 = vrot.slane %v574, 5
        %v577 = vsel %vm241, %v572, %v576
        %v579 = vshrl.u32 %v217, 16
        %v581 = vrot.slane %v579, 4
        %v582 = vshll.u32 %v217, 16
        %v584 = vrot.slane %v582, 5
        %v585 = vor.u32 %v581, %v584
        %v586 = vrot.slane %v585, 4
        %v588 = vshll.u32 %v218, 16
        %v590 = vrot.slane %v588, 5
        %v591 = vsel %vm241, %v586, %v590
        %v592 = vshrl.u32 %v218, 16
        %v594 = vrot.slane %v592, 4
        %v595 = vor.u32 %v594, %v590
        %v596 = vrot.slane %v595, 4
        %v598 = vshll.u32 %v237, 16
        %v600 = vrot.slane %v598, 5
        %v601 = vsel %vm241, %v596, %v600
        %v603 = vshrl.u32 %v219, 16
        %v605 = vrot.slane %v603, 4
        %v606 = vshll.u32 %v219, 16
        %v608 = vrot.slane %v606, 5
        %v609 = vor.u32 %v605, %v608
        %v610 = vrot.slane %v609, 4
        %v612 = vshll.u32 %v220, 16
        %v614 = vrot.slane %v612, 5
        %v615 = vsel %vm241, %v610, %v614
        %v616 = vshrl.u32 %v220, 16
        %v618 = vrot.slane %v616, 4
        %v619 = vor.u32 %v618, %v614
        %v620 = vrot.slane %v619, 4
        %v622 = vshll.u32 %v238, 16
        %v624 = vrot.slane %v622, 5
        %v625 = vsel %vm241, %v620, %v624
        %s626 = scalar_lea.vmem %s1, 8
        %v627 = vld [vmem:[%s626] sm:$0xf]
        %v628 = vld [vmem:[%s626 + $0x4] sm:$0xf]
        %v629 = vunpack.c.l.b16 %v255
        %v630 = vunpack.c.l.b16 %v265
        %v631 = vunpack.c.l.b16 %v279
        %v632 = vunpack.c.l.b16 %v289
        %v633 = vunpack.c.l.b16 %v303
        %v634 = vunpack.c.l.b16 %v313
        %v635 = vunpack.c.l.b16 %v327
        %v636 = vunpack.c.l.b16 %v337
        %v637 = vunpack.c.l.b16 %v351
        %v638 = vunpack.c.l.b16 %v361
        %v639 = vunpack.c.l.b16 %v375
        %v640 = vunpack.c.l.b16 %v385
        %v641 = vunpack.c.l.b16 %v399
        %v642 = vunpack.c.l.b16 %v409
        %v643 = vunpack.c.l.b16 %v423
        %v644 = vunpack.c.l.b16 %v433
        %v645 = vunpack.c.l.b16 %v447
        %v646 = vunpack.c.l.b16 %v457
        %v647 = vunpack.c.l.b16 %v471
        %v648 = vunpack.c.l.b16 %v481
        %v649 = vunpack.c.l.b16 %v495
        %v650 = vunpack.c.l.b16 %v505
        %v651 = vunpack.c.l.b16 %v519
        %v652 = vunpack.c.l.b16 %v529
        %v653 = vunpack.c.l.b16 %v543
        %v654 = vunpack.c.l.b16 %v553
        %v655 = vunpack.c.l.b16 %v567
        %v656 = vunpack.c.l.b16 %v577
        %v657 = vunpack.c.l.b16 %v591
        %v658 = vunpack.c.l.b16 %v601
        %v659 = vunpack.c.l.b16 %v615
        %v660 = vunpack.c.l.b16 %v625
        %v661 = vpack.c.b16 %v630, %v629
        %v662 = vpack.c.b16 %v632, %v631
        %v663 = vpack.c.b16 %v634, %v633
        %v664 = vpack.c.b16 %v636, %v635
        %v665 = vpack.c.b16 %v638, %v637
        %v666 = vpack.c.b16 %v640, %v639
        %v667 = vpack.c.b16 %v642, %v641
        %v668 = vpack.c.b16 %v644, %v643
        %v669 = vpack.c.b16 %v646, %v645
        %v670 = vpack.c.b16 %v648, %v647
        %v671 = vpack.c.b16 %v650, %v649
        %v672 = vpack.c.b16 %v652, %v651
        %v673 = vpack.c.b16 %v654, %v653
        %v674 = vpack.c.b16 %v656, %v655
        %v675 = vpack.c.b16 %v658, %v657
        %v676 = vpack.c.b16 %v660, %v659
        %v679 = vunpack.c.l.b16 %v627
        %v680 = vunpack.c.l.b16 %v628
        %v681 = vpack.c.b16 %v680, %v679
        %vm683 = vcmask 130048
        %v685 = vsel %vm683, %v661, 0
        %v688 = vsel %vm683, %v662, 0
        %v691 = vsel %vm683, %v663, 0
        %v694 = vsel %vm683, %v664, 0
        %v697 = vsel %vm683, %v665, 0
        %v700 = vsel %vm683, %v666, 0
        %v703 = vsel %vm683, %v667, 0
        %v706 = vsel %vm683, %v668, 0
        %v709 = vsel %vm683, %v669, 0
        %v712 = vsel %vm683, %v670, 0
        %v715 = vsel %vm683, %v671, 0
        %v718 = vsel %vm683, %v672, 0
        %v721 = vsel %vm683, %v673, 0
        %v724 = vsel %vm683, %v674, 0
        %v727 = vsel %vm683, %v675, 0
        %v730 = vsel %vm683, %v676, 0
        %732 = vmatprep.subr.bf16.mxu0 0
        %733 = vmatpush1.bf16.msra.mxu0 %v681
        %734 = vmatprep.subr.bf16.mxu0 0
        %735 = vmatpush1.bf16.msra.mxu0 0
        %736 = vmatprep.subr.bf16.mxu0 0
        %737 = vmatpush1.bf16.msra.mxu0 0
        %738 = vmatprep.subr.bf16.mxu0 0
        %739 = vmatpush1.bf16.msra.mxu0 0
        %740 = vmatprep.subr.bf16.mxu0 0
        %741 = vmatpush1.bf16.msra.mxu0 0
        %742 = vmatprep.subr.bf16.mxu0 0
        %743 = vmatpush1.bf16.msra.mxu0 0
        %744 = vmatprep.subr.bf16.mxu0 0
        %745 = vmatpush1.bf16.msra.mxu0 0
        %746 = vmatprep.subr.bf16.mxu0 0
        %747 = vmatpush1.bf16.msra.mxu0 0
        %748 = vmatprep.subr.bf16.mxu0 0
        %749 = vmatpush1.bf16.msra.mxu0 0
        %750 = vmatprep.subr.bf16.mxu0 0
        %751 = vmatpush1.bf16.msra.mxu0 0
        %752 = vmatprep.subr.bf16.mxu0 0
        %753 = vmatpush1.bf16.msra.mxu0 0
        %754 = vmatprep.subr.bf16.mxu0 0
        %755 = vmatpush1.bf16.msra.mxu0 0
        %756 = vmatprep.subr.bf16.mxu0 0
        %757 = vmatpush1.bf16.msra.mxu0 0
        %758 = vmatprep.subr.bf16.mxu0 0
        %759 = vmatpush1.bf16.msra.mxu0 0
        %760 = vmatprep.subr.bf16.mxu0 0
        %761 = vmatpush1.bf16.msra.mxu0 0
        %762 = vmatprep.subr.bf16.mxu0 0
        %763 = vmatpush1.bf16.msra.mxu0 0
        %764 = vmatprep.mubr.bf16.mxu0 0
        %765 = vmatmul.mubr.bf16.gmra.mrb[0].mxu0 %v685
        %v766 = vpop.f32.mrb[0].mxu0
        %v767 = vadd.f32 0.0, %v766
        %v768 = vpop.f32.mrb[0].mxu0
        %v769 = vpop.f32.mrb[0].mxu0
        %v770 = vadd.f32 0.0, %v769
        %v771 = vpop.f32.mrb[0].mxu0
        %772 = vmatprep.mubr.bf16.mxu0 0
        %773 = vmatmul.mubr.bf16.gmra.mrb[0].mxu0 %v688
        %v774 = vpop.f32.mrb[0].mxu0
        %v775 = vadd.f32 0.0, %v774
        %v776 = vpop.f32.mrb[0].mxu0
        %v777 = vpop.f32.mrb[0].mxu0
        %v778 = vadd.f32 0.0, %v777
        %v779 = vpop.f32.mrb[0].mxu0
        %780 = vmatprep.mubr.bf16.mxu0 0
        %781 = vmatmul.mubr.bf16.gmra.mrb[0].mxu0 %v691
        %v782 = vpop.f32.mrb[0].mxu0
        %v783 = vadd.f32 0.0, %v782
        %v784 = vpop.f32.mrb[0].mxu0
        %v785 = vpop.f32.mrb[0].mxu0
        %v786 = vadd.f32 0.0, %v785
        %v787 = vpop.f32.mrb[0].mxu0
        %788 = vmatprep.mubr.bf16.mxu0 0
        %789 = vmatmul.mubr.bf16.gmra.mrb[0].mxu0 %v694
        %v790 = vpop.f32.mrb[0].mxu0
        %v791 = vadd.f32 0.0, %v790
        %v792 = vpop.f32.mrb[0].mxu0
        %v793 = vpop.f32.mrb[0].mxu0
        %v794 = vadd.f32 0.0, %v793
        %v795 = vpop.f32.mrb[0].mxu0
        %796 = vmatprep.mubr.bf16.mxu0 0
        %797 = vmatmul.mubr.bf16.gmra.mrb[0].mxu0 %v697
        %v798 = vpop.f32.mrb[0].mxu0
        %v799 = vadd.f32 0.0, %v798
        %v800 = vpop.f32.mrb[0].mxu0
        %v801 = vpop.f32.mrb[0].mxu0
        %v802 = vadd.f32 0.0, %v801
        %v803 = vpop.f32.mrb[0].mxu0
        %804 = vmatprep.mubr.bf16.mxu0 0
        %805 = vmatmul.mubr.bf16.gmra.mrb[0].mxu0 %v700
        %v806 = vpop.f32.mrb[0].mxu0
        %v807 = vadd.f32 0.0, %v806
        %v808 = vpop.f32.mrb[0].mxu0
        %v809 = vpop.f32.mrb[0].mxu0
        %v810 = vadd.f32 0.0, %v809
        %v811 = vpop.f32.mrb[0].mxu0
        %812 = vmatprep.mubr.bf16.mxu0 0
        %813 = vmatmul.mubr.bf16.gmra.mrb[0].mxu0 %v703
        %v814 = vpop.f32.mrb[0].mxu0
        %v815 = vadd.f32 0.0, %v814
        %v816 = vpop.f32.mrb[0].mxu0
        %v817 = vpop.f32.mrb[0].mxu0
        %v818 = vadd.f32 0.0, %v817
        %v819 = vpop.f32.mrb[0].mxu0
        %820 = vmatprep.mubr.bf16.mxu0 0
        %821 = vmatmul.mubr.bf16.gmra.mrb[0].mxu0 %v706
        %v822 = vpop.f32.mrb[0].mxu0
        %v823 = vadd.f32 0.0, %v822
        %v824 = vpop.f32.mrb[0].mxu0
        %v825 = vpop.f32.mrb[0].mxu0
        %v826 = vadd.f32 0.0, %v825
        %v827 = vpop.f32.mrb[0].mxu0
        %828 = vmatprep.mubr.bf16.mxu0 0
        %829 = vmatmul.mubr.bf16.gmra.mrb[0].mxu0 %v709
        %v830 = vpop.f32.mrb[0].mxu0
        %v831 = vadd.f32 0.0, %v830
        %v832 = vpop.f32.mrb[0].mxu0
        %v833 = vpop.f32.mrb[0].mxu0
        %v834 = vadd.f32 0.0, %v833
        %v835 = vpop.f32.mrb[0].mxu0
        %836 = vmatprep.mubr.bf16.mxu0 0
        %837 = vmatmul.mubr.bf16.gmra.mrb[0].mxu0 %v712
        %v838 = vpop.f32.mrb[0].mxu0
        %v839 = vadd.f32 0.0, %v838
        %v840 = vpop.f32.mrb[0].mxu0
        %v841 = vpop.f32.mrb[0].mxu0
        %v842 = vadd.f32 0.0, %v841
        %v843 = vpop.f32.mrb[0].mxu0
        %844 = vmatprep.mubr.bf16.mxu0 0
        %845 = vmatmul.mubr.bf16.gmra.mrb[0].mxu0 %v715
        %v846 = vpop.f32.mrb[0].mxu0
        %v847 = vadd.f32 0.0, %v846
        %v848 = vpop.f32.mrb[0].mxu0
        %v849 = vpop.f32.mrb[0].mxu0
        %v850 = vadd.f32 0.0, %v849
        %v851 = vpop.f32.mrb[0].mxu0
        %852 = vmatprep.mubr.bf16.mxu0 0
        %853 = vmatmul.mubr.bf16.gmra.mrb[0].mxu0 %v718
        %v854 = vpop.f32.mrb[0].mxu0
        %v855 = vadd.f32 0.0, %v854
        %v856 = vpop.f32.mrb[0].mxu0
        %v857 = vpop.f32.mrb[0].mxu0
        %v858 = vadd.f32 0.0, %v857
        %v859 = vpop.f32.mrb[0].mxu0
        %860 = vmatprep.mubr.bf16.mxu0 0
        %861 = vmatmul.mubr.bf16.gmra.mrb[0].mxu0 %v721
        %v862 = vpop.f32.mrb[0].mxu0
        %v863 = vadd.f32 0.0, %v862
        %v864 = vpop.f32.mrb[0].mxu0
        %v865 = vpop.f32.mrb[0].mxu0
        %v866 = vadd.f32 0.0, %v865
        %v867 = vpop.f32.mrb[0].mxu0
        %868 = vmatprep.mubr.bf16.mxu0 0
        %869 = vmatmul.mubr.bf16.gmra.mrb[0].mxu0 %v724
        %v870 = vpop.f32.mrb[0].mxu0
        %v871 = vadd.f32 0.0, %v870
        %v872 = vpop.f32.mrb[0].mxu0
        %v873 = vpop.f32.mrb[0].mxu0
        %v874 = vadd.f32 0.0, %v873
        %v875 = vpop.f32.mrb[0].mxu0
        %876 = vmatprep.mubr.bf16.mxu0 0
        %877 = vmatmul.mubr.bf16.gmra.mrb[0].mxu0 %v727
        %v878 = vpop.f32.mrb[0].mxu0
        %v879 = vadd.f32 0.0, %v878
        %v880 = vpop.f32.mrb[0].mxu0
        %v881 = vpop.f32.mrb[0].mxu0
        %v882 = vadd.f32 0.0, %v881
        %v883 = vpop.f32.mrb[0].mxu0
        %884 = vmatprep.mubr.bf16.mxu0 0
        %885 = vmatmul.mubr.bf16.gmra.mrb[0].mxu0 %v730
        %v886 = vpop.f32.mrb[0].mxu0
        %v887 = vadd.f32 0.0, %v886
        %v888 = vpop.f32.mrb[0].mxu0
        %v889 = vpop.f32.mrb[0].mxu0
        %v890 = vadd.f32 0.0, %v889
        %v891 = vpop.f32.mrb[0].mxu0
        %892 = vdwg.mxu0
        %v925 = vunpack.c.l.b16 %v189
        %v926 = vunpack.c.l.b16 %v190
        %v927 = vunpack.c.l.b16 %v191
        %v928 = vunpack.c.l.b16 %v192
        %v929 = vunpack.c.l.b16 %v193
        %v930 = vunpack.c.l.b16 %v194
        %v931 = vunpack.c.l.b16 %v195
        %v932 = vunpack.c.l.b16 %v196
        %v933 = vunpack.c.l.b16 %v197
        %v934 = vunpack.c.l.b16 %v198
        %v935 = vunpack.c.l.b16 %v199
        %v936 = vunpack.c.l.b16 %v200
        %v937 = vunpack.c.l.b16 %v201
        %v938 = vunpack.c.l.b16 %v202
        %v939 = vunpack.c.l.b16 %v203
        %v940 = vunpack.c.l.b16 %v204
        %v941 = vunpack.c.l.b16 %v205
        %v942 = vunpack.c.l.b16 %v206
        %v943 = vunpack.c.l.b16 %v207
        %v944 = vunpack.c.l.b16 %v208
        %v945 = vunpack.c.l.b16 %v209
        %v946 = vunpack.c.l.b16 %v210
        %v947 = vunpack.c.l.b16 %v211
        %v948 = vunpack.c.l.b16 %v212
        %v949 = vunpack.c.l.b16 %v213
        %v950 = vunpack.c.l.b16 %v214
        %v951 = vunpack.c.l.b16 %v215
        %v952 = vunpack.c.l.b16 %v216
        %v953 = vunpack.c.l.b16 %v217
        %v954 = vunpack.c.l.b16 %v218
        %v955 = vunpack.c.l.b16 %v219
        %v956 = vunpack.c.l.b16 %v220
        %v957 = vpack.c.b16 %v926, %v925
        %v958 = vpack.c.b16 %v928, %v927
        %v959 = vpack.c.b16 %v930, %v929
        %v960 = vpack.c.b16 %v932, %v931
        %v961 = vpack.c.b16 %v934, %v933
        %v962 = vpack.c.b16 %v936, %v935
        %v963 = vpack.c.b16 %v938, %v937
        %v964 = vpack.c.b16 %v940, %v939
        %v965 = vpack.c.b16 %v942, %v941
        %v966 = vpack.c.b16 %v944, %v943
        %v967 = vpack.c.b16 %v946, %v945
        %v968 = vpack.c.b16 %v948, %v947
        %v969 = vpack.c.b16 %v950, %v949
        %v970 = vpack.c.b16 %v952, %v951
        %v971 = vpack.c.b16 %v954, %v953
        %v972 = vpack.c.b16 %v956, %v955
        %v975 = vunpack.c.l.b16 %v221
        %v976 = vunpack.c.l.b16 %v222
        %v977 = vpack.c.b16 %v976, %v975
        %v980 = vsel %vm683, %v957, 0
        %v983 = vsel %vm683, %v958, 0
        %v986 = vsel %vm683, %v959, 0
        %v989 = vsel %vm683, %v960, 0
        %v992 = vsel %vm683, %v961, 0
        %v995 = vsel %vm683, %v962, 0
        %v998 = vsel %vm683, %v963, 0
        %v1001 = vsel %vm683, %v964, 0
        %v1004 = vsel %vm683, %v965, 0
        %v1007 = vsel %vm683, %v966, 0
        %v1010 = vsel %vm683, %v967, 0
        %v1013 = vsel %vm683, %v968, 0
        %v1016 = vsel %vm683, %v969, 0
        %v1019 = vsel %vm683, %v970, 0
        %v1022 = vsel %vm683, %v971, 0
        %v1025 = vsel %vm683, %v972, 0
        %1027 = vmatprep.subr.bf16.mxu0 0
        %1028 = vmatpush1.bf16.msra.mxu0 %v977
        %1029 = vmatprep.subr.bf16.mxu0 0
        %1030 = vmatpush1.bf16.msra.mxu0 0
        %1031 = vmatprep.subr.bf16.mxu0 0
        %1032 = vmatpush1.bf16.msra.mxu0 0
        %1033 = vmatprep.subr.bf16.mxu0 0
        %1034 = vmatpush1.bf16.msra.mxu0 0
        %1035 = vmatprep.subr.bf16.mxu0 0
        %1036 = vmatpush1.bf16.msra.mxu0 0
        %1037 = vmatprep.subr.bf16.mxu0 0
        %1038 = vmatpush1.bf16.msra.mxu0 0
        %1039 = vmatprep.subr.bf16.mxu0 0
        %1040 = vmatpush1.bf16.msra.mxu0 0
        %1041 = vmatprep.subr.bf16.mxu0 0
        %1042 = vmatpush1.bf16.msra.mxu0 0
        %1043 = vmatprep.subr.bf16.mxu0 0
        %1044 = vmatpush1.bf16.msra.mxu0 0
        %1045 = vmatprep.subr.bf16.mxu0 0
        %1046 = vmatpush1.bf16.msra.mxu0 0
        %1047 = vmatprep.subr.bf16.mxu0 0
        %1048 = vmatpush1.bf16.msra.mxu0 0
        %1049 = vmatprep.subr.bf16.mxu0 0
        %1050 = vmatpush1.bf16.msra.mxu0 0
        %1051 = vmatprep.subr.bf16.mxu0 0
        %1052 = vmatpush1.bf16.msra.mxu0 0
        %1053 = vmatprep.subr.bf16.mxu0 0
        %1054 = vmatpush1.bf16.msra.mxu0 0
        %1055 = vmatprep.subr.bf16.mxu0 0
        %1056 = vmatpush1.bf16.msra.mxu0 0
        %1057 = vmatprep.subr.bf16.mxu0 0
        %1058 = vmatpush1.bf16.msra.mxu0 0
        %1059 = vmatprep.mubr.bf16.mxu0 0
        %1060 = vmatmul.mubr.bf16.gmra.mrb[0].mxu0 %v980
        %v1061 = vpop.f32.mrb[0].mxu0
        %v1062 = vadd.f32 %v767, %v1061
        %v1063 = vpop.f32.mrb[0].mxu0
        %v1064 = vpop.f32.mrb[0].mxu0
        %v1065 = vadd.f32 %v770, %v1064
        %v1066 = vpop.f32.mrb[0].mxu0
        %1067 = vmatprep.mubr.bf16.mxu0 0
        %1068 = vmatmul.mubr.bf16.gmra.mrb[0].mxu0 %v983
        %v1069 = vpop.f32.mrb[0].mxu0
        %v1070 = vadd.f32 %v775, %v1069
        %v1071 = vpop.f32.mrb[0].mxu0
        %v1072 = vpop.f32.mrb[0].mxu0
        %v1073 = vadd.f32 %v778, %v1072
        %v1074 = vpop.f32.mrb[0].mxu0
        %1075 = vmatprep.mubr.bf16.mxu0 0
        %1076 = vmatmul.mubr.bf16.gmra.mrb[0].mxu0 %v986
        %v1077 = vpop.f32.mrb[0].mxu0
        %v1078 = vadd.f32 %v783, %v1077
        %v1079 = vpop.f32.mrb[0].mxu0
        %v1080 = vpop.f32.mrb[0].mxu0
        %v1081 = vadd.f32 %v786, %v1080
        %v1082 = vpop.f32.mrb[0].mxu0
        %1083 = vmatprep.mubr.bf16.mxu0 0
        %1084 = vmatmul.mubr.bf16.gmra.mrb[0].mxu0 %v989
        %v1085 = vpop.f32.mrb[0].mxu0
        %v1086 = vadd.f32 %v791, %v1085
        %v1087 = vpop.f32.mrb[0].mxu0
        %v1088 = vpop.f32.mrb[0].mxu0
        %v1089 = vadd.f32 %v794, %v1088
        %v1090 = vpop.f32.mrb[0].mxu0
        %1091 = vmatprep.mubr.bf16.mxu0 0
        %1092 = vmatmul.mubr.bf16.gmra.mrb[0].mxu0 %v992
        %v1093 = vpop.f32.mrb[0].mxu0
        %v1094 = vadd.f32 %v799, %v1093
        %v1095 = vpop.f32.mrb[0].mxu0
        %v1096 = vpop.f32.mrb[0].mxu0
        %v1097 = vadd.f32 %v802, %v1096
        %v1098 = vpop.f32.mrb[0].mxu0
        %1099 = vmatprep.mubr.bf16.mxu0 0
        %1100 = vmatmul.mubr.bf16.gmra.mrb[0].mxu0 %v995
        %v1101 = vpop.f32.mrb[0].mxu0
        %v1102 = vadd.f32 %v807, %v1101
        %v1103 = vpop.f32.mrb[0].mxu0
        %v1104 = vpop.f32.mrb[0].mxu0
        %v1105 = vadd.f32 %v810, %v1104
        %v1106 = vpop.f32.mrb[0].mxu0
        %1107 = vmatprep.mubr.bf16.mxu0 0
        %1108 = vmatmul.mubr.bf16.gmra.mrb[0].mxu0 %v998
        %v1109 = vpop.f32.mrb[0].mxu0
        %v1110 = vadd.f32 %v815, %v1109
        %v1111 = vpop.f32.mrb[0].mxu0
        %v1112 = vpop.f32.mrb[0].mxu0
        %v1113 = vadd.f32 %v818, %v1112
        %v1114 = vpop.f32.mrb[0].mxu0
        %1115 = vmatprep.mubr.bf16.mxu0 0
        %1116 = vmatmul.mubr.bf16.gmra.mrb[0].mxu0 %v1001
        %v1117 = vpop.f32.mrb[0].mxu0
        %v1118 = vadd.f32 %v823, %v1117
        %v1119 = vpop.f32.mrb[0].mxu0
        %v1120 = vpop.f32.mrb[0].mxu0
        %v1121 = vadd.f32 %v826, %v1120
        %v1122 = vpop.f32.mrb[0].mxu0
        %1123 = vmatprep.mubr.bf16.mxu0 0
        %1124 = vmatmul.mubr.bf16.gmra.mrb[0].mxu0 %v1004
        %v1125 = vpop.f32.mrb[0].mxu0
        %v1126 = vadd.f32 %v831, %v1125
        %v1127 = vpop.f32.mrb[0].mxu0
        %v1128 = vpop.f32.mrb[0].mxu0
        %v1129 = vadd.f32 %v834, %v1128
        %v1130 = vpop.f32.mrb[0].mxu0
        %1131 = vmatprep.mubr.bf16.mxu0 0
        %1132 = vmatmul.mubr.bf16.gmra.mrb[0].mxu0 %v1007
        %v1133 = vpop.f32.mrb[0].mxu0
        %v1134 = vadd.f32 %v839, %v1133
        %v1135 = vpop.f32.mrb[0].mxu0
        %v1136 = vpop.f32.mrb[0].mxu0
        %v1137 = vadd.f32 %v842, %v1136
        %v1138 = vpop.f32.mrb[0].mxu0
        %1139 = vmatprep.mubr.bf16.mxu0 0
        %1140 = vmatmul.mubr.bf16.gmra.mrb[0].mxu0 %v1010
        %v1141 = vpop.f32.mrb[0].mxu0
        %v1142 = vadd.f32 %v847, %v1141
        %v1143 = vpop.f32.mrb[0].mxu0
        %v1144 = vpop.f32.mrb[0].mxu0
        %v1145 = vadd.f32 %v850, %v1144
        %v1146 = vpop.f32.mrb[0].mxu0
        %1147 = vmatprep.mubr.bf16.mxu0 0
        %1148 = vmatmul.mubr.bf16.gmra.mrb[0].mxu0 %v1013
        %v1149 = vpop.f32.mrb[0].mxu0
        %v1150 = vadd.f32 %v855, %v1149
        %v1151 = vpop.f32.mrb[0].mxu0
        %v1152 = vpop.f32.mrb[0].mxu0
        %v1153 = vadd.f32 %v858, %v1152
        %v1154 = vpop.f32.mrb[0].mxu0
        %1155 = vmatprep.mubr.bf16.mxu0 0
        %1156 = vmatmul.mubr.bf16.gmra.mrb[0].mxu0 %v1016
        %v1157 = vpop.f32.mrb[0].mxu0
        %v1158 = vadd.f32 %v863, %v1157
        %v1159 = vpop.f32.mrb[0].mxu0
        %v1160 = vpop.f32.mrb[0].mxu0
        %v1161 = vadd.f32 %v866, %v1160
        %v1162 = vpop.f32.mrb[0].mxu0
        %1163 = vmatprep.mubr.bf16.mxu0 0
        %1164 = vmatmul.mubr.bf16.gmra.mrb[0].mxu0 %v1019
        %v1165 = vpop.f32.mrb[0].mxu0
        %v1166 = vadd.f32 %v871, %v1165
        %v1167 = vpop.f32.mrb[0].mxu0
        %v1168 = vpop.f32.mrb[0].mxu0
        %v1169 = vadd.f32 %v874, %v1168
        %v1170 = vpop.f32.mrb[0].mxu0
        %1171 = vmatprep.mubr.bf16.mxu0 0
        %1172 = vmatmul.mubr.bf16.gmra.mrb[0].mxu0 %v1022
        %v1173 = vpop.f32.mrb[0].mxu0
        %v1174 = vadd.f32 %v879, %v1173
        %v1175 = vpop.f32.mrb[0].mxu0
        %v1176 = vpop.f32.mrb[0].mxu0
        %v1177 = vadd.f32 %v882, %v1176
        %v1178 = vpop.f32.mrb[0].mxu0
        %1179 = vmatprep.mubr.bf16.mxu0 0
        %1180 = vmatmul.mubr.bf16.gmra.mrb[0].mxu0 %v1025
        %v1181 = vpop.f32.mrb[0].mxu0
        %v1182 = vadd.f32 %v887, %v1181
        %v1183 = vpop.f32.mrb[0].mxu0
        %v1184 = vpop.f32.mrb[0].mxu0
        %v1185 = vadd.f32 %v890, %v1184
        %v1186 = vpop.f32.mrb[0].mxu0
        %1187 = vdwg.mxu0
        %v1188 = vld [vmem:[%s188] sm:$0xe]
        %v1189 = vld [vmem:[%s188 + $0xc] sm:$0xe]
        %v1190 = vld [vmem:[%s188 + $0x18] sm:$0xe]
        %v1191 = vld [vmem:[%s188 + $0x24] sm:$0xe]
        %v1192 = vld [vmem:[%s188 + $0x30] sm:$0xe]
        %v1193 = vld [vmem:[%s188 + $0x3c] sm:$0xe]
        %v1194 = vld [vmem:[%s188 + $0x48] sm:$0xe]
        %v1195 = vld [vmem:[%s188 + $0x54] sm:$0xe]
        %v1196 = vld [vmem:[%s188 + $0x60] sm:$0xe]
        %v1197 = vld [vmem:[%s188 + $0x6c] sm:$0xe]
        %v1198 = vld [vmem:[%s188 + $0x78] sm:$0xe]
        %v1199 = vld [vmem:[%s188 + $0x84] sm:$0xe]
        %v1200 = vld [vmem:[%s188 + $0x90] sm:$0xe]
        %v1201 = vld [vmem:[%s188 + $0x9c] sm:$0xe]
        %v1202 = vld [vmem:[%s188 + $0xa8] sm:$0xe]
        %v1203 = vld [vmem:[%s188 + $0xb4] sm:$0xe]
        %vm1236 = vcmask 1042432
        %vm1237 = vcmask 1046532
        %vm1238 = vmor %vm1236, %vm1237
        %v1239 = vrot.slane %v1188, 5
        %v1240 = vrot.slane %v1239, 4
        %v1241 = vrot.slane %v190, 5
        %v1242 = vsel %vm1238, %v1240, %v1241
        %v1243 = vrot.slane %v1241, 4
        %v1244 = vrot.slane %v223, 5
        %v1245 = vsel %vm1238, %v1243, %v1244
        %v1246 = vrot.slane %v1189, 5
        %v1247 = vrot.slane %v1246, 4
        %v1248 = vrot.slane %v192, 5
        %v1249 = vsel %vm1238, %v1247, %v1248
        %v1250 = vrot.slane %v1248, 4
        %v1251 = vrot.slane %v224, 5
        %v1252 = vsel %vm1238, %v1250, %v1251
        %v1253 = vrot.slane %v1190, 5
        %v1254 = vrot.slane %v1253, 4
        %v1255 = vrot.slane %v194, 5
        %v1256 = vsel %vm1238, %v1254, %v1255
        %v1257 = vrot.slane %v1255, 4
        %v1258 = vrot.slane %v225, 5
        %v1259 = vsel %vm1238, %v1257, %v1258
        %v1260 = vrot.slane %v1191, 5
        %v1261 = vrot.slane %v1260, 4
        %v1262 = vrot.slane %v196, 5
        %v1263 = vsel %vm1238, %v1261, %v1262
        %v1264 = vrot.slane %v1262, 4
        %v1265 = vrot.slane %v226, 5
        %v1266 = vsel %vm1238, %v1264, %v1265
        %v1267 = vrot.slane %v1192, 5
        %v1268 = vrot.slane %v1267, 4
        %v1269 = vrot.slane %v198, 5
        %v1270 = vsel %vm1238, %v1268, %v1269
        %v1271 = vrot.slane %v1269, 4
        %v1272 = vrot.slane %v227, 5
        %v1273 = vsel %vm1238, %v1271, %v1272
        %v1274 = vrot.slane %v1193, 5
        %v1275 = vrot.slane %v1274, 4
        %v1276 = vrot.slane %v200, 5
        %v1277 = vsel %vm1238, %v1275, %v1276
        %v1278 = vrot.slane %v1276, 4
        %v1279 = vrot.slane %v228, 5
        %v1280 = vsel %vm1238, %v1278, %v1279
        %v1281 = vrot.slane %v1194, 5
        %v1282 = vrot.slane %v1281, 4
        %v1283 = vrot.slane %v202, 5
        %v1284 = vsel %vm1238, %v1282, %v1283
        %v1285 = vrot.slane %v1283, 4
        %v1286 = vrot.slane %v229, 5
        %v1287 = vsel %vm1238, %v1285, %v1286
        %v1288 = vrot.slane %v1195, 5
        %v1289 = vrot.slane %v1288, 4
        %v1290 = vrot.slane %v204, 5
        %v1291 = vsel %vm1238, %v1289, %v1290
        %v1292 = vrot.slane %v1290, 4
        %v1293 = vrot.slane %v230, 5
        %v1294 = vsel %vm1238, %v1292, %v1293
        %v1295 = vrot.slane %v1196, 5
        %v1296 = vrot.slane %v1295, 4
        %v1297 = vrot.slane %v206, 5
        %v1298 = vsel %vm1238, %v1296, %v1297
        %v1299 = vrot.slane %v1297, 4
        %v1300 = vrot.slane %v231, 5
        %v1301 = vsel %vm1238, %v1299, %v1300
        %v1302 = vrot.slane %v1197, 5
        %v1303 = vrot.slane %v1302, 4
        %v1304 = vrot.slane %v208, 5
        %v1305 = vsel %vm1238, %v1303, %v1304
        %v1306 = vrot.slane %v1304, 4
        %v1307 = vrot.slane %v232, 5
        %v1308 = vsel %vm1238, %v1306, %v1307
        %v1309 = vrot.slane %v1198, 5
        %v1310 = vrot.slane %v1309, 4
        %v1311 = vrot.slane %v210, 5
        %v1312 = vsel %vm1238, %v1310, %v1311
        %v1313 = vrot.slane %v1311, 4
        %v1314 = vrot.slane %v233, 5
        %v1315 = vsel %vm1238, %v1313, %v1314
        %v1316 = vrot.slane %v1199, 5
        %v1317 = vrot.slane %v1316, 4
        %v1318 = vrot.slane %v212, 5
        %v1319 = vsel %vm1238, %v1317, %v1318
        %v1320 = vrot.slane %v1318, 4
        %v1321 = vrot.slane %v234, 5
        %v1322 = vsel %vm1238, %v1320, %v1321
        %v1323 = vrot.slane %v1200, 5
        %v1324 = vrot.slane %v1323, 4
        %v1325 = vrot.slane %v214, 5
        %v1326 = vsel %vm1238, %v1324, %v1325
        %v1327 = vrot.slane %v1325, 4
        %v1328 = vrot.slane %v235, 5
        %v1329 = vsel %vm1238, %v1327, %v1328
        %v1330 = vrot.slane %v1201, 5
        %v1331 = vrot.slane %v1330, 4
        %v1332 = vrot.slane %v216, 5
        %v1333 = vsel %vm1238, %v1331, %v1332
        %v1334 = vrot.slane %v1332, 4
        %v1335 = vrot.slane %v236, 5
        %v1336 = vsel %vm1238, %v1334, %v1335
        %v1337 = vrot.slane %v1202, 5
        %v1338 = vrot.slane %v1337, 4
        %v1339 = vrot.slane %v218, 5
        %v1340 = vsel %vm1238, %v1338, %v1339
        %v1341 = vrot.slane %v1339, 4
        %v1342 = vrot.slane %v237, 5
        %v1343 = vsel %vm1238, %v1341, %v1342
        %v1344 = vrot.slane %v1203, 5
        %v1345 = vrot.slane %v1344, 4
        %v1346 = vrot.slane %v220, 5
        %v1347 = vsel %vm1238, %v1345, %v1346
        %v1348 = vrot.slane %v1346, 4
        %v1349 = vrot.slane %v238, 5
        %v1350 = vsel %vm1238, %v1348, %v1349
        %s1351 = scalar_lea.vmem %s1, 16
        %v1352 = vld [vmem:[%s1351] sm:$0xf]
        %v1353 = vld [vmem:[%s1351 + $0x4] sm:$0xf]
        %v1354 = vunpack.c.l.b16 %v1242
        %v1355 = vunpack.c.l.b16 %v1245
        %v1356 = vunpack.c.l.b16 %v1249
        %v1357 = vunpack.c.l.b16 %v1252
        %v1358 = vunpack.c.l.b16 %v1256
        %v1359 = vunpack.c.l.b16 %v1259
        %v1360 = vunpack.c.l.b16 %v1263
        %v1361 = vunpack.c.l.b16 %v1266
        %v1362 = vunpack.c.l.b16 %v1270
        %v1363 = vunpack.c.l.b16 %v1273
        %v1364 = vunpack.c.l.b16 %v1277
        %v1365 = vunpack.c.l.b16 %v1280
        %v1366 = vunpack.c.l.b16 %v1284
        %v1367 = vunpack.c.l.b16 %v1287
        %v1368 = vunpack.c.l.b16 %v1291
        %v1369 = vunpack.c.l.b16 %v1294
        %v1370 = vunpack.c.l.b16 %v1298
        %v1371 = vunpack.c.l.b16 %v1301
        %v1372 = vunpack.c.l.b16 %v1305
        %v1373 = vunpack.c.l.b16 %v1308
        %v1374 = vunpack.c.l.b16 %v1312
        %v1375 = vunpack.c.l.b16 %v1315
        %v1376 = vunpack.c.l.b16 %v1319
        %v1377 = vunpack.c.l.b16 %v1322
        %v1378 = vunpack.c.l.b16 %v1326
        %v1379 = vunpack.c.l.b16 %v1329
        %v1380 = vunpack.c.l.b16 %v1333
        %v1381 = vunpack.c.l.b16 %v1336
        %v1382 = vunpack.c.l.b16 %v1340
        %v1383 = vunpack.c.l.b16 %v1343
        %v1384 = vunpack.c.l.b16 %v1347
        %v1385 = vunpack.c.l.b16 %v1350
        %v1386 = vpack.c.b16 %v1355, %v1354
        %v1387 = vpack.c.b16 %v1357, %v1356
        %v1388 = vpack.c.b16 %v1359, %v1358
        %v1389 = vpack.c.b16 %v1361, %v1360
        %v1390 = vpack.c.b16 %v1363, %v1362
        %v1391 = vpack.c.b16 %v1365, %v1364
        %v1392 = vpack.c.b16 %v1367, %v1366
        %v1393 = vpack.c.b16 %v1369, %v1368
        %v1394 = vpack.c.b16 %v1371, %v1370
        %v1395 = vpack.c.b16 %v1373, %v1372
        %v1396 = vpack.c.b16 %v1375, %v1374
        %v1397 = vpack.c.b16 %v1377, %v1376
        %v1398 = vpack.c.b16 %v1379, %v1378
        %v1399 = vpack.c.b16 %v1381, %v1380
        %v1400 = vpack.c.b16 %v1383, %v1382
        %v1401 = vpack.c.b16 %v1385, %v1384
        %v1404 = vunpack.c.l.b16 %v1352
        %v1405 = vunpack.c.l.b16 %v1353
        %v1406 = vpack.c.b16 %v1405, %v1404
        %v1409 = vsel %vm683, %v1386, 0
        %v1412 = vsel %vm683, %v1387, 0
        %v1415 = vsel %vm683, %v1388, 0
        %v1418 = vsel %vm683, %v1389, 0
        %v1421 = vsel %vm683, %v1390, 0
        %v1424 = vsel %vm683, %v1391, 0
        %v1427 = vsel %vm683, %v1392, 0
        %v1430 = vsel %vm683, %v1393, 0
        %v1433 = vsel %vm683, %v1394, 0
        %v1436 = vsel %vm683, %v1395, 0
        %v1439 = vsel %vm683, %v1396, 0
        %v1442 = vsel %vm683, %v1397, 0
        %v1445 = vsel %vm683, %v1398, 0
        %v1448 = vsel %vm683, %v1399, 0
        %v1451 = vsel %vm683, %v1400, 0
        %v1454 = vsel %vm683, %v1401, 0
        %1456 = vmatprep.subr.bf16.mxu0 0
        %1457 = vmatpush1.bf16.msra.mxu0 %v1406
        %1458 = vmatprep.subr.bf16.mxu0 0
        %1459 = vmatpush1.bf16.msra.mxu0 0
        %1460 = vmatprep.subr.bf16.mxu0 0
        %1461 = vmatpush1.bf16.msra.mxu0 0
        %1462 = vmatprep.subr.bf16.mxu0 0
        %1463 = vmatpush1.bf16.msra.mxu0 0
        %1464 = vmatprep.subr.bf16.mxu0 0
        %1465 = vmatpush1.bf16.msra.mxu0 0
        %1466 = vmatprep.subr.bf16.mxu0 0
        %1467 = vmatpush1.bf16.msra.mxu0 0
        %1468 = vmatprep.subr.bf16.mxu0 0
        %1469 = vmatpush1.bf16.msra.mxu0 0
        %1470 = vmatprep.subr.bf16.mxu0 0
        %1471 = vmatpush1.bf16.msra.mxu0 0
        %1472 = vmatprep.subr.bf16.mxu0 0
        %1473 = vmatpush1.bf16.msra.mxu0 0
        %1474 = vmatprep.subr.bf16.mxu0 0
        %1475 = vmatpush1.bf16.msra.mxu0 0
        %1476 = vmatprep.subr.bf16.mxu0 0
        %1477 = vmatpush1.bf16.msra.mxu0 0
        %1478 = vmatprep.subr.bf16.mxu0 0
        %1479 = vmatpush1.bf16.msra.mxu0 0
        %1480 = vmatprep.subr.bf16.mxu0 0
        %1481 = vmatpush1.bf16.msra.mxu0 0
        %1482 = vmatprep.subr.bf16.mxu0 0
        %1483 = vmatpush1.bf16.msra.mxu0 0
        %1484 = vmatprep.subr.bf16.mxu0 0
        %1485 = vmatpush1.bf16.msra.mxu0 0
        %1486 = vmatprep.subr.bf16.mxu0 0
        %1487 = vmatpush1.bf16.msra.mxu0 0
        %1488 = vmatprep.mubr.bf16.mxu0 0
        %1489 = vmatmul.mubr.bf16.gmra.mrb[0].mxu0 %v1409
        %v1490 = vpop.f32.mrb[0].mxu0
        %v1491 = vadd.f32 0.0, %v1490
        %v1492 = vpop.f32.mrb[0].mxu0
        %v1493 = vpop.f32.mrb[0].mxu0
        %v1494 = vadd.f32 0.0, %v1493
        %v1495 = vpop.f32.mrb[0].mxu0
        %1496 = vmatprep.mubr.bf16.mxu0 0
        %1497 = vmatmul.mubr.bf16.gmra.mrb[0].mxu0 %v1412
        %v1498 = vpop.f32.mrb[0].mxu0
        %v1499 = vadd.f32 0.0, %v1498
        %v1500 = vpop.f32.mrb[0].mxu0
        %v1501 = vpop.f32.mrb[0].mxu0
        %v1502 = vadd.f32 0.0, %v1501
        %v1503 = vpop.f32.mrb[0].mxu0
        %1504 = vmatprep.mubr.bf16.mxu0 0
        %1505 = vmatmul.mubr.bf16.gmra.mrb[0].mxu0 %v1415
        %v1506 = vpop.f32.mrb[0].mxu0
        %v1507 = vadd.f32 0.0, %v1506
        %v1508 = vpop.f32.mrb[0].mxu0
        %v1509 = vpop.f32.mrb[0].mxu0
        %v1510 = vadd.f32 0.0, %v1509
        %v1511 = vpop.f32.mrb[0].mxu0
        %1512 = vmatprep.mubr.bf16.mxu0 0
        %1513 = vmatmul.mubr.bf16.gmra.mrb[0].mxu0 %v1418
        %v1514 = vpop.f32.mrb[0].mxu0
        %v1515 = vadd.f32 0.0, %v1514
        %v1516 = vpop.f32.mrb[0].mxu0
        %v1517 = vpop.f32.mrb[0].mxu0
        %v1518 = vadd.f32 0.0, %v1517
        %v1519 = vpop.f32.mrb[0].mxu0
        %1520 = vmatprep.mubr.bf16.mxu0 0
        %1521 = vmatmul.mubr.bf16.gmra.mrb[0].mxu0 %v1421
        %v1522 = vpop.f32.mrb[0].mxu0
        %v1523 = vadd.f32 0.0, %v1522
        %v1524 = vpop.f32.mrb[0].mxu0
        %v1525 = vpop.f32.mrb[0].mxu0
        %v1526 = vadd.f32 0.0, %v1525
        %v1527 = vpop.f32.mrb[0].mxu0
        %1528 = vmatprep.mubr.bf16.mxu0 0
        %1529 = vmatmul.mubr.bf16.gmra.mrb[0].mxu0 %v1424
        %v1530 = vpop.f32.mrb[0].mxu0
        %v1531 = vadd.f32 0.0, %v1530
        %v1532 = vpop.f32.mrb[0].mxu0
        %v1533 = vpop.f32.mrb[0].mxu0
        %v1534 = vadd.f32 0.0, %v1533
        %v1535 = vpop.f32.mrb[0].mxu0
        %1536 = vmatprep.mubr.bf16.mxu0 0
        %1537 = vmatmul.mubr.bf16.gmra.mrb[0].mxu0 %v1427
        %v1538 = vpop.f32.mrb[0].mxu0
        %v1539 = vadd.f32 0.0, %v1538
        %v1540 = vpop.f32.mrb[0].mxu0
        %v1541 = vpop.f32.mrb[0].mxu0
        %v1542 = vadd.f32 0.0, %v1541
        %v1543 = vpop.f32.mrb[0].mxu0
        %1544 = vmatprep.mubr.bf16.mxu0 0
        %1545 = vmatmul.mubr.bf16.gmra.mrb[0].mxu0 %v1430
        %v1546 = vpop.f32.mrb[0].mxu0
        %v1547 = vadd.f32 0.0, %v1546
        %v1548 = vpop.f32.mrb[0].mxu0
        %v1549 = vpop.f32.mrb[0].mxu0
        %v1550 = vadd.f32 0.0, %v1549
        %v1551 = vpop.f32.mrb[0].mxu0
        %1552 = vmatprep.mubr.bf16.mxu0 0
        %1553 = vmatmul.mubr.bf16.gmra.mrb[0].mxu0 %v1433
        %v1554 = vpop.f32.mrb[0].mxu0
        %v1555 = vadd.f32 0.0, %v1554
        %v1556 = vpop.f32.mrb[0].mxu0
        %v1557 = vpop.f32.mrb[0].mxu0
        %v1558 = vadd.f32 0.0, %v1557
        %v1559 = vpop.f32.mrb[0].mxu0
        %1560 = vmatprep.mubr.bf16.mxu0 0
        %1561 = vmatmul.mubr.bf16.gmra.mrb[0].mxu0 %v1436
        %v1562 = vpop.f32.mrb[0].mxu0
        %v1563 = vadd.f32 0.0, %v1562
        %v1564 = vpop.f32.mrb[0].mxu0
        %v1565 = vpop.f32.mrb[0].mxu0
        %v1566 = vadd.f32 0.0, %v1565
        %v1567 = vpop.f32.mrb[0].mxu0
        %1568 = vmatprep.mubr.bf16.mxu0 0
        %1569 = vmatmul.mubr.bf16.gmra.mrb[0].mxu0 %v1439
        %v1570 = vpop.f32.mrb[0].mxu0
        %v1571 = vadd.f32 0.0, %v1570
        %v1572 = vpop.f32.mrb[0].mxu0
        %v1573 = vpop.f32.mrb[0].mxu0
        %v1574 = vadd.f32 0.0, %v1573
        %v1575 = vpop.f32.mrb[0].mxu0
        %1576 = vmatprep.mubr.bf16.mxu0 0
        %1577 = vmatmul.mubr.bf16.gmra.mrb[0].mxu0 %v1442
        %v1578 = vpop.f32.mrb[0].mxu0
        %v1579 = vadd.f32 0.0, %v1578
        %v1580 = vpop.f32.mrb[0].mxu0
        %v1581 = vpop.f32.mrb[0].mxu0
        %v1582 = vadd.f32 0.0, %v1581
        %v1583 = vpop.f32.mrb[0].mxu0
        %1584 = vmatprep.mubr.bf16.mxu0 0
        %1585 = vmatmul.mubr.bf16.gmra.mrb[0].mxu0 %v1445
        %v1586 = vpop.f32.mrb[0].mxu0
        %v1587 = vadd.f32 0.0, %v1586
        %v1588 = vpop.f32.mrb[0].mxu0
        %v1589 = vpop.f32.mrb[0].mxu0
        %v1590 = vadd.f32 0.0, %v1589
        %v1591 = vpop.f32.mrb[0].mxu0
        %1592 = vmatprep.mubr.bf16.mxu0 0
        %1593 = vmatmul.mubr.bf16.gmra.mrb[0].mxu0 %v1448
        %v1594 = vpop.f32.mrb[0].mxu0
        %v1595 = vadd.f32 0.0, %v1594
        %v1596 = vpop.f32.mrb[0].mxu0
        %v1597 = vpop.f32.mrb[0].mxu0
        %v1598 = vadd.f32 0.0, %v1597
        %v1599 = vpop.f32.mrb[0].mxu0
        %1600 = vmatprep.mubr.bf16.mxu0 0
        %1601 = vmatmul.mubr.bf16.gmra.mrb[0].mxu0 %v1451
        %v1602 = vpop.f32.mrb[0].mxu0
        %v1603 = vadd.f32 0.0, %v1602
        %v1604 = vpop.f32.mrb[0].mxu0
        %v1605 = vpop.f32.mrb[0].mxu0
        %v1606 = vadd.f32 0.0, %v1605
        %v1607 = vpop.f32.mrb[0].mxu0
        %1608 = vmatprep.mubr.bf16.mxu0 0
        %1609 = vmatmul.mubr.bf16.gmra.mrb[0].mxu0 %v1454
        %v1610 = vpop.f32.mrb[0].mxu0
        %v1611 = vadd.f32 0.0, %v1610
        %v1612 = vpop.f32.mrb[0].mxu0
        %v1613 = vpop.f32.mrb[0].mxu0
        %v1614 = vadd.f32 0.0, %v1613
        %v1615 = vpop.f32.mrb[0].mxu0
        %1616 = vdwg.mxu0
        %v1617 = vadd.f32 %v1062, %v1491
        %v1618 = vadd.f32 %v1065, %v1494
        %v1619 = vadd.f32 %v1070, %v1499
        %v1620 = vadd.f32 %v1073, %v1502
        %v1621 = vadd.f32 %v1078, %v1507
        %v1622 = vadd.f32 %v1081, %v1510
        %v1623 = vadd.f32 %v1086, %v1515
        %v1624 = vadd.f32 %v1089, %v1518
        %v1625 = vadd.f32 %v1094, %v1523
        %v1626 = vadd.f32 %v1097, %v1526
        %v1627 = vadd.f32 %v1102, %v1531
        %v1628 = vadd.f32 %v1105, %v1534
        %v1629 = vadd.f32 %v1110, %v1539
        %v1630 = vadd.f32 %v1113, %v1542
        %v1631 = vadd.f32 %v1118, %v1547
        %v1632 = vadd.f32 %v1121, %v1550
        %v1633 = vadd.f32 %v1126, %v1555
        %v1634 = vadd.f32 %v1129, %v1558
        %v1635 = vadd.f32 %v1134, %v1563
        %v1636 = vadd.f32 %v1137, %v1566
        %v1637 = vadd.f32 %v1142, %v1571
        %v1638 = vadd.f32 %v1145, %v1574
        %v1639 = vadd.f32 %v1150, %v1579
        %v1640 = vadd.f32 %v1153, %v1582
        %v1641 = vadd.f32 %v1158, %v1587
        %v1642 = vadd.f32 %v1161, %v1590
        %v1643 = vadd.f32 %v1166, %v1595
        %v1644 = vadd.f32 %v1169, %v1598
        %v1645 = vadd.f32 %v1174, %v1603
        %v1646 = vadd.f32 %v1177, %v1606
        %v1647 = vadd.f32 %v1182, %v1611
        %v1648 = vadd.f32 %v1185, %v1614
        %s1649 = sadd.s32 %s185, 1
        %s1650 = smul.u32 %s1649, 3
        %s1651 = smul.addr %s1650, 4
        %s1652 = scalar_lea.vmem %s182, %s1651
        %v1653 = vld [vmem:[%s1652] sm:$0xf]
        %v1654 = vld [vmem:[%s1652 + $0x4] sm:$0xf]
        %v1655 = vld [vmem:[%s1652 + $0xc] sm:$0xf]
        %v1656 = vld [vmem:[%s1652 + $0x10] sm:$0xf]
        %v1657 = vld [vmem:[%s1652 + $0x18] sm:$0xf]
        %v1658 = vld [vmem:[%s1652 + $0x1c] sm:$0xf]
        %v1659 = vld [vmem:[%s1652 + $0x24] sm:$0xf]
        %v1660 = vld [vmem:[%s1652 + $0x28] sm:$0xf]
        %v1661 = vld [vmem:[%s1652 + $0x30] sm:$0xf]
        %v1662 = vld [vmem:[%s1652 + $0x34] sm:$0xf]
        %v1663 = vld [vmem:[%s1652 + $0x3c] sm:$0xf]
        %v1664 = vld [vmem:[%s1652 + $0x40] sm:$0xf]
        %v1665 = vld [vmem:[%s1652 + $0x48] sm:$0xf]
        %v1666 = vld [vmem:[%s1652 + $0x4c] sm:$0xf]
        %v1667 = vld [vmem:[%s1652 + $0x54] sm:$0xf]
        %v1668 = vld [vmem:[%s1652 + $0x58] sm:$0xf]
        %v1669 = vld [vmem:[%s1652 + $0x60] sm:$0xf]
        %v1670 = vld [vmem:[%s1652 + $0x64] sm:$0xf]
        %v1671 = vld [vmem:[%s1652 + $0x6c] sm:$0xf]
        %v1672 = vld [vmem:[%s1652 + $0x70] sm:$0xf]
        %v1673 = vld [vmem:[%s1652 + $0x78] sm:$0xf]
        %v1674 = vld [vmem:[%s1652 + $0x7c] sm:$0xf]
        %v1675 = vld [vmem:[%s1652 + $0x84] sm:$0xf]
        %v1676 = vld [vmem:[%s1652 + $0x88] sm:$0xf]
        %v1677 = vld [vmem:[%s1652 + $0x90] sm:$0xf]
        %v1678 = vld [vmem:[%s1652 + $0x94] sm:$0xf]
        %v1679 = vld [vmem:[%s1652 + $0x9c] sm:$0xf]
        %v1680 = vld [vmem:[%s1652 + $0xa0] sm:$0xf]
        %v1681 = vld [vmem:[%s1652 + $0xa8] sm:$0xf]
        %v1682 = vld [vmem:[%s1652 + $0xac] sm:$0xf]
        %v1683 = vld [vmem:[%s1652 + $0xb4] sm:$0xf]
        %v1684 = vld [vmem:[%s1652 + $0xb8] sm:$0xf]
        %s1685 = scalar_lea.vmem %s1, 24
        %v1686 = vld [vmem:[%s1685] sm:$0xf]
        %v1687 = vld [vmem:[%s1685 + $0x4] sm:$0xf]
        %v1720 = vunpack.c.l.b16 %v1653
        %v1721 = vunpack.c.l.b16 %v1654
        %v1722 = vunpack.c.l.b16 %v1655
        %v1723 = vunpack.c.l.b16 %v1656
        %v1724 = vunpack.c.l.b16 %v1657
        %v1725 = vunpack.c.l.b16 %v1658
        %v1726 = vunpack.c.l.b16 %v1659
        %v1727 = vunpack.c.l.b16 %v1660
        %v1728 = vunpack.c.l.b16 %v1661
        %v1729 = vunpack.c.l.b16 %v1662
        %v1730 = vunpack.c.l.b16 %v1663
        %v1731 = vunpack.c.l.b16 %v1664
        %v1732 = vunpack.c.l.b16 %v1665
        %v1733 = vunpack.c.l.b16 %v1666
        %v1734 = vunpack.c.l.b16 %v1667
        %v1735 = vunpack.c.l.b16 %v1668
        %v1736 = vunpack.c.l.b16 %v1669
        %v1737 = vunpack.c.l.b16 %v1670
        %v1738 = vunpack.c.l.b16 %v1671
        %v1739 = vunpack.c.l.b16 %v1672
        %v1740 = vunpack.c.l.b16 %v1673
        %v1741 = vunpack.c.l.b16 %v1674
        %v1742 = vunpack.c.l.b16 %v1675
        %v1743 = vunpack.c.l.b16 %v1676
        %v1744 = vunpack.c.l.b16 %v1677
        %v1745 = vunpack.c.l.b16 %v1678
        %v1746 = vunpack.c.l.b16 %v1679
        %v1747 = vunpack.c.l.b16 %v1680
        %v1748 = vunpack.c.l.b16 %v1681
        %v1749 = vunpack.c.l.b16 %v1682
        %v1750 = vunpack.c.l.b16 %v1683
        %v1751 = vunpack.c.l.b16 %v1684
        %v1752 = vpack.c.b16 %v1721, %v1720
        %v1753 = vpack.c.b16 %v1723, %v1722
        %v1754 = vpack.c.b16 %v1725, %v1724
        %v1755 = vpack.c.b16 %v1727, %v1726
        %v1756 = vpack.c.b16 %v1729, %v1728
        %v1757 = vpack.c.b16 %v1731, %v1730
        %v1758 = vpack.c.b16 %v1733, %v1732
        %v1759 = vpack.c.b16 %v1735, %v1734
        %v1760 = vpack.c.b16 %v1737, %v1736
        %v1761 = vpack.c.b16 %v1739, %v1738
        %v1762 = vpack.c.b16 %v1741, %v1740
        %v1763 = vpack.c.b16 %v1743, %v1742
        %v1764 = vpack.c.b16 %v1745, %v1744
        %v1765 = vpack.c.b16 %v1747, %v1746
        %v1766 = vpack.c.b16 %v1749, %v1748
        %v1767 = vpack.c.b16 %v1751, %v1750
        %v1770 = vunpack.c.l.b16 %v1686
        %v1771 = vunpack.c.l.b16 %v1687
        %v1772 = vpack.c.b16 %v1771, %v1770
        %v1775 = vsel %vm683, %v1752, 0
        %v1778 = vsel %vm683, %v1753, 0
        %v1781 = vsel %vm683, %v1754, 0
        %v1784 = vsel %vm683, %v1755, 0
        %v1787 = vsel %vm683, %v1756, 0
        %v1790 = vsel %vm683, %v1757, 0
        %v1793 = vsel %vm683, %v1758, 0
        %v1796 = vsel %vm683, %v1759, 0
        %v1799 = vsel %vm683, %v1760, 0
        %v1802 = vsel %vm683, %v1761, 0
        %v1805 = vsel %vm683, %v1762, 0
        %v1808 = vsel %vm683, %v1763, 0
        %v1811 = vsel %vm683, %v1764, 0
        %v1814 = vsel %vm683, %v1765, 0
        %v1817 = vsel %vm683, %v1766, 0
        %v1820 = vsel %vm683, %v1767, 0
        %1822 = vmatprep.subr.bf16.mxu0 0
        %1823 = vmatpush1.bf16.msra.mxu0 %v1772
        %1824 = vmatprep.subr.bf16.mxu0 0
        %1825 = vmatpush1.bf16.msra.mxu0 0
        %1826 = vmatprep.subr.bf16.mxu0 0
        %1827 = vmatpush1.bf16.msra.mxu0 0
        %1828 = vmatprep.subr.bf16.mxu0 0
        %1829 = vmatpush1.bf16.msra.mxu0 0
        %1830 = vmatprep.subr.bf16.mxu0 0
        %1831 = vmatpush1.bf16.msra.mxu0 0
        %1832 = vmatprep.subr.bf16.mxu0 0
        %1833 = vmatpush1.bf16.msra.mxu0 0
        %1834 = vmatprep.subr.bf16.mxu0 0
        %1835 = vmatpush1.bf16.msra.mxu0 0
        %1836 = vmatprep.subr.bf16.mxu0 0
        %1837 = vmatpush1.bf16.msra.mxu0 0
        %1838 = vmatprep.subr.bf16.mxu0 0
        %1839 = vmatpush1.bf16.msra.mxu0 0
        %1840 = vmatprep.subr.bf16.mxu0 0
        %1841 = vmatpush1.bf16.msra.mxu0 0
        %1842 = vmatprep.subr.bf16.mxu0 0
        %1843 = vmatpush1.bf16.msra.mxu0 0
        %1844 = vmatprep.subr.bf16.mxu0 0
        %1845 = vmatpush1.bf16.msra.mxu0 0
        %1846 = vmatprep.subr.bf16.mxu0 0
        %1847 = vmatpush1.bf16.msra.mxu0 0
        %1848 = vmatprep.subr.bf16.mxu0 0
        %1849 = vmatpush1.bf16.msra.mxu0 0
        %1850 = vmatprep.subr.bf16.mxu0 0
        %1851 = vmatpush1.bf16.msra.mxu0 0
        %1852 = vmatprep.subr.bf16.mxu0 0
        %1853 = vmatpush1.bf16.msra.mxu0 0
        %1854 = vmatprep.mubr.bf16.mxu0 0
        %1855 = vmatmul.mubr.bf16.gmra.mrb[0].mxu0 %v1775
        %v1856 = vpop.f32.mrb[0].mxu0
        %v1857 = vadd.f32 0.0, %v1856
        %v1858 = vpop.f32.mrb[0].mxu0
        %v1859 = vpop.f32.mrb[0].mxu0
        %v1860 = vadd.f32 0.0, %v1859
        %v1861 = vpop.f32.mrb[0].mxu0
        %1862 = vmatprep.mubr.bf16.mxu0 0
        %1863 = vmatmul.mubr.bf16.gmra.mrb[0].mxu0 %v1778
        %v1864 = vpop.f32.mrb[0].mxu0
        %v1865 = vadd.f32 0.0, %v1864
        %v1866 = vpop.f32.mrb[0].mxu0
        %v1867 = vpop.f32.mrb[0].mxu0
        %v1868 = vadd.f32 0.0, %v1867
        %v1869 = vpop.f32.mrb[0].mxu0
        %1870 = vmatprep.mubr.bf16.mxu0 0
        %1871 = vmatmul.mubr.bf16.gmra.mrb[0].mxu0 %v1781
        %v1872 = vpop.f32.mrb[0].mxu0
        %v1873 = vadd.f32 0.0, %v1872
        %v1874 = vpop.f32.mrb[0].mxu0
        %v1875 = vpop.f32.mrb[0].mxu0
        %v1876 = vadd.f32 0.0, %v1875
        %v1877 = vpop.f32.mrb[0].mxu0
        %1878 = vmatprep.mubr.bf16.mxu0 0
        %1879 = vmatmul.mubr.bf16.gmra.mrb[0].mxu0 %v1784
        %v1880 = vpop.f32.mrb[0].mxu0
        %v1881 = vadd.f32 0.0, %v1880
        %v1882 = vpop.f32.mrb[0].mxu0
        %v1883 = vpop.f32.mrb[0].mxu0
        %v1884 = vadd.f32 0.0, %v1883
        %v1885 = vpop.f32.mrb[0].mxu0
        %1886 = vmatprep.mubr.bf16.mxu0 0
        %1887 = vmatmul.mubr.bf16.gmra.mrb[0].mxu0 %v1787
        %v1888 = vpop.f32.mrb[0].mxu0
        %v1889 = vadd.f32 0.0, %v1888
        %v1890 = vpop.f32.mrb[0].mxu0
        %v1891 = vpop.f32.mrb[0].mxu0
        %v1892 = vadd.f32 0.0, %v1891
        %v1893 = vpop.f32.mrb[0].mxu0
        %1894 = vmatprep.mubr.bf16.mxu0 0
        %1895 = vmatmul.mubr.bf16.gmra.mrb[0].mxu0 %v1790
        %v1896 = vpop.f32.mrb[0].mxu0
        %v1897 = vadd.f32 0.0, %v1896
        %v1898 = vpop.f32.mrb[0].mxu0
        %v1899 = vpop.f32.mrb[0].mxu0
        %v1900 = vadd.f32 0.0, %v1899
        %v1901 = vpop.f32.mrb[0].mxu0
        %1902 = vmatprep.mubr.bf16.mxu0 0
        %1903 = vmatmul.mubr.bf16.gmra.mrb[0].mxu0 %v1793
        %v1904 = vpop.f32.mrb[0].mxu0
        %v1905 = vadd.f32 0.0, %v1904
        %v1906 = vpop.f32.mrb[0].mxu0
        %v1907 = vpop.f32.mrb[0].mxu0
        %v1908 = vadd.f32 0.0, %v1907
        %v1909 = vpop.f32.mrb[0].mxu0
        %1910 = vmatprep.mubr.bf16.mxu0 0
        %1911 = vmatmul.mubr.bf16.gmra.mrb[0].mxu0 %v1796
        %v1912 = vpop.f32.mrb[0].mxu0
        %v1913 = vadd.f32 0.0, %v1912
        %v1914 = vpop.f32.mrb[0].mxu0
        %v1915 = vpop.f32.mrb[0].mxu0
        %v1916 = vadd.f32 0.0, %v1915
        %v1917 = vpop.f32.mrb[0].mxu0
        %1918 = vmatprep.mubr.bf16.mxu0 0
        %1919 = vmatmul.mubr.bf16.gmra.mrb[0].mxu0 %v1799
        %v1920 = vpop.f32.mrb[0].mxu0
        %v1921 = vadd.f32 0.0, %v1920
        %v1922 = vpop.f32.mrb[0].mxu0
        %v1923 = vpop.f32.mrb[0].mxu0
        %v1924 = vadd.f32 0.0, %v1923
        %v1925 = vpop.f32.mrb[0].mxu0
        %1926 = vmatprep.mubr.bf16.mxu0 0
        %1927 = vmatmul.mubr.bf16.gmra.mrb[0].mxu0 %v1802
        %v1928 = vpop.f32.mrb[0].mxu0
        %v1929 = vadd.f32 0.0, %v1928
        %v1930 = vpop.f32.mrb[0].mxu0
        %v1931 = vpop.f32.mrb[0].mxu0
        %v1932 = vadd.f32 0.0, %v1931
        %v1933 = vpop.f32.mrb[0].mxu0
        %1934 = vmatprep.mubr.bf16.mxu0 0
        %1935 = vmatmul.mubr.bf16.gmra.mrb[0].mxu0 %v1805
        %v1936 = vpop.f32.mrb[0].mxu0
        %v1937 = vadd.f32 0.0, %v1936
        %v1938 = vpop.f32.mrb[0].mxu0
        %v1939 = vpop.f32.mrb[0].mxu0
        %v1940 = vadd.f32 0.0, %v1939
        %v1941 = vpop.f32.mrb[0].mxu0
        %1942 = vmatprep.mubr.bf16.mxu0 0
        %1943 = vmatmul.mubr.bf16.gmra.mrb[0].mxu0 %v1808
        %v1944 = vpop.f32.mrb[0].mxu0
        %v1945 = vadd.f32 0.0, %v1944
        %v1946 = vpop.f32.mrb[0].mxu0
        %v1947 = vpop.f32.mrb[0].mxu0
        %v1948 = vadd.f32 0.0, %v1947
        %v1949 = vpop.f32.mrb[0].mxu0
        %1950 = vmatprep.mubr.bf16.mxu0 0
        %1951 = vmatmul.mubr.bf16.gmra.mrb[0].mxu0 %v1811
        %v1952 = vpop.f32.mrb[0].mxu0
        %v1953 = vadd.f32 0.0, %v1952
        %v1954 = vpop.f32.mrb[0].mxu0
        %v1955 = vpop.f32.mrb[0].mxu0
        %v1956 = vadd.f32 0.0, %v1955
        %v1957 = vpop.f32.mrb[0].mxu0
        %1958 = vmatprep.mubr.bf16.mxu0 0
        %1959 = vmatmul.mubr.bf16.gmra.mrb[0].mxu0 %v1814
        %v1960 = vpop.f32.mrb[0].mxu0
        %v1961 = vadd.f32 0.0, %v1960
        %v1962 = vpop.f32.mrb[0].mxu0
        %v1963 = vpop.f32.mrb[0].mxu0
        %v1964 = vadd.f32 0.0, %v1963
        %v1965 = vpop.f32.mrb[0].mxu0
        %1966 = vmatprep.mubr.bf16.mxu0 0
        %1967 = vmatmul.mubr.bf16.gmra.mrb[0].mxu0 %v1817
        %v1968 = vpop.f32.mrb[0].mxu0
        %v1969 = vadd.f32 0.0, %v1968
        %v1970 = vpop.f32.mrb[0].mxu0
        %v1971 = vpop.f32.mrb[0].mxu0
        %v1972 = vadd.f32 0.0, %v1971
        %v1973 = vpop.f32.mrb[0].mxu0
        %1974 = vmatprep.mubr.bf16.mxu0 0
        %1975 = vmatmul.mubr.bf16.gmra.mrb[0].mxu0 %v1820
        %v1976 = vpop.f32.mrb[0].mxu0
        %v1977 = vadd.f32 0.0, %v1976
        %v1978 = vpop.f32.mrb[0].mxu0
        %v1979 = vpop.f32.mrb[0].mxu0
        %v1980 = vadd.f32 0.0, %v1979
        %v1981 = vpop.f32.mrb[0].mxu0
        %1982 = vdwg.mxu0
        %v1983 = vadd.f32 %v1617, %v1857
        %v1984 = vadd.f32 %v1618, %v1860
        %v1985 = vadd.f32 %v1619, %v1865
        %v1986 = vadd.f32 %v1620, %v1868
        %v1987 = vadd.f32 %v1621, %v1873
        %v1988 = vadd.f32 %v1622, %v1876
        %v1989 = vadd.f32 %v1623, %v1881
        %v1990 = vadd.f32 %v1624, %v1884
        %v1991 = vadd.f32 %v1625, %v1889
        %v1992 = vadd.f32 %v1626, %v1892
        %v1993 = vadd.f32 %v1627, %v1897
        %v1994 = vadd.f32 %v1628, %v1900
        %v1995 = vadd.f32 %v1629, %v1905
        %v1996 = vadd.f32 %v1630, %v1908
        %v1997 = vadd.f32 %v1631, %v1913
        %v1998 = vadd.f32 %v1632, %v1916
        %v1999 = vadd.f32 %v1633, %v1921
        %v2000 = vadd.f32 %v1634, %v1924
        %v2001 = vadd.f32 %v1635, %v1929
        %v2002 = vadd.f32 %v1636, %v1932
        %v2003 = vadd.f32 %v1637, %v1937
        %v2004 = vadd.f32 %v1638, %v1940
        %v2005 = vadd.f32 %v1639, %v1945
        %v2006 = vadd.f32 %v1640, %v1948
        %v2007 = vadd.f32 %v1641, %v1953
        %v2008 = vadd.f32 %v1642, %v1956
        %v2009 = vadd.f32 %v1643, %v1961
        %v2010 = vadd.f32 %v1644, %v1964
        %v2011 = vadd.f32 %v1645, %v1969
        %v2012 = vadd.f32 %v1646, %v1972
        %v2013 = vadd.f32 %v1647, %v1977
        %v2014 = vadd.f32 %v1648, %v1980
        %v2015 = vld [vmem:[%s1652] sm:$0xf]
        %v2016 = vld [vmem:[%s1652 + $0x4] sm:$0xf]
        %v2017 = vld [vmem:[%s1652 + $0x8] sm:$0x1]
        %v2018 = vld [vmem:[%s1652 + $0xc] sm:$0xf]
        %v2019 = vld [vmem:[%s1652 + $0x10] sm:$0xf]
        %v2020 = vld [vmem:[%s1652 + $0x14] sm:$0x1]
        %v2021 = vld [vmem:[%s1652 + $0x18] sm:$0xf]
        %v2022 = vld [vmem:[%s1652 + $0x1c] sm:$0xf]
        %v2023 = vld [vmem:[%s1652 + $0x20] sm:$0x1]
        %v2024 = vld [vmem:[%s1652 + $0x24] sm:$0xf]
        %v2025 = vld [vmem:[%s1652 + $0x28] sm:$0xf]
        %v2026 = vld [vmem:[%s1652 + $0x2c] sm:$0x1]
        %v2027 = vld [vmem:[%s1652 + $0x30] sm:$0xf]
        %v2028 = vld [vmem:[%s1652 + $0x34] sm:$0xf]
        %v2029 = vld [vmem:[%s1652 + $0x38] sm:$0x1]
        %v2030 = vld [vmem:[%s1652 + $0x3c] sm:$0xf]
        %v2031 = vld [vmem:[%s1652 + $0x40] sm:$0xf]
        %v2032 = vld [vmem:[%s1652 + $0x44] sm:$0x1]
        %v2033 = vld [vmem:[%s1652 + $0x48] sm:$0xf]
        %v2034 = vld [vmem:[%s1652 + $0x4c] sm:$0xf]
        %v2035 = vld [vmem:[%s1652 + $0x50] sm:$0x1]
        %v2036 = vld [vmem:[%s1652 + $0x54] sm:$0xf]
        %v2037 = vld [vmem:[%s1652 + $0x58] sm:$0xf]
        %v2038 = vld [vmem:[%s1652 + $0x5c] sm:$0x1]
        %v2039 = vld [vmem:[%s1652 + $0x60] sm:$0xf]
        %v2040 = vld [vmem:[%s1652 + $0x64] sm:$0xf]
        %v2041 = vld [vmem:[%s1652 + $0x68] sm:$0x1]
        %v2042 = vld [vmem:[%s1652 + $0x6c] sm:$0xf]
        %v2043 = vld [vmem:[%s1652 + $0x70] sm:$0xf]
        %v2044 = vld [vmem:[%s1652 + $0x74] sm:$0x1]
        %v2045 = vld [vmem:[%s1652 + $0x78] sm:$0xf]
        %v2046 = vld [vmem:[%s1652 + $0x7c] sm:$0xf]
        %v2047 = vld [vmem:[%s1652 + $0x80] sm:$0x1]
        %v2048 = vld [vmem:[%s1652 + $0x84] sm:$0xf]
        %v2049 = vld [vmem:[%s1652 + $0x88] sm:$0xf]
        %v2050 = vld [vmem:[%s1652 + $0x8c] sm:$0x1]
        %v2051 = vld [vmem:[%s1652 + $0x90] sm:$0xf]
        %v2052 = vld [vmem:[%s1652 + $0x94] sm:$0xf]
        %v2053 = vld [vmem:[%s1652 + $0x98] sm:$0x1]
        %v2054 = vld [vmem:[%s1652 + $0x9c] sm:$0xf]
        %v2055 = vld [vmem:[%s1652 + $0xa0] sm:$0xf]
        %v2056 = vld [vmem:[%s1652 + $0xa4] sm:$0x1]
        %v2057 = vld [vmem:[%s1652 + $0xa8] sm:$0xf]
        %v2058 = vld [vmem:[%s1652 + $0xac] sm:$0xf]
        %v2059 = vld [vmem:[%s1652 + $0xb0] sm:$0x1]
        %v2060 = vld [vmem:[%s1652 + $0xb4] sm:$0xf]
        %v2061 = vld [vmem:[%s1652 + $0xb8] sm:$0xf]
        %v2062 = vld [vmem:[%s1652 + $0xbc] sm:$0x1]
        %v2064 = vshrl.u32 %v2015, 16
        %v2066 = vrot.slane %v2064, 4
        %v2067 = vshll.u32 %v2015, 16
        %v2069 = vrot.slane %v2067, 5
        %v2070 = vor.u32 %v2066, %v2069
        %v2071 = vrot.slane %v2070, 4
        %v2073 = vshll.u32 %v2016, 16
        %v2075 = vrot.slane %v2073, 5
        %v2076 = vsel %vm241, %v2071, %v2075
        %v2077 = vshrl.u32 %v2016, 16
        %v2079 = vrot.slane %v2077, 4
        %v2080 = vor.u32 %v2079, %v2075
        %v2081 = vrot.slane %v2080, 4
        %v2083 = vshll.u32 %v2017, 16
        %v2085 = vrot.slane %v2083, 5
        %v2086 = vsel %vm241, %v2081, %v2085
        %v2088 = vshrl.u32 %v2018, 16
        %v2090 = vrot.slane %v2088, 4
        %v2091 = vshll.u32 %v2018, 16
        %v2093 = vrot.slane %v2091, 5
        %v2094 = vor.u32 %v2090, %v2093
        %v2095 = vrot.slane %v2094, 4
        %v2097 = vshll.u32 %v2019, 16
        %v2099 = vrot.slane %v2097, 5
        %v2100 = vsel %vm241, %v2095, %v2099
        %v2101 = vshrl.u32 %v2019, 16
        %v2103 = vrot.slane %v2101, 4
        %v2104 = vor.u32 %v2103, %v2099
        %v2105 = vrot.slane %v2104, 4
        %v2107 = vshll.u32 %v2020, 16
        %v2109 = vrot.slane %v2107, 5
        %v2110 = vsel %vm241, %v2105, %v2109
        %v2112 = vshrl.u32 %v2021, 16
        %v2114 = vrot.slane %v2112, 4
        %v2115 = vshll.u32 %v2021, 16
        %v2117 = vrot.slane %v2115, 5
        %v2118 = vor.u32 %v2114, %v2117
        %v2119 = vrot.slane %v2118, 4
        %v2121 = vshll.u32 %v2022, 16
        %v2123 = vrot.slane %v2121, 5
        %v2124 = vsel %vm241, %v2119, %v2123
        %v2125 = vshrl.u32 %v2022, 16
        %v2127 = vrot.slane %v2125, 4
        %v2128 = vor.u32 %v2127, %v2123
        %v2129 = vrot.slane %v2128, 4
        %v2131 = vshll.u32 %v2023, 16
        %v2133 = vrot.slane %v2131, 5
        %v2134 = vsel %vm241, %v2129, %v2133
        %v2136 = vshrl.u32 %v2024, 16
        %v2138 = vrot.slane %v2136, 4
        %v2139 = vshll.u32 %v2024, 16
        %v2141 = vrot.slane %v2139, 5
        %v2142 = vor.u32 %v2138, %v2141
        %v2143 = vrot.slane %v2142, 4
        %v2145 = vshll.u32 %v2025, 16
        %v2147 = vrot.slane %v2145, 5
        %v2148 = vsel %vm241, %v2143, %v2147
        %v2149 = vshrl.u32 %v2025, 16
        %v2151 = vrot.slane %v2149, 4
        %v2152 = vor.u32 %v2151, %v2147
        %v2153 = vrot.slane %v2152, 4
        %v2155 = vshll.u32 %v2026, 16
        %v2157 = vrot.slane %v2155, 5
        %v2158 = vsel %vm241, %v2153, %v2157
        %v2160 = vshrl.u32 %v2027, 16
        %v2162 = vrot.slane %v2160, 4
        %v2163 = vshll.u32 %v2027, 16
        %v2165 = vrot.slane %v2163, 5
        %v2166 = vor.u32 %v2162, %v2165
        %v2167 = vrot.slane %v2166, 4
        %v2169 = vshll.u32 %v2028, 16
        %v2171 = vrot.slane %v2169, 5
        %v2172 = vsel %vm241, %v2167, %v2171
        %v2173 = vshrl.u32 %v2028, 16
        %v2175 = vrot.slane %v2173, 4
        %v2176 = vor.u32 %v2175, %v2171
        %v2177 = vrot.slane %v2176, 4
        %v2179 = vshll.u32 %v2029, 16
        %v2181 = vrot.slane %v2179, 5
        %v2182 = vsel %vm241, %v2177, %v2181
        %v2184 = vshrl.u32 %v2030, 16
        %v2186 = vrot.slane %v2184, 4
        %v2187 = vshll.u32 %v2030, 16
        %v2189 = vrot.slane %v2187, 5
        %v2190 = vor.u32 %v2186, %v2189
        %v2191 = vrot.slane %v2190, 4
        %v2193 = vshll.u32 %v2031, 16
        %v2195 = vrot.slane %v2193, 5
        %v2196 = vsel %vm241, %v2191, %v2195
        %v2197 = vshrl.u32 %v2031, 16
        %v2199 = vrot.slane %v2197, 4
        %v2200 = vor.u32 %v2199, %v2195
        %v2201 = vrot.slane %v2200, 4
        %v2203 = vshll.u32 %v2032, 16
        %v2205 = vrot.slane %v2203, 5
        %v2206 = vsel %vm241, %v2201, %v2205
        %v2208 = vshrl.u32 %v2033, 16
        %v2210 = vrot.slane %v2208, 4
        %v2211 = vshll.u32 %v2033, 16
        %v2213 = vrot.slane %v2211, 5
        %v2214 = vor.u32 %v2210, %v2213
        %v2215 = vrot.slane %v2214, 4
        %v2217 = vshll.u32 %v2034, 16
        %v2219 = vrot.slane %v2217, 5
        %v2220 = vsel %vm241, %v2215, %v2219
        %v2221 = vshrl.u32 %v2034, 16
        %v2223 = vrot.slane %v2221, 4
        %v2224 = vor.u32 %v2223, %v2219
        %v2225 = vrot.slane %v2224, 4
        %v2227 = vshll.u32 %v2035, 16
        %v2229 = vrot.slane %v2227, 5
        %v2230 = vsel %vm241, %v2225, %v2229
        %v2232 = vshrl.u32 %v2036, 16
        %v2234 = vrot.slane %v2232, 4
        %v2235 = vshll.u32 %v2036, 16
        %v2237 = vrot.slane %v2235, 5
        %v2238 = vor.u32 %v2234, %v2237
        %v2239 = vrot.slane %v2238, 4
        %v2241 = vshll.u32 %v2037, 16
        %v2243 = vrot.slane %v2241, 5
        %v2244 = vsel %vm241, %v2239, %v2243
        %v2245 = vshrl.u32 %v2037, 16
        %v2247 = vrot.slane %v2245, 4
        %v2248 = vor.u32 %v2247, %v2243
        %v2249 = vrot.slane %v2248, 4
        %v2251 = vshll.u32 %v2038, 16
        %v2253 = vrot.slane %v2251, 5
        %v2254 = vsel %vm241, %v2249, %v2253
        %v2256 = vshrl.u32 %v2039, 16
        %v2258 = vrot.slane %v2256, 4
        %v2259 = vshll.u32 %v2039, 16
        %v2261 = vrot.slane %v2259, 5
        %v2262 = vor.u32 %v2258, %v2261
        %v2263 = vrot.slane %v2262, 4
        %v2265 = vshll.u32 %v2040, 16
        %v2267 = vrot.slane %v2265, 5
        %v2268 = vsel %vm241, %v2263, %v2267
        %v2269 = vshrl.u32 %v2040, 16
        %v2271 = vrot.slane %v2269, 4
        %v2272 = vor.u32 %v2271, %v2267
        %v2273 = vrot.slane %v2272, 4
        %v2275 = vshll.u32 %v2041, 16
        %v2277 = vrot.slane %v2275, 5
        %v2278 = vsel %vm241, %v2273, %v2277
        %v2280 = vshrl.u32 %v2042, 16
        %v2282 = vrot.slane %v2280, 4
        %v2283 = vshll.u32 %v2042, 16
        %v2285 = vrot.slane %v2283, 5
        %v2286 = vor.u32 %v2282, %v2285
        %v2287 = vrot.slane %v2286, 4
        %v2289 = vshll.u32 %v2043, 16
        %v2291 = vrot.slane %v2289, 5
        %v2292 = vsel %vm241, %v2287, %v2291
        %v2293 = vshrl.u32 %v2043, 16
        %v2295 = vrot.slane %v2293, 4
        %v2296 = vor.u32 %v2295, %v2291
        %v2297 = vrot.slane %v2296, 4
        %v2299 = vshll.u32 %v2044, 16
        %v2301 = vrot.slane %v2299, 5
        %v2302 = vsel %vm241, %v2297, %v2301
        %v2304 = vshrl.u32 %v2045, 16
        %v2306 = vrot.slane %v2304, 4
        %v2307 = vshll.u32 %v2045, 16
        %v2309 = vrot.slane %v2307, 5
        %v2310 = vor.u32 %v2306, %v2309
        %v2311 = vrot.slane %v2310, 4
        %v2313 = vshll.u32 %v2046, 16
        %v2315 = vrot.slane %v2313, 5
        %v2316 = vsel %vm241, %v2311, %v2315
        %v2317 = vshrl.u32 %v2046, 16
        %v2319 = vrot.slane %v2317, 4
        %v2320 = vor.u32 %v2319, %v2315
        %v2321 = vrot.slane %v2320, 4
        %v2323 = vshll.u32 %v2047, 16
        %v2325 = vrot.slane %v2323, 5
        %v2326 = vsel %vm241, %v2321, %v2325
        %v2328 = vshrl.u32 %v2048, 16
        %v2330 = vrot.slane %v2328, 4
        %v2331 = vshll.u32 %v2048, 16
        %v2333 = vrot.slane %v2331, 5
        %v2334 = vor.u32 %v2330, %v2333
        %v2335 = vrot.slane %v2334, 4
        %v2337 = vshll.u32 %v2049, 16
        %v2339 = vrot.slane %v2337, 5
        %v2340 = vsel %vm241, %v2335, %v2339
        %v2341 = vshrl.u32 %v2049, 16
        %v2343 = vrot.slane %v2341, 4
        %v2344 = vor.u32 %v2343, %v2339
        %v2345 = vrot.slane %v2344, 4
        %v2347 = vshll.u32 %v2050, 16
        %v2349 = vrot.slane %v2347, 5
        %v2350 = vsel %vm241, %v2345, %v2349
        %v2352 = vshrl.u32 %v2051, 16
        %v2354 = vrot.slane %v2352, 4
        %v2355 = vshll.u32 %v2051, 16
        %v2357 = vrot.slane %v2355, 5
        %v2358 = vor.u32 %v2354, %v2357
        %v2359 = vrot.slane %v2358, 4
        %v2361 = vshll.u32 %v2052, 16
        %v2363 = vrot.slane %v2361, 5
        %v2364 = vsel %vm241, %v2359, %v2363
        %v2365 = vshrl.u32 %v2052, 16
        %v2367 = vrot.slane %v2365, 4
        %v2368 = vor.u32 %v2367, %v2363
        %v2369 = vrot.slane %v2368, 4
        %v2371 = vshll.u32 %v2053, 16
        %v2373 = vrot.slane %v2371, 5
        %v2374 = vsel %vm241, %v2369, %v2373
        %v2376 = vshrl.u32 %v2054, 16
        %v2378 = vrot.slane %v2376, 4
        %v2379 = vshll.u32 %v2054, 16
        %v2381 = vrot.slane %v2379, 5
        %v2382 = vor.u32 %v2378, %v2381
        %v2383 = vrot.slane %v2382, 4
        %v2385 = vshll.u32 %v2055, 16
        %v2387 = vrot.slane %v2385, 5
        %v2388 = vsel %vm241, %v2383, %v2387
        %v2389 = vshrl.u32 %v2055, 16
        %v2391 = vrot.slane %v2389, 4
        %v2392 = vor.u32 %v2391, %v2387
        %v2393 = vrot.slane %v2392, 4
        %v2395 = vshll.u32 %v2056, 16
        %v2397 = vrot.slane %v2395, 5
        %v2398 = vsel %vm241, %v2393, %v2397
        %v2400 = vshrl.u32 %v2057, 16
        %v2402 = vrot.slane %v2400, 4
        %v2403 = vshll.u32 %v2057, 16
        %v2405 = vrot.slane %v2403, 5
        %v2406 = vor.u32 %v2402, %v2405
        %v2407 = vrot.slane %v2406, 4
        %v2409 = vshll.u32 %v2058, 16
        %v2411 = vrot.slane %v2409, 5
        %v2412 = vsel %vm241, %v2407, %v2411
        %v2413 = vshrl.u32 %v2058, 16
        %v2415 = vrot.slane %v2413, 4
        %v2416 = vor.u32 %v2415, %v2411
        %v2417 = vrot.slane %v2416, 4
        %v2419 = vshll.u32 %v2059, 16
        %v2421 = vrot.slane %v2419, 5
        %v2422 = vsel %vm241, %v2417, %v2421
        %v2424 = vshrl.u32 %v2060, 16
        %v2426 = vrot.slane %v2424, 4
        %v2427 = vshll.u32 %v2060, 16
        %v2429 = vrot.slane %v2427, 5
        %v2430 = vor.u32 %v2426, %v2429
        %v2431 = vrot.slane %v2430, 4
        %v2433 = vshll.u32 %v2061, 16
        %v2435 = vrot.slane %v2433, 5
        %v2436 = vsel %vm241, %v2431, %v2435
        %v2437 = vshrl.u32 %v2061, 16
        %v2439 = vrot.slane %v2437, 4
        %v2440 = vor.u32 %v2439, %v2435
        %v2441 = vrot.slane %v2440, 4
        %v2443 = vshll.u32 %v2062, 16
        %v2445 = vrot.slane %v2443, 5
        %v2446 = vsel %vm241, %v2441, %v2445
        %s2447 = scalar_lea.vmem %s1, 32
        %v2448 = vld [vmem:[%s2447] sm:$0xf]
        %v2449 = vld [vmem:[%s2447 + $0x4] sm:$0xf]
        %v2450 = vunpack.c.l.b16 %v2076
        %v2451 = vunpack.c.l.b16 %v2086
        %v2452 = vunpack.c.l.b16 %v2100
        %v2453 = vunpack.c.l.b16 %v2110
        %v2454 = vunpack.c.l.b16 %v2124
        %v2455 = vunpack.c.l.b16 %v2134
        %v2456 = vunpack.c.l.b16 %v2148
        %v2457 = vunpack.c.l.b16 %v2158
        %v2458 = vunpack.c.l.b16 %v2172
        %v2459 = vunpack.c.l.b16 %v2182
        %v2460 = vunpack.c.l.b16 %v2196
        %v2461 = vunpack.c.l.b16 %v2206
        %v2462 = vunpack.c.l.b16 %v2220
        %v2463 = vunpack.c.l.b16 %v2230
        %v2464 = vunpack.c.l.b16 %v2244
        %v2465 = vunpack.c.l.b16 %v2254
        %v2466 = vunpack.c.l.b16 %v2268
        %v2467 = vunpack.c.l.b16 %v2278
        %v2468 = vunpack.c.l.b16 %v2292
        %v2469 = vunpack.c.l.b16 %v2302
        %v2470 = vunpack.c.l.b16 %v2316
        %v2471 = vunpack.c.l.b16 %v2326
        %v2472 = vunpack.c.l.b16 %v2340
        %v2473 = vunpack.c.l.b16 %v2350
        %v2474 = vunpack.c.l.b16 %v2364
        %v2475 = vunpack.c.l.b16 %v2374
        %v2476 = vunpack.c.l.b16 %v2388
        %v2477 = vunpack.c.l.b16 %v2398
        %v2478 = vunpack.c.l.b16 %v2412
        %v2479 = vunpack.c.l.b16 %v2422
        %v2480 = vunpack.c.l.b16 %v2436
        %v2481 = vunpack.c.l.b16 %v2446
        %v2482 = vpack.c.b16 %v2451, %v2450
        %v2483 = vpack.c.b16 %v2453, %v2452
        %v2484 = vpack.c.b16 %v2455, %v2454
        %v2485 = vpack.c.b16 %v2457, %v2456
        %v2486 = vpack.c.b16 %v2459, %v2458
        %v2487 = vpack.c.b16 %v2461, %v2460
        %v2488 = vpack.c.b16 %v2463, %v2462
        %v2489 = vpack.c.b16 %v2465, %v2464
        %v2490 = vpack.c.b16 %v2467, %v2466
        %v2491 = vpack.c.b16 %v2469, %v2468
        %v2492 = vpack.c.b16 %v2471, %v2470
        %v2493 = vpack.c.b16 %v2473, %v2472
        %v2494 = vpack.c.b16 %v2475, %v2474
        %v2495 = vpack.c.b16 %v2477, %v2476
        %v2496 = vpack.c.b16 %v2479, %v2478
        %v2497 = vpack.c.b16 %v2481, %v2480
        %v2500 = vunpack.c.l.b16 %v2448
        %v2501 = vunpack.c.l.b16 %v2449
        %v2502 = vpack.c.b16 %v2501, %v2500
        %v2505 = vsel %vm683, %v2482, 0
        %v2508 = vsel %vm683, %v2483, 0
        %v2511 = vsel %vm683, %v2484, 0
        %v2514 = vsel %vm683, %v2485, 0
        %v2517 = vsel %vm683, %v2486, 0
        %v2520 = vsel %vm683, %v2487, 0
        %v2523 = vsel %vm683, %v2488, 0
        %v2526 = vsel %vm683, %v2489, 0
        %v2529 = vsel %vm683, %v2490, 0
        %v2532 = vsel %vm683, %v2491, 0
        %v2535 = vsel %vm683, %v2492, 0
        %v2538 = vsel %vm683, %v2493, 0
        %v2541 = vsel %vm683, %v2494, 0
        %v2544 = vsel %vm683, %v2495, 0
        %v2547 = vsel %vm683, %v2496, 0
        %v2550 = vsel %vm683, %v2497, 0
        %2552 = vmatprep.subr.bf16.mxu0 0
        %2553 = vmatpush1.bf16.msra.mxu0 %v2502
        %2554 = vmatprep.subr.bf16.mxu0 0
        %2555 = vmatpush1.bf16.msra.mxu0 0
        %2556 = vmatprep.subr.bf16.mxu0 0
        %2557 = vmatpush1.bf16.msra.mxu0 0
        %2558 = vmatprep.subr.bf16.mxu0 0
        %2559 = vmatpush1.bf16.msra.mxu0 0
        %2560 = vmatprep.subr.bf16.mxu0 0
        %2561 = vmatpush1.bf16.msra.mxu0 0
        %2562 = vmatprep.subr.bf16.mxu0 0
        %2563 = vmatpush1.bf16.msra.mxu0 0
        %2564 = vmatprep.subr.bf16.mxu0 0
        %2565 = vmatpush1.bf16.msra.mxu0 0
        %2566 = vmatprep.subr.bf16.mxu0 0
        %2567 = vmatpush1.bf16.msra.mxu0 0
        %2568 = vmatprep.subr.bf16.mxu0 0
        %2569 = vmatpush1.bf16.msra.mxu0 0
        %2570 = vmatprep.subr.bf16.mxu0 0
        %2571 = vmatpush1.bf16.msra.mxu0 0
        %2572 = vmatprep.subr.bf16.mxu0 0
        %2573 = vmatpush1.bf16.msra.mxu0 0
        %2574 = vmatprep.subr.bf16.mxu0 0
        %2575 = vmatpush1.bf16.msra.mxu0 0
        %2576 = vmatprep.subr.bf16.mxu0 0
        %2577 = vmatpush1.bf16.msra.mxu0 0
        %2578 = vmatprep.subr.bf16.mxu0 0
        %2579 = vmatpush1.bf16.msra.mxu0 0
        %2580 = vmatprep.subr.bf16.mxu0 0
        %2581 = vmatpush1.bf16.msra.mxu0 0
        %2582 = vmatprep.subr.bf16.mxu0 0
        %2583 = vmatpush1.bf16.msra.mxu0 0
        %2584 = vmatprep.mubr.bf16.mxu0 0
        %2585 = vmatmul.mubr.bf16.gmra.mrb[0].mxu0 %v2505
        %v2586 = vpop.f32.mrb[0].mxu0
        %v2587 = vadd.f32 0.0, %v2586
        %v2588 = vpop.f32.mrb[0].mxu0
        %v2589 = vpop.f32.mrb[0].mxu0
        %v2590 = vadd.f32 0.0, %v2589
        %v2591 = vpop.f32.mrb[0].mxu0
        %2592 = vmatprep.mubr.bf16.mxu0 0
        %2593 = vmatmul.mubr.bf16.gmra.mrb[0].mxu0 %v2508
        %v2594 = vpop.f32.mrb[0].mxu0
        %v2595 = vadd.f32 0.0, %v2594
        %v2596 = vpop.f32.mrb[0].mxu0
        %v2597 = vpop.f32.mrb[0].mxu0
        %v2598 = vadd.f32 0.0, %v2597
        %v2599 = vpop.f32.mrb[0].mxu0
        %2600 = vmatprep.mubr.bf16.mxu0 0
        %2601 = vmatmul.mubr.bf16.gmra.mrb[0].mxu0 %v2511
        %v2602 = vpop.f32.mrb[0].mxu0
        %v2603 = vadd.f32 0.0, %v2602
        %v2604 = vpop.f32.mrb[0].mxu0
        %v2605 = vpop.f32.mrb[0].mxu0
        %v2606 = vadd.f32 0.0, %v2605
        %v2607 = vpop.f32.mrb[0].mxu0
        %2608 = vmatprep.mubr.bf16.mxu0 0
        %2609 = vmatmul.mubr.bf16.gmra.mrb[0].mxu0 %v2514
        %v2610 = vpop.f32.mrb[0].mxu0
        %v2611 = vadd.f32 0.0, %v2610
        %v2612 = vpop.f32.mrb[0].mxu0
        %v2613 = vpop.f32.mrb[0].mxu0
        %v2614 = vadd.f32 0.0, %v2613
        %v2615 = vpop.f32.mrb[0].mxu0
        %2616 = vmatprep.mubr.bf16.mxu0 0
        %2617 = vmatmul.mubr.bf16.gmra.mrb[0].mxu0 %v2517
        %v2618 = vpop.f32.mrb[0].mxu0
        %v2619 = vadd.f32 0.0, %v2618
        %v2620 = vpop.f32.mrb[0].mxu0
        %v2621 = vpop.f32.mrb[0].mxu0
        %v2622 = vadd.f32 0.0, %v2621
        %v2623 = vpop.f32.mrb[0].mxu0
        %2624 = vmatprep.mubr.bf16.mxu0 0
        %2625 = vmatmul.mubr.bf16.gmra.mrb[0].mxu0 %v2520
        %v2626 = vpop.f32.mrb[0].mxu0
        %v2627 = vadd.f32 0.0, %v2626
        %v2628 = vpop.f32.mrb[0].mxu0
        %v2629 = vpop.f32.mrb[0].mxu0
        %v2630 = vadd.f32 0.0, %v2629
        %v2631 = vpop.f32.mrb[0].mxu0
        %2632 = vmatprep.mubr.bf16.mxu0 0
        %2633 = vmatmul.mubr.bf16.gmra.mrb[0].mxu0 %v2523
        %v2634 = vpop.f32.mrb[0].mxu0
        %v2635 = vadd.f32 0.0, %v2634
        %v2636 = vpop.f32.mrb[0].mxu0
        %v2637 = vpop.f32.mrb[0].mxu0
        %v2638 = vadd.f32 0.0, %v2637
        %v2639 = vpop.f32.mrb[0].mxu0
        %2640 = vmatprep.mubr.bf16.mxu0 0
        %2641 = vmatmul.mubr.bf16.gmra.mrb[0].mxu0 %v2526
        %v2642 = vpop.f32.mrb[0].mxu0
        %v2643 = vadd.f32 0.0, %v2642
        %v2644 = vpop.f32.mrb[0].mxu0
        %v2645 = vpop.f32.mrb[0].mxu0
        %v2646 = vadd.f32 0.0, %v2645
        %v2647 = vpop.f32.mrb[0].mxu0
        %2648 = vmatprep.mubr.bf16.mxu0 0
        %2649 = vmatmul.mubr.bf16.gmra.mrb[0].mxu0 %v2529
        %v2650 = vpop.f32.mrb[0].mxu0
        %v2651 = vadd.f32 0.0, %v2650
        %v2652 = vpop.f32.mrb[0].mxu0
        %v2653 = vpop.f32.mrb[0].mxu0
        %v2654 = vadd.f32 0.0, %v2653
        %v2655 = vpop.f32.mrb[0].mxu0
        %2656 = vmatprep.mubr.bf16.mxu0 0
        %2657 = vmatmul.mubr.bf16.gmra.mrb[0].mxu0 %v2532
        %v2658 = vpop.f32.mrb[0].mxu0
        %v2659 = vadd.f32 0.0, %v2658
        %v2660 = vpop.f32.mrb[0].mxu0
        %v2661 = vpop.f32.mrb[0].mxu0
        %v2662 = vadd.f32 0.0, %v2661
        %v2663 = vpop.f32.mrb[0].mxu0
        %2664 = vmatprep.mubr.bf16.mxu0 0
        %2665 = vmatmul.mubr.bf16.gmra.mrb[0].mxu0 %v2535
        %v2666 = vpop.f32.mrb[0].mxu0
        %v2667 = vadd.f32 0.0, %v2666
        %v2668 = vpop.f32.mrb[0].mxu0
        %v2669 = vpop.f32.mrb[0].mxu0
        %v2670 = vadd.f32 0.0, %v2669
        %v2671 = vpop.f32.mrb[0].mxu0
        %2672 = vmatprep.mubr.bf16.mxu0 0
        %2673 = vmatmul.mubr.bf16.gmra.mrb[0].mxu0 %v2538
        %v2674 = vpop.f32.mrb[0].mxu0
        %v2675 = vadd.f32 0.0, %v2674
        %v2676 = vpop.f32.mrb[0].mxu0
        %v2677 = vpop.f32.mrb[0].mxu0
        %v2678 = vadd.f32 0.0, %v2677
        %v2679 = vpop.f32.mrb[0].mxu0
        %2680 = vmatprep.mubr.bf16.mxu0 0
        %2681 = vmatmul.mubr.bf16.gmra.mrb[0].mxu0 %v2541
        %v2682 = vpop.f32.mrb[0].mxu0
        %v2683 = vadd.f32 0.0, %v2682
        %v2684 = vpop.f32.mrb[0].mxu0
        %v2685 = vpop.f32.mrb[0].mxu0
        %v2686 = vadd.f32 0.0, %v2685
        %v2687 = vpop.f32.mrb[0].mxu0
        %2688 = vmatprep.mubr.bf16.mxu0 0
        %2689 = vmatmul.mubr.bf16.gmra.mrb[0].mxu0 %v2544
        %v2690 = vpop.f32.mrb[0].mxu0
        %v2691 = vadd.f32 0.0, %v2690
        %v2692 = vpop.f32.mrb[0].mxu0
        %v2693 = vpop.f32.mrb[0].mxu0
        %v2694 = vadd.f32 0.0, %v2693
        %v2695 = vpop.f32.mrb[0].mxu0
        %2696 = vmatprep.mubr.bf16.mxu0 0
        %2697 = vmatmul.mubr.bf16.gmra.mrb[0].mxu0 %v2547
        %v2698 = vpop.f32.mrb[0].mxu0
        %v2699 = vadd.f32 0.0, %v2698
        %v2700 = vpop.f32.mrb[0].mxu0
        %v2701 = vpop.f32.mrb[0].mxu0
        %v2702 = vadd.f32 0.0, %v2701
        %v2703 = vpop.f32.mrb[0].mxu0
        %2704 = vmatprep.mubr.bf16.mxu0 0
        %2705 = vmatmul.mubr.bf16.gmra.mrb[0].mxu0 %v2550
        %v2706 = vpop.f32.mrb[0].mxu0
        %v2707 = vadd.f32 0.0, %v2706
        %v2708 = vpop.f32.mrb[0].mxu0
        %v2709 = vpop.f32.mrb[0].mxu0
        %v2710 = vadd.f32 0.0, %v2709
        %v2711 = vpop.f32.mrb[0].mxu0
        %2712 = vdwg.mxu0
        %v2713 = vadd.f32 %v1983, %v2587
        %v2714 = vadd.f32 %v1984, %v2590
        %v2715 = vadd.f32 %v1985, %v2595
        %v2716 = vadd.f32 %v1986, %v2598
        %v2717 = vadd.f32 %v1987, %v2603
        %v2718 = vadd.f32 %v1988, %v2606
        %v2719 = vadd.f32 %v1989, %v2611
        %v2720 = vadd.f32 %v1990, %v2614
        %v2721 = vadd.f32 %v1991, %v2619
        %v2722 = vadd.f32 %v1992, %v2622
        %v2723 = vadd.f32 %v1993, %v2627
        %v2724 = vadd.f32 %v1994, %v2630
        %v2725 = vadd.f32 %v1995, %v2635
        %v2726 = vadd.f32 %v1996, %v2638
        %v2727 = vadd.f32 %v1997, %v2643
        %v2728 = vadd.f32 %v1998, %v2646
        %v2729 = vadd.f32 %v1999, %v2651
        %v2730 = vadd.f32 %v2000, %v2654
        %v2731 = vadd.f32 %v2001, %v2659
        %v2732 = vadd.f32 %v2002, %v2662
        %v2733 = vadd.f32 %v2003, %v2667
        %v2734 = vadd.f32 %v2004, %v2670
        %v2735 = vadd.f32 %v2005, %v2675
        %v2736 = vadd.f32 %v2006, %v2678
        %v2737 = vadd.f32 %v2007, %v2683
        %v2738 = vadd.f32 %v2008, %v2686
        %v2739 = vadd.f32 %v2009, %v2691
        %v2740 = vadd.f32 %v2010, %v2694
        %v2741 = vadd.f32 %v2011, %v2699
        %v2742 = vadd.f32 %v2012, %v2702
        %v2743 = vadd.f32 %v2013, %v2707
        %v2744 = vadd.f32 %v2014, %v2710
        %v2745 = vld [vmem:[%s1652] sm:$0xe]
        %v2746 = vld [vmem:[%s1652 + $0xc] sm:$0xe]
        %v2747 = vld [vmem:[%s1652 + $0x18] sm:$0xe]
        %v2748 = vld [vmem:[%s1652 + $0x24] sm:$0xe]
        %v2749 = vld [vmem:[%s1652 + $0x30] sm:$0xe]
        %v2750 = vld [vmem:[%s1652 + $0x3c] sm:$0xe]
        %v2751 = vld [vmem:[%s1652 + $0x48] sm:$0xe]
        %v2752 = vld [vmem:[%s1652 + $0x54] sm:$0xe]
        %v2753 = vld [vmem:[%s1652 + $0x60] sm:$0xe]
        %v2754 = vld [vmem:[%s1652 + $0x6c] sm:$0xe]
        %v2755 = vld [vmem:[%s1652 + $0x78] sm:$0xe]
        %v2756 = vld [vmem:[%s1652 + $0x84] sm:$0xe]
        %v2757 = vld [vmem:[%s1652 + $0x90] sm:$0xe]
        %v2758 = vld [vmem:[%s1652 + $0x9c] sm:$0xe]
        %v2759 = vld [vmem:[%s1652 + $0xa8] sm:$0xe]
        %v2760 = vld [vmem:[%s1652 + $0xb4] sm:$0xe]
        %v2809 = vrot.slane %v2745, 5
        %v2810 = vrot.slane %v2809, 4
        %v2811 = vrot.slane %v2016, 5
        %v2812 = vsel %vm1238, %v2810, %v2811
        %v2813 = vrot.slane %v2811, 4
        %v2814 = vrot.slane %v2017, 5
        %v2815 = vsel %vm1238, %v2813, %v2814
        %v2816 = vrot.slane %v2746, 5
        %v2817 = vrot.slane %v2816, 4
        %v2818 = vrot.slane %v2019, 5
        %v2819 = vsel %vm1238, %v2817, %v2818
        %v2820 = vrot.slane %v2818, 4
        %v2821 = vrot.slane %v2020, 5
        %v2822 = vsel %vm1238, %v2820, %v2821
        %v2823 = vrot.slane %v2747, 5
        %v2824 = vrot.slane %v2823, 4
        %v2825 = vrot.slane %v2022, 5
        %v2826 = vsel %vm1238, %v2824, %v2825
        %v2827 = vrot.slane %v2825, 4
        %v2828 = vrot.slane %v2023, 5
        %v2829 = vsel %vm1238, %v2827, %v2828
        %v2830 = vrot.slane %v2748, 5
        %v2831 = vrot.slane %v2830, 4
        %v2832 = vrot.slane %v2025, 5
        %v2833 = vsel %vm1238, %v2831, %v2832
        %v2834 = vrot.slane %v2832, 4
        %v2835 = vrot.slane %v2026, 5
        %v2836 = vsel %vm1238, %v2834, %v2835
        %v2837 = vrot.slane %v2749, 5
        %v2838 = vrot.slane %v2837, 4
        %v2839 = vrot.slane %v2028, 5
        %v2840 = vsel %vm1238, %v2838, %v2839
        %v2841 = vrot.slane %v2839, 4
        %v2842 = vrot.slane %v2029, 5
        %v2843 = vsel %vm1238, %v2841, %v2842
        %v2844 = vrot.slane %v2750, 5
        %v2845 = vrot.slane %v2844, 4
        %v2846 = vrot.slane %v2031, 5
        %v2847 = vsel %vm1238, %v2845, %v2846
        %v2848 = vrot.slane %v2846, 4
        %v2849 = vrot.slane %v2032, 5
        %v2850 = vsel %vm1238, %v2848, %v2849
        %v2851 = vrot.slane %v2751, 5
        %v2852 = vrot.slane %v2851, 4
        %v2853 = vrot.slane %v2034, 5
        %v2854 = vsel %vm1238, %v2852, %v2853
        %v2855 = vrot.slane %v2853, 4
        %v2856 = vrot.slane %v2035, 5
        %v2857 = vsel %vm1238, %v2855, %v2856
        %v2858 = vrot.slane %v2752, 5
        %v2859 = vrot.slane %v2858, 4
        %v2860 = vrot.slane %v2037, 5
        %v2861 = vsel %vm1238, %v2859, %v2860
        %v2862 = vrot.slane %v2860, 4
        %v2863 = vrot.slane %v2038, 5
        %v2864 = vsel %vm1238, %v2862, %v2863
        %v2865 = vrot.slane %v2753, 5
        %v2866 = vrot.slane %v2865, 4
        %v2867 = vrot.slane %v2040, 5
        %v2868 = vsel %vm1238, %v2866, %v2867
        %v2869 = vrot.slane %v2867, 4
        %v2870 = vrot.slane %v2041, 5
        %v2871 = vsel %vm1238, %v2869, %v2870
        %v2872 = vrot.slane %v2754, 5
        %v2873 = vrot.slane %v2872, 4
        %v2874 = vrot.slane %v2043, 5
        %v2875 = vsel %vm1238, %v2873, %v2874
        %v2876 = vrot.slane %v2874, 4
        %v2877 = vrot.slane %v2044, 5
        %v2878 = vsel %vm1238, %v2876, %v2877
        %v2879 = vrot.slane %v2755, 5
        %v2880 = vrot.slane %v2879, 4
        %v2881 = vrot.slane %v2046, 5
        %v2882 = vsel %vm1238, %v2880, %v2881
        %v2883 = vrot.slane %v2881, 4
        %v2884 = vrot.slane %v2047, 5
        %v2885 = vsel %vm1238, %v2883, %v2884
        %v2886 = vrot.slane %v2756, 5
        %v2887 = vrot.slane %v2886, 4
        %v2888 = vrot.slane %v2049, 5
        %v2889 = vsel %vm1238, %v2887, %v2888
        %v2890 = vrot.slane %v2888, 4
        %v2891 = vrot.slane %v2050, 5
        %v2892 = vsel %vm1238, %v2890, %v2891
        %v2893 = vrot.slane %v2757, 5
        %v2894 = vrot.slane %v2893, 4
        %v2895 = vrot.slane %v2052, 5
        %v2896 = vsel %vm1238, %v2894, %v2895
        %v2897 = vrot.slane %v2895, 4
        %v2898 = vrot.slane %v2053, 5
        %v2899 = vsel %vm1238, %v2897, %v2898
        %v2900 = vrot.slane %v2758, 5
        %v2901 = vrot.slane %v2900, 4
        %v2902 = vrot.slane %v2055, 5
        %v2903 = vsel %vm1238, %v2901, %v2902
        %v2904 = vrot.slane %v2902, 4
        %v2905 = vrot.slane %v2056, 5
        %v2906 = vsel %vm1238, %v2904, %v2905
        %v2907 = vrot.slane %v2759, 5
        %v2908 = vrot.slane %v2907, 4
        %v2909 = vrot.slane %v2058, 5
        %v2910 = vsel %vm1238, %v2908, %v2909
        %v2911 = vrot.slane %v2909, 4
        %v2912 = vrot.slane %v2059, 5
        %v2913 = vsel %vm1238, %v2911, %v2912
        %v2914 = vrot.slane %v2760, 5
        %v2915 = vrot.slane %v2914, 4
        %v2916 = vrot.slane %v2061, 5
        %v2917 = vsel %vm1238, %v2915, %v2916
        %v2918 = vrot.slane %v2916, 4
        %v2919 = vrot.slane %v2062, 5
        %v2920 = vsel %vm1238, %v2918, %v2919
        %s2921 = scalar_lea.vmem %s1, 40
        %v2922 = vld [vmem:[%s2921] sm:$0xf]
        %v2923 = vld [vmem:[%s2921 + $0x4] sm:$0xf]
        %v2924 = vunpack.c.l.b16 %v2812
        %v2925 = vunpack.c.l.b16 %v2815
        %v2926 = vunpack.c.l.b16 %v2819
        %v2927 = vunpack.c.l.b16 %v2822
        %v2928 = vunpack.c.l.b16 %v2826
        %v2929 = vunpack.c.l.b16 %v2829
        %v2930 = vunpack.c.l.b16 %v2833
        %v2931 = vunpack.c.l.b16 %v2836
        %v2932 = vunpack.c.l.b16 %v2840
        %v2933 = vunpack.c.l.b16 %v2843
        %v2934 = vunpack.c.l.b16 %v2847
        %v2935 = vunpack.c.l.b16 %v2850
        %v2936 = vunpack.c.l.b16 %v2854
        %v2937 = vunpack.c.l.b16 %v2857
        %v2938 = vunpack.c.l.b16 %v2861
        %v2939 = vunpack.c.l.b16 %v2864
        %v2940 = vunpack.c.l.b16 %v2868
        %v2941 = vunpack.c.l.b16 %v2871
        %v2942 = vunpack.c.l.b16 %v2875
        %v2943 = vunpack.c.l.b16 %v2878
        %v2944 = vunpack.c.l.b16 %v2882
        %v2945 = vunpack.c.l.b16 %v2885
        %v2946 = vunpack.c.l.b16 %v2889
        %v2947 = vunpack.c.l.b16 %v2892
        %v2948 = vunpack.c.l.b16 %v2896
        %v2949 = vunpack.c.l.b16 %v2899
        %v2950 = vunpack.c.l.b16 %v2903
        %v2951 = vunpack.c.l.b16 %v2906
        %v2952 = vunpack.c.l.b16 %v2910
        %v2953 = vunpack.c.l.b16 %v2913
        %v2954 = vunpack.c.l.b16 %v2917
        %v2955 = vunpack.c.l.b16 %v2920
        %v2956 = vpack.c.b16 %v2925, %v2924
        %v2957 = vpack.c.b16 %v2927, %v2926
        %v2958 = vpack.c.b16 %v2929, %v2928
        %v2959 = vpack.c.b16 %v2931, %v2930
        %v2960 = vpack.c.b16 %v2933, %v2932
        %v2961 = vpack.c.b16 %v2935, %v2934
        %v2962 = vpack.c.b16 %v2937, %v2936
        %v2963 = vpack.c.b16 %v2939, %v2938
        %v2964 = vpack.c.b16 %v2941, %v2940
        %v2965 = vpack.c.b16 %v2943, %v2942
        %v2966 = vpack.c.b16 %v2945, %v2944
        %v2967 = vpack.c.b16 %v2947, %v2946
        %v2968 = vpack.c.b16 %v2949, %v2948
        %v2969 = vpack.c.b16 %v2951, %v2950
        %v2970 = vpack.c.b16 %v2953, %v2952
        %v2971 = vpack.c.b16 %v2955, %v2954
        %v2974 = vunpack.c.l.b16 %v2922
        %v2975 = vunpack.c.l.b16 %v2923
        %v2976 = vpack.c.b16 %v2975, %v2974
        %v2979 = vsel %vm683, %v2956, 0
        %v2982 = vsel %vm683, %v2957, 0
        %v2985 = vsel %vm683, %v2958, 0
        %v2988 = vsel %vm683, %v2959, 0
        %v2991 = vsel %vm683, %v2960, 0
        %v2994 = vsel %vm683, %v2961, 0
        %v2997 = vsel %vm683, %v2962, 0
        %v3000 = vsel %vm683, %v2963, 0
        %v3003 = vsel %vm683, %v2964, 0
        %v3006 = vsel %vm683, %v2965, 0
        %v3009 = vsel %vm683, %v2966, 0
        %v3012 = vsel %vm683, %v2967, 0
        %v3015 = vsel %vm683, %v2968, 0
        %v3018 = vsel %vm683, %v2969, 0
        %v3021 = vsel %vm683, %v2970, 0
        %v3024 = vsel %vm683, %v2971, 0
        %3026 = vmatprep.subr.bf16.mxu0 0
        %3027 = vmatpush1.bf16.msra.mxu0 %v2976
        %3028 = vmatprep.subr.bf16.mxu0 0
        %3029 = vmatpush1.bf16.msra.mxu0 0
        %3030 = vmatprep.subr.bf16.mxu0 0
        %3031 = vmatpush1.bf16.msra.mxu0 0
        %3032 = vmatprep.subr.bf16.mxu0 0
        %3033 = vmatpush1.bf16.msra.mxu0 0
        %3034 = vmatprep.subr.bf16.mxu0 0
        %3035 = vmatpush1.bf16.msra.mxu0 0
        %3036 = vmatprep.subr.bf16.mxu0 0
        %3037 = vmatpush1.bf16.msra.mxu0 0
        %3038 = vmatprep.subr.bf16.mxu0 0
        %3039 = vmatpush1.bf16.msra.mxu0 0
        %3040 = vmatprep.subr.bf16.mxu0 0
        %3041 = vmatpush1.bf16.msra.mxu0 0
        %3042 = vmatprep.subr.bf16.mxu0 0
        %3043 = vmatpush1.bf16.msra.mxu0 0
        %3044 = vmatprep.subr.bf16.mxu0 0
        %3045 = vmatpush1.bf16.msra.mxu0 0
        %3046 = vmatprep.subr.bf16.mxu0 0
        %3047 = vmatpush1.bf16.msra.mxu0 0
        %3048 = vmatprep.subr.bf16.mxu0 0
        %3049 = vmatpush1.bf16.msra.mxu0 0
        %3050 = vmatprep.subr.bf16.mxu0 0
        %3051 = vmatpush1.bf16.msra.mxu0 0
        %3052 = vmatprep.subr.bf16.mxu0 0
        %3053 = vmatpush1.bf16.msra.mxu0 0
        %3054 = vmatprep.subr.bf16.mxu0 0
        %3055 = vmatpush1.bf16.msra.mxu0 0
        %3056 = vmatprep.subr.bf16.mxu0 0
        %3057 = vmatpush1.bf16.msra.mxu0 0
        %3058 = vmatprep.mubr.bf16.mxu0 0
        %3059 = vmatmul.mubr.bf16.gmra.mrb[0].mxu0 %v2979
        %v3060 = vpop.f32.mrb[0].mxu0
        %v3061 = vadd.f32 0.0, %v3060
        %v3062 = vpop.f32.mrb[0].mxu0
        %v3063 = vpop.f32.mrb[0].mxu0
        %v3064 = vadd.f32 0.0, %v3063
        %v3065 = vpop.f32.mrb[0].mxu0
        %3066 = vmatprep.mubr.bf16.mxu0 0
        %3067 = vmatmul.mubr.bf16.gmra.mrb[0].mxu0 %v2982
        %v3068 = vpop.f32.mrb[0].mxu0
        %v3069 = vadd.f32 0.0, %v3068
        %v3070 = vpop.f32.mrb[0].mxu0
        %v3071 = vpop.f32.mrb[0].mxu0
        %v3072 = vadd.f32 0.0, %v3071
        %v3073 = vpop.f32.mrb[0].mxu0
        %3074 = vmatprep.mubr.bf16.mxu0 0
        %3075 = vmatmul.mubr.bf16.gmra.mrb[0].mxu0 %v2985
        %v3076 = vpop.f32.mrb[0].mxu0
        %v3077 = vadd.f32 0.0, %v3076
        %v3078 = vpop.f32.mrb[0].mxu0
        %v3079 = vpop.f32.mrb[0].mxu0
        %v3080 = vadd.f32 0.0, %v3079
        %v3081 = vpop.f32.mrb[0].mxu0
        %3082 = vmatprep.mubr.bf16.mxu0 0
        %3083 = vmatmul.mubr.bf16.gmra.mrb[0].mxu0 %v2988
        %v3084 = vpop.f32.mrb[0].mxu0
        %v3085 = vadd.f32 0.0, %v3084
        %v3086 = vpop.f32.mrb[0].mxu0
        %v3087 = vpop.f32.mrb[0].mxu0
        %v3088 = vadd.f32 0.0, %v3087
        %v3089 = vpop.f32.mrb[0].mxu0
        %3090 = vmatprep.mubr.bf16.mxu0 0
        %3091 = vmatmul.mubr.bf16.gmra.mrb[0].mxu0 %v2991
        %v3092 = vpop.f32.mrb[0].mxu0
        %v3093 = vadd.f32 0.0, %v3092
        %v3094 = vpop.f32.mrb[0].mxu0
        %v3095 = vpop.f32.mrb[0].mxu0
        %v3096 = vadd.f32 0.0, %v3095
        %v3097 = vpop.f32.mrb[0].mxu0
        %3098 = vmatprep.mubr.bf16.mxu0 0
        %3099 = vmatmul.mubr.bf16.gmra.mrb[0].mxu0 %v2994
        %v3100 = vpop.f32.mrb[0].mxu0
        %v3101 = vadd.f32 0.0, %v3100
        %v3102 = vpop.f32.mrb[0].mxu0
        %v3103 = vpop.f32.mrb[0].mxu0
        %v3104 = vadd.f32 0.0, %v3103
        %v3105 = vpop.f32.mrb[0].mxu0
        %3106 = vmatprep.mubr.bf16.mxu0 0
        %3107 = vmatmul.mubr.bf16.gmra.mrb[0].mxu0 %v2997
        %v3108 = vpop.f32.mrb[0].mxu0
        %v3109 = vadd.f32 0.0, %v3108
        %v3110 = vpop.f32.mrb[0].mxu0
        %v3111 = vpop.f32.mrb[0].mxu0
        %v3112 = vadd.f32 0.0, %v3111
        %v3113 = vpop.f32.mrb[0].mxu0
        %3114 = vmatprep.mubr.bf16.mxu0 0
        %3115 = vmatmul.mubr.bf16.gmra.mrb[0].mxu0 %v3000
        %v3116 = vpop.f32.mrb[0].mxu0
        %v3117 = vadd.f32 0.0, %v3116
        %v3118 = vpop.f32.mrb[0].mxu0
        %v3119 = vpop.f32.mrb[0].mxu0
        %v3120 = vadd.f32 0.0, %v3119
        %v3121 = vpop.f32.mrb[0].mxu0
        %3122 = vmatprep.mubr.bf16.mxu0 0
        %3123 = vmatmul.mubr.bf16.gmra.mrb[0].mxu0 %v3003
        %v3124 = vpop.f32.mrb[0].mxu0
        %v3125 = vadd.f32 0.0, %v3124
        %v3126 = vpop.f32.mrb[0].mxu0
        %v3127 = vpop.f32.mrb[0].mxu0
        %v3128 = vadd.f32 0.0, %v3127
        %v3129 = vpop.f32.mrb[0].mxu0
        %3130 = vmatprep.mubr.bf16.mxu0 0
        %3131 = vmatmul.mubr.bf16.gmra.mrb[0].mxu0 %v3006
        %v3132 = vpop.f32.mrb[0].mxu0
        %v3133 = vadd.f32 0.0, %v3132
        %v3134 = vpop.f32.mrb[0].mxu0
        %v3135 = vpop.f32.mrb[0].mxu0
        %v3136 = vadd.f32 0.0, %v3135
        %v3137 = vpop.f32.mrb[0].mxu0
        %3138 = vmatprep.mubr.bf16.mxu0 0
        %3139 = vmatmul.mubr.bf16.gmra.mrb[0].mxu0 %v3009
        %v3140 = vpop.f32.mrb[0].mxu0
        %v3141 = vadd.f32 0.0, %v3140
        %v3142 = vpop.f32.mrb[0].mxu0
        %v3143 = vpop.f32.mrb[0].mxu0
        %v3144 = vadd.f32 0.0, %v3143
        %v3145 = vpop.f32.mrb[0].mxu0
        %3146 = vmatprep.mubr.bf16.mxu0 0
        %3147 = vmatmul.mubr.bf16.gmra.mrb[0].mxu0 %v3012
        %v3148 = vpop.f32.mrb[0].mxu0
        %v3149 = vadd.f32 0.0, %v3148
        %v3150 = vpop.f32.mrb[0].mxu0
        %v3151 = vpop.f32.mrb[0].mxu0
        %v3152 = vadd.f32 0.0, %v3151
        %v3153 = vpop.f32.mrb[0].mxu0
        %3154 = vmatprep.mubr.bf16.mxu0 0
        %3155 = vmatmul.mubr.bf16.gmra.mrb[0].mxu0 %v3015
        %v3156 = vpop.f32.mrb[0].mxu0
        %v3157 = vadd.f32 0.0, %v3156
        %v3158 = vpop.f32.mrb[0].mxu0
        %v3159 = vpop.f32.mrb[0].mxu0
        %v3160 = vadd.f32 0.0, %v3159
        %v3161 = vpop.f32.mrb[0].mxu0
        %3162 = vmatprep.mubr.bf16.mxu0 0
        %3163 = vmatmul.mubr.bf16.gmra.mrb[0].mxu0 %v3018
        %v3164 = vpop.f32.mrb[0].mxu0
        %v3165 = vadd.f32 0.0, %v3164
        %v3166 = vpop.f32.mrb[0].mxu0
        %v3167 = vpop.f32.mrb[0].mxu0
        %v3168 = vadd.f32 0.0, %v3167
        %v3169 = vpop.f32.mrb[0].mxu0
        %3170 = vmatprep.mubr.bf16.mxu0 0
        %3171 = vmatmul.mubr.bf16.gmra.mrb[0].mxu0 %v3021
        %v3172 = vpop.f32.mrb[0].mxu0
        %v3173 = vadd.f32 0.0, %v3172
        %v3174 = vpop.f32.mrb[0].mxu0
        %v3175 = vpop.f32.mrb[0].mxu0
        %v3176 = vadd.f32 0.0, %v3175
        %v3177 = vpop.f32.mrb[0].mxu0
        %3178 = vmatprep.mubr.bf16.mxu0 0
        %3179 = vmatmul.mubr.bf16.gmra.mrb[0].mxu0 %v3024
        %v3180 = vpop.f32.mrb[0].mxu0
        %v3181 = vadd.f32 0.0, %v3180
        %v3182 = vpop.f32.mrb[0].mxu0
        %v3183 = vpop.f32.mrb[0].mxu0
        %v3184 = vadd.f32 0.0, %v3183
        %v3185 = vpop.f32.mrb[0].mxu0
        %3186 = vdwg.mxu0
        %v3187 = vadd.f32 %v2713, %v3061
        %v3188 = vadd.f32 %v2714, %v3064
        %v3189 = vadd.f32 %v2715, %v3069
        %v3190 = vadd.f32 %v2716, %v3072
        %v3191 = vadd.f32 %v2717, %v3077
        %v3192 = vadd.f32 %v2718, %v3080
        %v3193 = vadd.f32 %v2719, %v3085
        %v3194 = vadd.f32 %v2720, %v3088
        %v3195 = vadd.f32 %v2721, %v3093
        %v3196 = vadd.f32 %v2722, %v3096
        %v3197 = vadd.f32 %v2723, %v3101
        %v3198 = vadd.f32 %v2724, %v3104
        %v3199 = vadd.f32 %v2725, %v3109
        %v3200 = vadd.f32 %v2726, %v3112
        %v3201 = vadd.f32 %v2727, %v3117
        %v3202 = vadd.f32 %v2728, %v3120
        %v3203 = vadd.f32 %v2729, %v3125
        %v3204 = vadd.f32 %v2730, %v3128
        %v3205 = vadd.f32 %v2731, %v3133
        %v3206 = vadd.f32 %v2732, %v3136
        %v3207 = vadd.f32 %v2733, %v3141
        %v3208 = vadd.f32 %v2734, %v3144
        %v3209 = vadd.f32 %v2735, %v3149
        %v3210 = vadd.f32 %v2736, %v3152
        %v3211 = vadd.f32 %v2737, %v3157
        %v3212 = vadd.f32 %v2738, %v3160
        %v3213 = vadd.f32 %v2739, %v3165
        %v3214 = vadd.f32 %v2740, %v3168
        %v3215 = vadd.f32 %v2741, %v3173
        %v3216 = vadd.f32 %v2742, %v3176
        %v3217 = vadd.f32 %v2743, %v3181
        %v3218 = vadd.f32 %v2744, %v3184
        %s3219 = sadd.s32 %s185, 2
        %s3220 = smul.u32 %s3219, 3
        %s3221 = smul.addr %s3220, 4
        %s3222 = scalar_lea.vmem %s182, %s3221
        %v3223 = vld [vmem:[%s3222] sm:$0xf]
        %v3224 = vld [vmem:[%s3222 + $0x4] sm:$0xf]
        %v3225 = vld [vmem:[%s3222 + $0xc] sm:$0xf]
        %v3226 = vld [vmem:[%s3222 + $0x10] sm:$0xf]
        %v3227 = vld [vmem:[%s3222 + $0x18] sm:$0xf]
        %v3228 = vld [vmem:[%s3222 + $0x1c] sm:$0xf]
        %v3229 = vld [vmem:[%s3222 + $0x24] sm:$0xf]
        %v3230 = vld [vmem:[%s3222 + $0x28] sm:$0xf]
        %v3231 = vld [vmem:[%s3222 + $0x30] sm:$0xf]
        %v3232 = vld [vmem:[%s3222 + $0x34] sm:$0xf]
        %v3233 = vld [vmem:[%s3222 + $0x3c] sm:$0xf]
        %v3234 = vld [vmem:[%s3222 + $0x40] sm:$0xf]
        %v3235 = vld [vmem:[%s3222 + $0x48] sm:$0xf]
        %v3236 = vld [vmem:[%s3222 + $0x4c] sm:$0xf]
        %v3237 = vld [vmem:[%s3222 + $0x54] sm:$0xf]
        %v3238 = vld [vmem:[%s3222 + $0x58] sm:$0xf]
        %v3239 = vld [vmem:[%s3222 + $0x60] sm:$0xf]
        %v3240 = vld [vmem:[%s3222 + $0x64] sm:$0xf]
        %v3241 = vld [vmem:[%s3222 + $0x6c] sm:$0xf]
        %v3242 = vld [vmem:[%s3222 + $0x70] sm:$0xf]
        %v3243 = vld [vmem:[%s3222 + $0x78] sm:$0xf]
        %v3244 = vld [vmem:[%s3222 + $0x7c] sm:$0xf]
        %v3245 = vld [vmem:[%s3222 + $0x84] sm:$0xf]
        %v3246 = vld [vmem:[%s3222 + $0x88] sm:$0xf]
        %v3247 = vld [vmem:[%s3222 + $0x90] sm:$0xf]
        %v3248 = vld [vmem:[%s3222 + $0x94] sm:$0xf]
        %v3249 = vld [vmem:[%s3222 + $0x9c] sm:$0xf]
        %v3250 = vld [vmem:[%s3222 + $0xa0] sm:$0xf]
        %v3251 = vld [vmem:[%s3222 + $0xa8] sm:$0xf]
        %v3252 = vld [vmem:[%s3222 + $0xac] sm:$0xf]
        %v3253 = vld [vmem:[%s3222 + $0xb4] sm:$0xf]
        %v3254 = vld [vmem:[%s3222 + $0xb8] sm:$0xf]
        %s3255 = scalar_lea.vmem %s1, 48
        %v3256 = vld [vmem:[%s3255] sm:$0xf]
        %v3257 = vld [vmem:[%s3255 + $0x4] sm:$0xf]
        %v3290 = vunpack.c.l.b16 %v3223
        %v3291 = vunpack.c.l.b16 %v3224
        %v3292 = vunpack.c.l.b16 %v3225
        %v3293 = vunpack.c.l.b16 %v3226
        %v3294 = vunpack.c.l.b16 %v3227
        %v3295 = vunpack.c.l.b16 %v3228
        %v3296 = vunpack.c.l.b16 %v3229
        %v3297 = vunpack.c.l.b16 %v3230
        %v3298 = vunpack.c.l.b16 %v3231
        %v3299 = vunpack.c.l.b16 %v3232
        %v3300 = vunpack.c.l.b16 %v3233
        %v3301 = vunpack.c.l.b16 %v3234
        %v3302 = vunpack.c.l.b16 %v3235
        %v3303 = vunpack.c.l.b16 %v3236
        %v3304 = vunpack.c.l.b16 %v3237
        %v3305 = vunpack.c.l.b16 %v3238
        %v3306 = vunpack.c.l.b16 %v3239
        %v3307 = vunpack.c.l.b16 %v3240
        %v3308 = vunpack.c.l.b16 %v3241
        %v3309 = vunpack.c.l.b16 %v3242
        %v3310 = vunpack.c.l.b16 %v3243
        %v3311 = vunpack.c.l.b16 %v3244
        %v3312 = vunpack.c.l.b16 %v3245
        %v3313 = vunpack.c.l.b16 %v3246
        %v3314 = vunpack.c.l.b16 %v3247
        %v3315 = vunpack.c.l.b16 %v3248
        %v3316 = vunpack.c.l.b16 %v3249
        %v3317 = vunpack.c.l.b16 %v3250
        %v3318 = vunpack.c.l.b16 %v3251
        %v3319 = vunpack.c.l.b16 %v3252
        %v3320 = vunpack.c.l.b16 %v3253
        %v3321 = vunpack.c.l.b16 %v3254
        %v3322 = vpack.c.b16 %v3291, %v3290
        %v3323 = vpack.c.b16 %v3293, %v3292
        %v3324 = vpack.c.b16 %v3295, %v3294
        %v3325 = vpack.c.b16 %v3297, %v3296
        %v3326 = vpack.c.b16 %v3299, %v3298
        %v3327 = vpack.c.b16 %v3301, %v3300
        %v3328 = vpack.c.b16 %v3303, %v3302
        %v3329 = vpack.c.b16 %v3305, %v3304
        %v3330 = vpack.c.b16 %v3307, %v3306
        %v3331 = vpack.c.b16 %v3309, %v3308
        %v3332 = vpack.c.b16 %v3311, %v3310
        %v3333 = vpack.c.b16 %v3313, %v3312
        %v3334 = vpack.c.b16 %v3315, %v3314
        %v3335 = vpack.c.b16 %v3317, %v3316
        %v3336 = vpack.c.b16 %v3319, %v3318
        %v3337 = vpack.c.b16 %v3321, %v3320
        %v3340 = vunpack.c.l.b16 %v3256
        %v3341 = vunpack.c.l.b16 %v3257
        %v3342 = vpack.c.b16 %v3341, %v3340
        %v3345 = vsel %vm683, %v3322, 0
        %v3348 = vsel %vm683, %v3323, 0
        %v3351 = vsel %vm683, %v3324, 0
        %v3354 = vsel %vm683, %v3325, 0
        %v3357 = vsel %vm683, %v3326, 0
        %v3360 = vsel %vm683, %v3327, 0
        %v3363 = vsel %vm683, %v3328, 0
        %v3366 = vsel %vm683, %v3329, 0
        %v3369 = vsel %vm683, %v3330, 0
        %v3372 = vsel %vm683, %v3331, 0
        %v3375 = vsel %vm683, %v3332, 0
        %v3378 = vsel %vm683, %v3333, 0
        %v3381 = vsel %vm683, %v3334, 0
        %v3384 = vsel %vm683, %v3335, 0
        %v3387 = vsel %vm683, %v3336, 0
        %v3390 = vsel %vm683, %v3337, 0
        %3392 = vmatprep.subr.bf16.mxu0 0
        %3393 = vmatpush1.bf16.msra.mxu0 %v3342
        %3394 = vmatprep.subr.bf16.mxu0 0
        %3395 = vmatpush1.bf16.msra.mxu0 0
        %3396 = vmatprep.subr.bf16.mxu0 0
        %3397 = vmatpush1.bf16.msra.mxu0 0
        %3398 = vmatprep.subr.bf16.mxu0 0
        %3399 = vmatpush1.bf16.msra.mxu0 0
        %3400 = vmatprep.subr.bf16.mxu0 0
        %3401 = vmatpush1.bf16.msra.mxu0 0
        %3402 = vmatprep.subr.bf16.mxu0 0
        %3403 = vmatpush1.bf16.msra.mxu0 0
        %3404 = vmatprep.subr.bf16.mxu0 0
        %3405 = vmatpush1.bf16.msra.mxu0 0
        %3406 = vmatprep.subr.bf16.mxu0 0
        %3407 = vmatpush1.bf16.msra.mxu0 0
        %3408 = vmatprep.subr.bf16.mxu0 0
        %3409 = vmatpush1.bf16.msra.mxu0 0
        %3410 = vmatprep.subr.bf16.mxu0 0
        %3411 = vmatpush1.bf16.msra.mxu0 0
        %3412 = vmatprep.subr.bf16.mxu0 0
        %3413 = vmatpush1.bf16.msra.mxu0 0
        %3414 = vmatprep.subr.bf16.mxu0 0
        %3415 = vmatpush1.bf16.msra.mxu0 0
        %3416 = vmatprep.subr.bf16.mxu0 0
        %3417 = vmatpush1.bf16.msra.mxu0 0
        %3418 = vmatprep.subr.bf16.mxu0 0
        %3419 = vmatpush1.bf16.msra.mxu0 0
        %3420 = vmatprep.subr.bf16.mxu0 0
        %3421 = vmatpush1.bf16.msra.mxu0 0
        %3422 = vmatprep.subr.bf16.mxu0 0
        %3423 = vmatpush1.bf16.msra.mxu0 0
        %3424 = vmatprep.mubr.bf16.mxu0 0
        %3425 = vmatmul.mubr.bf16.gmra.mrb[0].mxu0 %v3345
        %v3426 = vpop.f32.mrb[0].mxu0
        %v3427 = vadd.f32 0.0, %v3426
        %v3428 = vpop.f32.mrb[0].mxu0
        %v3429 = vpop.f32.mrb[0].mxu0
        %v3430 = vadd.f32 0.0, %v3429
        %v3431 = vpop.f32.mrb[0].mxu0
        %3432 = vmatprep.mubr.bf16.mxu0 0
        %3433 = vmatmul.mubr.bf16.gmra.mrb[0].mxu0 %v3348
        %v3434 = vpop.f32.mrb[0].mxu0
        %v3435 = vadd.f32 0.0, %v3434
        %v3436 = vpop.f32.mrb[0].mxu0
        %v3437 = vpop.f32.mrb[0].mxu0
        %v3438 = vadd.f32 0.0, %v3437
        %v3439 = vpop.f32.mrb[0].mxu0
        %3440 = vmatprep.mubr.bf16.mxu0 0
        %3441 = vmatmul.mubr.bf16.gmra.mrb[0].mxu0 %v3351
        %v3442 = vpop.f32.mrb[0].mxu0
        %v3443 = vadd.f32 0.0, %v3442
        %v3444 = vpop.f32.mrb[0].mxu0
        %v3445 = vpop.f32.mrb[0].mxu0
        %v3446 = vadd.f32 0.0, %v3445
        %v3447 = vpop.f32.mrb[0].mxu0
        %3448 = vmatprep.mubr.bf16.mxu0 0
        %3449 = vmatmul.mubr.bf16.gmra.mrb[0].mxu0 %v3354
        %v3450 = vpop.f32.mrb[0].mxu0
        %v3451 = vadd.f32 0.0, %v3450
        %v3452 = vpop.f32.mrb[0].mxu0
        %v3453 = vpop.f32.mrb[0].mxu0
        %v3454 = vadd.f32 0.0, %v3453
        %v3455 = vpop.f32.mrb[0].mxu0
        %3456 = vmatprep.mubr.bf16.mxu0 0
        %3457 = vmatmul.mubr.bf16.gmra.mrb[0].mxu0 %v3357
        %v3458 = vpop.f32.mrb[0].mxu0
        %v3459 = vadd.f32 0.0, %v3458
        %v3460 = vpop.f32.mrb[0].mxu0
        %v3461 = vpop.f32.mrb[0].mxu0
        %v3462 = vadd.f32 0.0, %v3461
        %v3463 = vpop.f32.mrb[0].mxu0
        %3464 = vmatprep.mubr.bf16.mxu0 0
        %3465 = vmatmul.mubr.bf16.gmra.mrb[0].mxu0 %v3360
        %v3466 = vpop.f32.mrb[0].mxu0
        %v3467 = vadd.f32 0.0, %v3466
        %v3468 = vpop.f32.mrb[0].mxu0
        %v3469 = vpop.f32.mrb[0].mxu0
        %v3470 = vadd.f32 0.0, %v3469
        %v3471 = vpop.f32.mrb[0].mxu0
        %3472 = vmatprep.mubr.bf16.mxu0 0
        %3473 = vmatmul.mubr.bf16.gmra.mrb[0].mxu0 %v3363
        %v3474 = vpop.f32.mrb[0].mxu0
        %v3475 = vadd.f32 0.0, %v3474
        %v3476 = vpop.f32.mrb[0].mxu0
        %v3477 = vpop.f32.mrb[0].mxu0
        %v3478 = vadd.f32 0.0, %v3477
        %v3479 = vpop.f32.mrb[0].mxu0
        %3480 = vmatprep.mubr.bf16.mxu0 0
        %3481 = vmatmul.mubr.bf16.gmra.mrb[0].mxu0 %v3366
        %v3482 = vpop.f32.mrb[0].mxu0
        %v3483 = vadd.f32 0.0, %v3482
        %v3484 = vpop.f32.mrb[0].mxu0
        %v3485 = vpop.f32.mrb[0].mxu0
        %v3486 = vadd.f32 0.0, %v3485
        %v3487 = vpop.f32.mrb[0].mxu0
        %3488 = vmatprep.mubr.bf16.mxu0 0
        %3489 = vmatmul.mubr.bf16.gmra.mrb[0].mxu0 %v3369
        %v3490 = vpop.f32.mrb[0].mxu0
        %v3491 = vadd.f32 0.0, %v3490
        %v3492 = vpop.f32.mrb[0].mxu0
        %v3493 = vpop.f32.mrb[0].mxu0
        %v3494 = vadd.f32 0.0, %v3493
        %v3495 = vpop.f32.mrb[0].mxu0
        %3496 = vmatprep.mubr.bf16.mxu0 0
        %3497 = vmatmul.mubr.bf16.gmra.mrb[0].mxu0 %v3372
        %v3498 = vpop.f32.mrb[0].mxu0
        %v3499 = vadd.f32 0.0, %v3498
        %v3500 = vpop.f32.mrb[0].mxu0
        %v3501 = vpop.f32.mrb[0].mxu0
        %v3502 = vadd.f32 0.0, %v3501
        %v3503 = vpop.f32.mrb[0].mxu0
        %3504 = vmatprep.mubr.bf16.mxu0 0
        %3505 = vmatmul.mubr.bf16.gmra.mrb[0].mxu0 %v3375
        %v3506 = vpop.f32.mrb[0].mxu0
        %v3507 = vadd.f32 0.0, %v3506
        %v3508 = vpop.f32.mrb[0].mxu0
        %v3509 = vpop.f32.mrb[0].mxu0
        %v3510 = vadd.f32 0.0, %v3509
        %v3511 = vpop.f32.mrb[0].mxu0
        %3512 = vmatprep.mubr.bf16.mxu0 0
        %3513 = vmatmul.mubr.bf16.gmra.mrb[0].mxu0 %v3378
        %v3514 = vpop.f32.mrb[0].mxu0
        %v3515 = vadd.f32 0.0, %v3514
        %v3516 = vpop.f32.mrb[0].mxu0
        %v3517 = vpop.f32.mrb[0].mxu0
        %v3518 = vadd.f32 0.0, %v3517
        %v3519 = vpop.f32.mrb[0].mxu0
        %3520 = vmatprep.mubr.bf16.mxu0 0
        %3521 = vmatmul.mubr.bf16.gmra.mrb[0].mxu0 %v3381
        %v3522 = vpop.f32.mrb[0].mxu0
        %v3523 = vadd.f32 0.0, %v3522
        %v3524 = vpop.f32.mrb[0].mxu0
        %v3525 = vpop.f32.mrb[0].mxu0
        %v3526 = vadd.f32 0.0, %v3525
        %v3527 = vpop.f32.mrb[0].mxu0
        %3528 = vmatprep.mubr.bf16.mxu0 0
        %3529 = vmatmul.mubr.bf16.gmra.mrb[0].mxu0 %v3384
        %v3530 = vpop.f32.mrb[0].mxu0
        %v3531 = vadd.f32 0.0, %v3530
        %v3532 = vpop.f32.mrb[0].mxu0
        %v3533 = vpop.f32.mrb[0].mxu0
        %v3534 = vadd.f32 0.0, %v3533
        %v3535 = vpop.f32.mrb[0].mxu0
        %3536 = vmatprep.mubr.bf16.mxu0 0
        %3537 = vmatmul.mubr.bf16.gmra.mrb[0].mxu0 %v3387
        %v3538 = vpop.f32.mrb[0].mxu0
        %v3539 = vadd.f32 0.0, %v3538
        %v3540 = vpop.f32.mrb[0].mxu0
        %v3541 = vpop.f32.mrb[0].mxu0
        %v3542 = vadd.f32 0.0, %v3541
        %v3543 = vpop.f32.mrb[0].mxu0
        %3544 = vmatprep.mubr.bf16.mxu0 0
        %3545 = vmatmul.mubr.bf16.gmra.mrb[0].mxu0 %v3390
        %v3546 = vpop.f32.mrb[0].mxu0
        %v3547 = vadd.f32 0.0, %v3546
        %v3548 = vpop.f32.mrb[0].mxu0
        %v3549 = vpop.f32.mrb[0].mxu0
        %v3550 = vadd.f32 0.0, %v3549
        %v3551 = vpop.f32.mrb[0].mxu0
        %3552 = vdwg.mxu0
        %v3553 = vadd.f32 %v3187, %v3427
        %v3554 = vadd.f32 %v3188, %v3430
        %v3555 = vadd.f32 %v3189, %v3435
        %v3556 = vadd.f32 %v3190, %v3438
        %v3557 = vadd.f32 %v3191, %v3443
        %v3558 = vadd.f32 %v3192, %v3446
        %v3559 = vadd.f32 %v3193, %v3451
        %v3560 = vadd.f32 %v3194, %v3454
        %v3561 = vadd.f32 %v3195, %v3459
        %v3562 = vadd.f32 %v3196, %v3462
        %v3563 = vadd.f32 %v3197, %v3467
        %v3564 = vadd.f32 %v3198, %v3470
        %v3565 = vadd.f32 %v3199, %v3475
        %v3566 = vadd.f32 %v3200, %v3478
        %v3567 = vadd.f32 %v3201, %v3483
        %v3568 = vadd.f32 %v3202, %v3486
        %v3569 = vadd.f32 %v3203, %v3491
        %v3570 = vadd.f32 %v3204, %v3494
        %v3571 = vadd.f32 %v3205, %v3499
        %v3572 = vadd.f32 %v3206, %v3502
        %v3573 = vadd.f32 %v3207, %v3507
        %v3574 = vadd.f32 %v3208, %v3510
        %v3575 = vadd.f32 %v3209, %v3515
        %v3576 = vadd.f32 %v3210, %v3518
        %v3577 = vadd.f32 %v3211, %v3523
        %v3578 = vadd.f32 %v3212, %v3526
        %v3579 = vadd.f32 %v3213, %v3531
        %v3580 = vadd.f32 %v3214, %v3534
        %v3581 = vadd.f32 %v3215, %v3539
        %v3582 = vadd.f32 %v3216, %v3542
        %v3583 = vadd.f32 %v3217, %v3547
        %v3584 = vadd.f32 %v3218, %v3550
        %v3585 = vld [vmem:[%s3222] sm:$0xf]
        %v3586 = vld [vmem:[%s3222 + $0x4] sm:$0xf]
        %v3587 = vld [vmem:[%s3222 + $0x8] sm:$0x1]
        %v3588 = vld [vmem:[%s3222 + $0xc] sm:$0xf]
        %v3589 = vld [vmem:[%s3222 + $0x10] sm:$0xf]
        %v3590 = vld [vmem:[%s3222 + $0x14] sm:$0x1]
        %v3591 = vld [vmem:[%s3222 + $0x18] sm:$0xf]
        %v3592 = vld [vmem:[%s3222 + $0x1c] sm:$0xf]
        %v3593 = vld [vmem:[%s3222 + $0x20] sm:$0x1]
        %v3594 = vld [vmem:[%s3222 + $0x24] sm:$0xf]
        %v3595 = vld [vmem:[%s3222 + $0x28] sm:$0xf]
        %v3596 = vld [vmem:[%s3222 + $0x2c] sm:$0x1]
        %v3597 = vld [vmem:[%s3222 + $0x30] sm:$0xf]
        %v3598 = vld [vmem:[%s3222 + $0x34] sm:$0xf]
        %v3599 = vld [vmem:[%s3222 + $0x38] sm:$0x1]
        %v3600 = vld [vmem:[%s3222 + $0x3c] sm:$0xf]
        %v3601 = vld [vmem:[%s3222 + $0x40] sm:$0xf]
        %v3602 = vld [vmem:[%s3222 + $0x44] sm:$0x1]
        %v3603 = vld [vmem:[%s3222 + $0x48] sm:$0xf]
        %v3604 = vld [vmem:[%s3222 + $0x4c] sm:$0xf]
        %v3605 = vld [vmem:[%s3222 + $0x50] sm:$0x1]
        %v3606 = vld [vmem:[%s3222 + $0x54] sm:$0xf]
        %v3607 = vld [vmem:[%s3222 + $0x58] sm:$0xf]
        %v3608 = vld [vmem:[%s3222 + $0x5c] sm:$0x1]
        %v3609 = vld [vmem:[%s3222 + $0x60] sm:$0xf]
        %v3610 = vld [vmem:[%s3222 + $0x64] sm:$0xf]
        %v3611 = vld [vmem:[%s3222 + $0x68] sm:$0x1]
        %v3612 = vld [vmem:[%s3222 + $0x6c] sm:$0xf]
        %v3613 = vld [vmem:[%s3222 + $0x70] sm:$0xf]
        %v3614 = vld [vmem:[%s3222 + $0x74] sm:$0x1]
        %v3615 = vld [vmem:[%s3222 + $0x78] sm:$0xf]
        %v3616 = vld [vmem:[%s3222 + $0x7c] sm:$0xf]
        %v3617 = vld [vmem:[%s3222 + $0x80] sm:$0x1]
        %v3618 = vld [vmem:[%s3222 + $0x84] sm:$0xf]
        %v3619 = vld [vmem:[%s3222 + $0x88] sm:$0xf]
        %v3620 = vld [vmem:[%s3222 + $0x8c] sm:$0x1]
        %v3621 = vld [vmem:[%s3222 + $0x90] sm:$0xf]
        %v3622 = vld [vmem:[%s3222 + $0x94] sm:$0xf]
        %v3623 = vld [vmem:[%s3222 + $0x98] sm:$0x1]
        %v3624 = vld [vmem:[%s3222 + $0x9c] sm:$0xf]
        %v3625 = vld [vmem:[%s3222 + $0xa0] sm:$0xf]
        %v3626 = vld [vmem:[%s3222 + $0xa4] sm:$0x1]
        %v3627 = vld [vmem:[%s3222 + $0xa8] sm:$0xf]
        %v3628 = vld [vmem:[%s3222 + $0xac] sm:$0xf]
        %v3629 = vld [vmem:[%s3222 + $0xb0] sm:$0x1]
        %v3630 = vld [vmem:[%s3222 + $0xb4] sm:$0xf]
        %v3631 = vld [vmem:[%s3222 + $0xb8] sm:$0xf]
        %v3632 = vld [vmem:[%s3222 + $0xbc] sm:$0x1]
        %v3634 = vshrl.u32 %v3585, 16
        %v3636 = vrot.slane %v3634, 4
        %v3637 = vshll.u32 %v3585, 16
        %v3639 = vrot.slane %v3637, 5
        %v3640 = vor.u32 %v3636, %v3639
        %v3641 = vrot.slane %v3640, 4
        %v3643 = vshll.u32 %v3586, 16
        %v3645 = vrot.slane %v3643, 5
        %v3646 = vsel %vm241, %v3641, %v3645
        %v3647 = vshrl.u32 %v3586, 16
        %v3649 = vrot.slane %v3647, 4
        %v3650 = vor.u32 %v3649, %v3645
        %v3651 = vrot.slane %v3650, 4
        %v3653 = vshll.u32 %v3587, 16
        %v3655 = vrot.slane %v3653, 5
        %v3656 = vsel %vm241, %v3651, %v3655
        %v3658 = vshrl.u32 %v3588, 16
        %v3660 = vrot.slane %v3658, 4
        %v3661 = vshll.u32 %v3588, 16
        %v3663 = vrot.slane %v3661, 5
        %v3664 = vor.u32 %v3660, %v3663
        %v3665 = vrot.slane %v3664, 4
        %v3667 = vshll.u32 %v3589, 16
        %v3669 = vrot.slane %v3667, 5
        %v3670 = vsel %vm241, %v3665, %v3669
        %v3671 = vshrl.u32 %v3589, 16
        %v3673 = vrot.slane %v3671, 4
        %v3674 = vor.u32 %v3673, %v3669
        %v3675 = vrot.slane %v3674, 4
        %v3677 = vshll.u32 %v3590, 16
        %v3679 = vrot.slane %v3677, 5
        %v3680 = vsel %vm241, %v3675, %v3679
        %v3682 = vshrl.u32 %v3591, 16
        %v3684 = vrot.slane %v3682, 4
        %v3685 = vshll.u32 %v3591, 16
        %v3687 = vrot.slane %v3685, 5
        %v3688 = vor.u32 %v3684, %v3687
        %v3689 = vrot.slane %v3688, 4
        %v3691 = vshll.u32 %v3592, 16
        %v3693 = vrot.slane %v3691, 5
        %v3694 = vsel %vm241, %v3689, %v3693
        %v3695 = vshrl.u32 %v3592, 16
        %v3697 = vrot.slane %v3695, 4
        %v3698 = vor.u32 %v3697, %v3693
        %v3699 = vrot.slane %v3698, 4
        %v3701 = vshll.u32 %v3593, 16
        %v3703 = vrot.slane %v3701, 5
        %v3704 = vsel %vm241, %v3699, %v3703
        %v3706 = vshrl.u32 %v3594, 16
        %v3708 = vrot.slane %v3706, 4
        %v3709 = vshll.u32 %v3594, 16
        %v3711 = vrot.slane %v3709, 5
        %v3712 = vor.u32 %v3708, %v3711
        %v3713 = vrot.slane %v3712, 4
        %v3715 = vshll.u32 %v3595, 16
        %v3717 = vrot.slane %v3715, 5
        %v3718 = vsel %vm241, %v3713, %v3717
        %v3719 = vshrl.u32 %v3595, 16
        %v3721 = vrot.slane %v3719, 4
        %v3722 = vor.u32 %v3721, %v3717
        %v3723 = vrot.slane %v3722, 4
        %v3725 = vshll.u32 %v3596, 16
        %v3727 = vrot.slane %v3725, 5
        %v3728 = vsel %vm241, %v3723, %v3727
        %v3730 = vshrl.u32 %v3597, 16
        %v3732 = vrot.slane %v3730, 4
        %v3733 = vshll.u32 %v3597, 16
        %v3735 = vrot.slane %v3733, 5
        %v3736 = vor.u32 %v3732, %v3735
        %v3737 = vrot.slane %v3736, 4
        %v3739 = vshll.u32 %v3598, 16
        %v3741 = vrot.slane %v3739, 5
        %v3742 = vsel %vm241, %v3737, %v3741
        %v3743 = vshrl.u32 %v3598, 16
        %v3745 = vrot.slane %v3743, 4
        %v3746 = vor.u32 %v3745, %v3741
        %v3747 = vrot.slane %v3746, 4
        %v3749 = vshll.u32 %v3599, 16
        %v3751 = vrot.slane %v3749, 5
        %v3752 = vsel %vm241, %v3747, %v3751
        %v3754 = vshrl.u32 %v3600, 16
        %v3756 = vrot.slane %v3754, 4
        %v3757 = vshll.u32 %v3600, 16
        %v3759 = vrot.slane %v3757, 5
        %v3760 = vor.u32 %v3756, %v3759
        %v3761 = vrot.slane %v3760, 4
        %v3763 = vshll.u32 %v3601, 16
        %v3765 = vrot.slane %v3763, 5
        %v3766 = vsel %vm241, %v3761, %v3765
        %v3767 = vshrl.u32 %v3601, 16
        %v3769 = vrot.slane %v3767, 4
        %v3770 = vor.u32 %v3769, %v3765
        %v3771 = vrot.slane %v3770, 4
        %v3773 = vshll.u32 %v3602, 16
        %v3775 = vrot.slane %v3773, 5
        %v3776 = vsel %vm241, %v3771, %v3775
        %v3778 = vshrl.u32 %v3603, 16
        %v3780 = vrot.slane %v3778, 4
        %v3781 = vshll.u32 %v3603, 16
        %v3783 = vrot.slane %v3781, 5
        %v3784 = vor.u32 %v3780, %v3783
        %v3785 = vrot.slane %v3784, 4
        %v3787 = vshll.u32 %v3604, 16
        %v3789 = vrot.slane %v3787, 5
        %v3790 = vsel %vm241, %v3785, %v3789
        %v3791 = vshrl.u32 %v3604, 16
        %v3793 = vrot.slane %v3791, 4
        %v3794 = vor.u32 %v3793, %v3789
        %v3795 = vrot.slane %v3794, 4
        %v3797 = vshll.u32 %v3605, 16
        %v3799 = vrot.slane %v3797, 5
        %v3800 = vsel %vm241, %v3795, %v3799
        %v3802 = vshrl.u32 %v3606, 16
        %v3804 = vrot.slane %v3802, 4
        %v3805 = vshll.u32 %v3606, 16
        %v3807 = vrot.slane %v3805, 5
        %v3808 = vor.u32 %v3804, %v3807
        %v3809 = vrot.slane %v3808, 4
        %v3811 = vshll.u32 %v3607, 16
        %v3813 = vrot.slane %v3811, 5
        %v3814 = vsel %vm241, %v3809, %v3813
        %v3815 = vshrl.u32 %v3607, 16
        %v3817 = vrot.slane %v3815, 4
        %v3818 = vor.u32 %v3817, %v3813
        %v3819 = vrot.slane %v3818, 4
        %v3821 = vshll.u32 %v3608, 16
        %v3823 = vrot.slane %v3821, 5
        %v3824 = vsel %vm241, %v3819, %v3823
        %v3826 = vshrl.u32 %v3609, 16
        %v3828 = vrot.slane %v3826, 4
        %v3829 = vshll.u32 %v3609, 16
        %v3831 = vrot.slane %v3829, 5
        %v3832 = vor.u32 %v3828, %v3831
        %v3833 = vrot.slane %v3832, 4
        %v3835 = vshll.u32 %v3610, 16
        %v3837 = vrot.slane %v3835, 5
        %v3838 = vsel %vm241, %v3833, %v3837
        %v3839 = vshrl.u32 %v3610, 16
        %v3841 = vrot.slane %v3839, 4
        %v3842 = vor.u32 %v3841, %v3837
        %v3843 = vrot.slane %v3842, 4
        %v3845 = vshll.u32 %v3611, 16
        %v3847 = vrot.slane %v3845, 5
        %v3848 = vsel %vm241, %v3843, %v3847
        %v3850 = vshrl.u32 %v3612, 16
        %v3852 = vrot.slane %v3850, 4
        %v3853 = vshll.u32 %v3612, 16
        %v3855 = vrot.slane %v3853, 5
        %v3856 = vor.u32 %v3852, %v3855
        %v3857 = vrot.slane %v3856, 4
        %v3859 = vshll.u32 %v3613, 16
        %v3861 = vrot.slane %v3859, 5
        %v3862 = vsel %vm241, %v3857, %v3861
        %v3863 = vshrl.u32 %v3613, 16
        %v3865 = vrot.slane %v3863, 4
        %v3866 = vor.u32 %v3865, %v3861
        %v3867 = vrot.slane %v3866, 4
        %v3869 = vshll.u32 %v3614, 16
        %v3871 = vrot.slane %v3869, 5
        %v3872 = vsel %vm241, %v3867, %v3871
        %v3874 = vshrl.u32 %v3615, 16
        %v3876 = vrot.slane %v3874, 4
        %v3877 = vshll.u32 %v3615, 16
        %v3879 = vrot.slane %v3877, 5
        %v3880 = vor.u32 %v3876, %v3879
        %v3881 = vrot.slane %v3880, 4
        %v3883 = vshll.u32 %v3616, 16
        %v3885 = vrot.slane %v3883, 5
        %v3886 = vsel %vm241, %v3881, %v3885
        %v3887 = vshrl.u32 %v3616, 16
        %v3889 = vrot.slane %v3887, 4
        %v3890 = vor.u32 %v3889, %v3885
        %v3891 = vrot.slane %v3890, 4
        %v3893 = vshll.u32 %v3617, 16
        %v3895 = vrot.slane %v3893, 5
        %v3896 = vsel %vm241, %v3891, %v3895
        %v3898 = vshrl.u32 %v3618, 16
        %v3900 = vrot.slane %v3898, 4
        %v3901 = vshll.u32 %v3618, 16
        %v3903 = vrot.slane %v3901, 5
        %v3904 = vor.u32 %v3900, %v3903
        %v3905 = vrot.slane %v3904, 4
        %v3907 = vshll.u32 %v3619, 16
        %v3909 = vrot.slane %v3907, 5
        %v3910 = vsel %vm241, %v3905, %v3909
        %v3911 = vshrl.u32 %v3619, 16
        %v3913 = vrot.slane %v3911, 4
        %v3914 = vor.u32 %v3913, %v3909
        %v3915 = vrot.slane %v3914, 4
        %v3917 = vshll.u32 %v3620, 16
        %v3919 = vrot.slane %v3917, 5
        %v3920 = vsel %vm241, %v3915, %v3919
        %v3922 = vshrl.u32 %v3621, 16
        %v3924 = vrot.slane %v3922, 4
        %v3925 = vshll.u32 %v3621, 16
        %v3927 = vrot.slane %v3925, 5
        %v3928 = vor.u32 %v3924, %v3927
        %v3929 = vrot.slane %v3928, 4
        %v3931 = vshll.u32 %v3622, 16
        %v3933 = vrot.slane %v3931, 5
        %v3934 = vsel %vm241, %v3929, %v3933
        %v3935 = vshrl.u32 %v3622, 16
        %v3937 = vrot.slane %v3935, 4
        %v3938 = vor.u32 %v3937, %v3933
        %v3939 = vrot.slane %v3938, 4
        %v3941 = vshll.u32 %v3623, 16
        %v3943 = vrot.slane %v3941, 5
        %v3944 = vsel %vm241, %v3939, %v3943
        %v3946 = vshrl.u32 %v3624, 16
        %v3948 = vrot.slane %v3946, 4
        %v3949 = vshll.u32 %v3624, 16
        %v3951 = vrot.slane %v3949, 5
        %v3952 = vor.u32 %v3948, %v3951
        %v3953 = vrot.slane %v3952, 4
        %v3955 = vshll.u32 %v3625, 16
        %v3957 = vrot.slane %v3955, 5
        %v3958 = vsel %vm241, %v3953, %v3957
        %v3959 = vshrl.u32 %v3625, 16
        %v3961 = vrot.slane %v3959, 4
        %v3962 = vor.u32 %v3961, %v3957
        %v3963 = vrot.slane %v3962, 4
        %v3965 = vshll.u32 %v3626, 16
        %v3967 = vrot.slane %v3965, 5
        %v3968 = vsel %vm241, %v3963, %v3967
        %v3970 = vshrl.u32 %v3627, 16
        %v3972 = vrot.slane %v3970, 4
        %v3973 = vshll.u32 %v3627, 16
        %v3975 = vrot.slane %v3973, 5
        %v3976 = vor.u32 %v3972, %v3975
        %v3977 = vrot.slane %v3976, 4
        %v3979 = vshll.u32 %v3628, 16
        %v3981 = vrot.slane %v3979, 5
        %v3982 = vsel %vm241, %v3977, %v3981
        %v3983 = vshrl.u32 %v3628, 16
        %v3985 = vrot.slane %v3983, 4
        %v3986 = vor.u32 %v3985, %v3981
        %v3987 = vrot.slane %v3986, 4
        %v3989 = vshll.u32 %v3629, 16
        %v3991 = vrot.slane %v3989, 5
        %v3992 = vsel %vm241, %v3987, %v3991
        %v3994 = vshrl.u32 %v3630, 16
        %v3996 = vrot.slane %v3994, 4
        %v3997 = vshll.u32 %v3630, 16
        %v3999 = vrot.slane %v3997, 5
        %v4000 = vor.u32 %v3996, %v3999
        %v4001 = vrot.slane %v4000, 4
        %v4003 = vshll.u32 %v3631, 16
        %v4005 = vrot.slane %v4003, 5
        %v4006 = vsel %vm241, %v4001, %v4005
        %v4007 = vshrl.u32 %v3631, 16
        %v4009 = vrot.slane %v4007, 4
        %v4010 = vor.u32 %v4009, %v4005
        %v4011 = vrot.slane %v4010, 4
        %v4013 = vshll.u32 %v3632, 16
        %v4015 = vrot.slane %v4013, 5
        %v4016 = vsel %vm241, %v4011, %v4015
        %s4017 = scalar_lea.vmem %s1, 56
        %v4018 = vld [vmem:[%s4017] sm:$0xf]
        %v4019 = vld [vmem:[%s4017 + $0x4] sm:$0xf]
        %v4020 = vunpack.c.l.b16 %v3646
        %v4021 = vunpack.c.l.b16 %v3656
        %v4022 = vunpack.c.l.b16 %v3670
        %v4023 = vunpack.c.l.b16 %v3680
        %v4024 = vunpack.c.l.b16 %v3694
        %v4025 = vunpack.c.l.b16 %v3704
        %v4026 = vunpack.c.l.b16 %v3718
        %v4027 = vunpack.c.l.b16 %v3728
        %v4028 = vunpack.c.l.b16 %v3742
        %v4029 = vunpack.c.l.b16 %v3752
        %v4030 = vunpack.c.l.b16 %v3766
        %v4031 = vunpack.c.l.b16 %v3776
        %v4032 = vunpack.c.l.b16 %v3790
        %v4033 = vunpack.c.l.b16 %v3800
        %v4034 = vunpack.c.l.b16 %v3814
        %v4035 = vunpack.c.l.b16 %v3824
        %v4036 = vunpack.c.l.b16 %v3838
        %v4037 = vunpack.c.l.b16 %v3848
        %v4038 = vunpack.c.l.b16 %v3862
        %v4039 = vunpack.c.l.b16 %v3872
        %v4040 = vunpack.c.l.b16 %v3886
        %v4041 = vunpack.c.l.b16 %v3896
        %v4042 = vunpack.c.l.b16 %v3910
        %v4043 = vunpack.c.l.b16 %v3920
        %v4044 = vunpack.c.l.b16 %v3934
        %v4045 = vunpack.c.l.b16 %v3944
        %v4046 = vunpack.c.l.b16 %v3958
        %v4047 = vunpack.c.l.b16 %v3968
        %v4048 = vunpack.c.l.b16 %v3982
        %v4049 = vunpack.c.l.b16 %v3992
        %v4050 = vunpack.c.l.b16 %v4006
        %v4051 = vunpack.c.l.b16 %v4016
        %v4052 = vpack.c.b16 %v4021, %v4020
        %v4053 = vpack.c.b16 %v4023, %v4022
        %v4054 = vpack.c.b16 %v4025, %v4024
        %v4055 = vpack.c.b16 %v4027, %v4026
        %v4056 = vpack.c.b16 %v4029, %v4028
        %v4057 = vpack.c.b16 %v4031, %v4030
        %v4058 = vpack.c.b16 %v4033, %v4032
        %v4059 = vpack.c.b16 %v4035, %v4034
        %v4060 = vpack.c.b16 %v4037, %v4036
        %v4061 = vpack.c.b16 %v4039, %v4038
        %v4062 = vpack.c.b16 %v4041, %v4040
        %v4063 = vpack.c.b16 %v4043, %v4042
        %v4064 = vpack.c.b16 %v4045, %v4044
        %v4065 = vpack.c.b16 %v4047, %v4046
        %v4066 = vpack.c.b16 %v4049, %v4048
        %v4067 = vpack.c.b16 %v4051, %v4050
        %v4070 = vunpack.c.l.b16 %v4018
        %v4071 = vunpack.c.l.b16 %v4019
        %v4072 = vpack.c.b16 %v4071, %v4070
        %v4075 = vsel %vm683, %v4052, 0
        %v4078 = vsel %vm683, %v4053, 0
        %v4081 = vsel %vm683, %v4054, 0
        %v4084 = vsel %vm683, %v4055, 0
        %v4087 = vsel %vm683, %v4056, 0
        %v4090 = vsel %vm683, %v4057, 0
        %v4093 = vsel %vm683, %v4058, 0
        %v4096 = vsel %vm683, %v4059, 0
        %v4099 = vsel %vm683, %v4060, 0
        %v4102 = vsel %vm683, %v4061, 0
        %v4105 = vsel %vm683, %v4062, 0
        %v4108 = vsel %vm683, %v4063, 0
        %v4111 = vsel %vm683, %v4064, 0
        %v4114 = vsel %vm683, %v4065, 0
        %v4117 = vsel %vm683, %v4066, 0
        %v4120 = vsel %vm683, %v4067, 0
        %4122 = vmatprep.subr.bf16.mxu0 0
        %4123 = vmatpush1.bf16.msra.mxu0 %v4072
        %4124 = vmatprep.subr.bf16.mxu0 0
        %4125 = vmatpush1.bf16.msra.mxu0 0
        %4126 = vmatprep.subr.bf16.mxu0 0
        %4127 = vmatpush1.bf16.msra.mxu0 0
        %4128 = vmatprep.subr.bf16.mxu0 0
        %4129 = vmatpush1.bf16.msra.mxu0 0
        %4130 = vmatprep.subr.bf16.mxu0 0
        %4131 = vmatpush1.bf16.msra.mxu0 0
        %4132 = vmatprep.subr.bf16.mxu0 0
        %4133 = vmatpush1.bf16.msra.mxu0 0
        %4134 = vmatprep.subr.bf16.mxu0 0
        %4135 = vmatpush1.bf16.msra.mxu0 0
        %4136 = vmatprep.subr.bf16.mxu0 0
        %4137 = vmatpush1.bf16.msra.mxu0 0
        %4138 = vmatprep.subr.bf16.mxu0 0
        %4139 = vmatpush1.bf16.msra.mxu0 0
        %4140 = vmatprep.subr.bf16.mxu0 0
        %4141 = vmatpush1.bf16.msra.mxu0 0
        %4142 = vmatprep.subr.bf16.mxu0 0
        %4143 = vmatpush1.bf16.msra.mxu0 0
        %4144 = vmatprep.subr.bf16.mxu0 0
        %4145 = vmatpush1.bf16.msra.mxu0 0
        %4146 = vmatprep.subr.bf16.mxu0 0
        %4147 = vmatpush1.bf16.msra.mxu0 0
        %4148 = vmatprep.subr.bf16.mxu0 0
        %4149 = vmatpush1.bf16.msra.mxu0 0
        %4150 = vmatprep.subr.bf16.mxu0 0
        %4151 = vmatpush1.bf16.msra.mxu0 0
        %4152 = vmatprep.subr.bf16.mxu0 0
        %4153 = vmatpush1.bf16.msra.mxu0 0
        %4154 = vmatprep.mubr.bf16.mxu0 0
        %4155 = vmatmul.mubr.bf16.gmra.mrb[0].mxu0 %v4075
        %v4156 = vpop.f32.mrb[0].mxu0
        %v4157 = vadd.f32 0.0, %v4156
        %v4158 = vpop.f32.mrb[0].mxu0
        %v4159 = vpop.f32.mrb[0].mxu0
        %v4160 = vadd.f32 0.0, %v4159
        %v4161 = vpop.f32.mrb[0].mxu0
        %4162 = vmatprep.mubr.bf16.mxu0 0
        %4163 = vmatmul.mubr.bf16.gmra.mrb[0].mxu0 %v4078
        %v4164 = vpop.f32.mrb[0].mxu0
        %v4165 = vadd.f32 0.0, %v4164
        %v4166 = vpop.f32.mrb[0].mxu0
        %v4167 = vpop.f32.mrb[0].mxu0
        %v4168 = vadd.f32 0.0, %v4167
        %v4169 = vpop.f32.mrb[0].mxu0
        %4170 = vmatprep.mubr.bf16.mxu0 0
        %4171 = vmatmul.mubr.bf16.gmra.mrb[0].mxu0 %v4081
        %v4172 = vpop.f32.mrb[0].mxu0
        %v4173 = vadd.f32 0.0, %v4172
        %v4174 = vpop.f32.mrb[0].mxu0
        %v4175 = vpop.f32.mrb[0].mxu0
        %v4176 = vadd.f32 0.0, %v4175
        %v4177 = vpop.f32.mrb[0].mxu0
        %4178 = vmatprep.mubr.bf16.mxu0 0
        %4179 = vmatmul.mubr.bf16.gmra.mrb[0].mxu0 %v4084
        %v4180 = vpop.f32.mrb[0].mxu0
        %v4181 = vadd.f32 0.0, %v4180
        %v4182 = vpop.f32.mrb[0].mxu0
        %v4183 = vpop.f32.mrb[0].mxu0
        %v4184 = vadd.f32 0.0, %v4183
        %v4185 = vpop.f32.mrb[0].mxu0
        %4186 = vmatprep.mubr.bf16.mxu0 0
        %4187 = vmatmul.mubr.bf16.gmra.mrb[0].mxu0 %v4087
        %v4188 = vpop.f32.mrb[0].mxu0
        %v4189 = vadd.f32 0.0, %v4188
        %v4190 = vpop.f32.mrb[0].mxu0
        %v4191 = vpop.f32.mrb[0].mxu0
        %v4192 = vadd.f32 0.0, %v4191
        %v4193 = vpop.f32.mrb[0].mxu0
        %4194 = vmatprep.mubr.bf16.mxu0 0
        %4195 = vmatmul.mubr.bf16.gmra.mrb[0].mxu0 %v4090
        %v4196 = vpop.f32.mrb[0].mxu0
        %v4197 = vadd.f32 0.0, %v4196
        %v4198 = vpop.f32.mrb[0].mxu0
        %v4199 = vpop.f32.mrb[0].mxu0
        %v4200 = vadd.f32 0.0, %v4199
        %v4201 = vpop.f32.mrb[0].mxu0
        %4202 = vmatprep.mubr.bf16.mxu0 0
        %4203 = vmatmul.mubr.bf16.gmra.mrb[0].mxu0 %v4093
        %v4204 = vpop.f32.mrb[0].mxu0
        %v4205 = vadd.f32 0.0, %v4204
        %v4206 = vpop.f32.mrb[0].mxu0
        %v4207 = vpop.f32.mrb[0].mxu0
        %v4208 = vadd.f32 0.0, %v4207
        %v4209 = vpop.f32.mrb[0].mxu0
        %4210 = vmatprep.mubr.bf16.mxu0 0
        %4211 = vmatmul.mubr.bf16.gmra.mrb[0].mxu0 %v4096
        %v4212 = vpop.f32.mrb[0].mxu0
        %v4213 = vadd.f32 0.0, %v4212
        %v4214 = vpop.f32.mrb[0].mxu0
        %v4215 = vpop.f32.mrb[0].mxu0
        %v4216 = vadd.f32 0.0, %v4215
        %v4217 = vpop.f32.mrb[0].mxu0
        %4218 = vmatprep.mubr.bf16.mxu0 0
        %4219 = vmatmul.mubr.bf16.gmra.mrb[0].mxu0 %v4099
        %v4220 = vpop.f32.mrb[0].mxu0
        %v4221 = vadd.f32 0.0, %v4220
        %v4222 = vpop.f32.mrb[0].mxu0
        %v4223 = vpop.f32.mrb[0].mxu0
        %v4224 = vadd.f32 0.0, %v4223
        %v4225 = vpop.f32.mrb[0].mxu0
        %4226 = vmatprep.mubr.bf16.mxu0 0
        %4227 = vmatmul.mubr.bf16.gmra.mrb[0].mxu0 %v4102
        %v4228 = vpop.f32.mrb[0].mxu0
        %v4229 = vadd.f32 0.0, %v4228
        %v4230 = vpop.f32.mrb[0].mxu0
        %v4231 = vpop.f32.mrb[0].mxu0
        %v4232 = vadd.f32 0.0, %v4231
        %v4233 = vpop.f32.mrb[0].mxu0
        %4234 = vmatprep.mubr.bf16.mxu0 0
        %4235 = vmatmul.mubr.bf16.gmra.mrb[0].mxu0 %v4105
        %v4236 = vpop.f32.mrb[0].mxu0
        %v4237 = vadd.f32 0.0, %v4236
        %v4238 = vpop.f32.mrb[0].mxu0
        %v4239 = vpop.f32.mrb[0].mxu0
        %v4240 = vadd.f32 0.0, %v4239
        %v4241 = vpop.f32.mrb[0].mxu0
        %4242 = vmatprep.mubr.bf16.mxu0 0
        %4243 = vmatmul.mubr.bf16.gmra.mrb[0].mxu0 %v4108
        %v4244 = vpop.f32.mrb[0].mxu0
        %v4245 = vadd.f32 0.0, %v4244
        %v4246 = vpop.f32.mrb[0].mxu0
        %v4247 = vpop.f32.mrb[0].mxu0
        %v4248 = vadd.f32 0.0, %v4247
        %v4249 = vpop.f32.mrb[0].mxu0
        %4250 = vmatprep.mubr.bf16.mxu0 0
        %4251 = vmatmul.mubr.bf16.gmra.mrb[0].mxu0 %v4111
        %v4252 = vpop.f32.mrb[0].mxu0
        %v4253 = vadd.f32 0.0, %v4252
        %v4254 = vpop.f32.mrb[0].mxu0
        %v4255 = vpop.f32.mrb[0].mxu0
        %v4256 = vadd.f32 0.0, %v4255
        %v4257 = vpop.f32.mrb[0].mxu0
        %4258 = vmatprep.mubr.bf16.mxu0 0
        %4259 = vmatmul.mubr.bf16.gmra.mrb[0].mxu0 %v4114
        %v4260 = vpop.f32.mrb[0].mxu0
        %v4261 = vadd.f32 0.0, %v4260
        %v4262 = vpop.f32.mrb[0].mxu0
        %v4263 = vpop.f32.mrb[0].mxu0
        %v4264 = vadd.f32 0.0, %v4263
        %v4265 = vpop.f32.mrb[0].mxu0
        %4266 = vmatprep.mubr.bf16.mxu0 0
        %4267 = vmatmul.mubr.bf16.gmra.mrb[0].mxu0 %v4117
        %v4268 = vpop.f32.mrb[0].mxu0
        %v4269 = vadd.f32 0.0, %v4268
        %v4270 = vpop.f32.mrb[0].mxu0
        %v4271 = vpop.f32.mrb[0].mxu0
        %v4272 = vadd.f32 0.0, %v4271
        %v4273 = vpop.f32.mrb[0].mxu0
        %4274 = vmatprep.mubr.bf16.mxu0 0
        %4275 = vmatmul.mubr.bf16.gmra.mrb[0].mxu0 %v4120
        %v4276 = vpop.f32.mrb[0].mxu0
        %v4277 = vadd.f32 0.0, %v4276
        %v4278 = vpop.f32.mrb[0].mxu0
        %v4279 = vpop.f32.mrb[0].mxu0
        %v4280 = vadd.f32 0.0, %v4279
        %v4281 = vpop.f32.mrb[0].mxu0
        %4282 = vdwg.mxu0
        %v4283 = vadd.f32 %v3553, %v4157
        %v4284 = vadd.f32 %v3554, %v4160
        %v4285 = vadd.f32 %v3555, %v4165
        %v4286 = vadd.f32 %v3556, %v4168
        %v4287 = vadd.f32 %v3557, %v4173
        %v4288 = vadd.f32 %v3558, %v4176
        %v4289 = vadd.f32 %v3559, %v4181
        %v4290 = vadd.f32 %v3560, %v4184
        %v4291 = vadd.f32 %v3561, %v4189
        %v4292 = vadd.f32 %v3562, %v4192
        %v4293 = vadd.f32 %v3563, %v4197
        %v4294 = vadd.f32 %v3564, %v4200
        %v4295 = vadd.f32 %v3565, %v4205
        %v4296 = vadd.f32 %v3566, %v4208
        %v4297 = vadd.f32 %v3567, %v4213
        %v4298 = vadd.f32 %v3568, %v4216
        %v4299 = vadd.f32 %v3569, %v4221
        %v4300 = vadd.f32 %v3570, %v4224
        %v4301 = vadd.f32 %v3571, %v4229
        %v4302 = vadd.f32 %v3572, %v4232
        %v4303 = vadd.f32 %v3573, %v4237
        %v4304 = vadd.f32 %v3574, %v4240
        %v4305 = vadd.f32 %v3575, %v4245
        %v4306 = vadd.f32 %v3576, %v4248
        %v4307 = vadd.f32 %v3577, %v4253
        %v4308 = vadd.f32 %v3578, %v4256
        %v4309 = vadd.f32 %v3579, %v4261
        %v4310 = vadd.f32 %v3580, %v4264
        %v4311 = vadd.f32 %v3581, %v4269
        %v4312 = vadd.f32 %v3582, %v4272
        %v4313 = vadd.f32 %v3583, %v4277
        %v4314 = vadd.f32 %v3584, %v4280
        %v4315 = vld [vmem:[%s3222] sm:$0xe]
        %v4316 = vld [vmem:[%s3222 + $0xc] sm:$0xe]
        %v4317 = vld [vmem:[%s3222 + $0x18] sm:$0xe]
        %v4318 = vld [vmem:[%s3222 + $0x24] sm:$0xe]
        %v4319 = vld [vmem:[%s3222 + $0x30] sm:$0xe]
        %v4320 = vld [vmem:[%s3222 + $0x3c] sm:$0xe]
        %v4321 = vld [vmem:[%s3222 + $0x48] sm:$0xe]
        %v4322 = vld [vmem:[%s3222 + $0x54] sm:$0xe]
        %v4323 = vld [vmem:[%s3222 + $0x60] sm:$0xe]
        %v4324 = vld [vmem:[%s3222 + $0x6c] sm:$0xe]
        %v4325 = vld [vmem:[%s3222 + $0x78] sm:$0xe]
        %v4326 = vld [vmem:[%s3222 + $0x84] sm:$0xe]
        %v4327 = vld [vmem:[%s3222 + $0x90] sm:$0xe]
        %v4328 = vld [vmem:[%s3222 + $0x9c] sm:$0xe]
        %v4329 = vld [vmem:[%s3222 + $0xa8] sm:$0xe]
        %v4330 = vld [vmem:[%s3222 + $0xb4] sm:$0xe]
        %v4379 = vrot.slane %v4315, 5
        %v4380 = vrot.slane %v4379, 4
        %v4381 = vrot.slane %v3586, 5
        %v4382 = vsel %vm1238, %v4380, %v4381
        %v4383 = vrot.slane %v4381, 4
        %v4384 = vrot.slane %v3587, 5
        %v4385 = vsel %vm1238, %v4383, %v4384
        %v4386 = vrot.slane %v4316, 5
        %v4387 = vrot.slane %v4386, 4
        %v4388 = vrot.slane %v3589, 5
        %v4389 = vsel %vm1238, %v4387, %v4388
        %v4390 = vrot.slane %v4388, 4
        %v4391 = vrot.slane %v3590, 5
        %v4392 = vsel %vm1238, %v4390, %v4391
        %v4393 = vrot.slane %v4317, 5
        %v4394 = vrot.slane %v4393, 4
        %v4395 = vrot.slane %v3592, 5
        %v4396 = vsel %vm1238, %v4394, %v4395
        %v4397 = vrot.slane %v4395, 4
        %v4398 = vrot.slane %v3593, 5
        %v4399 = vsel %vm1238, %v4397, %v4398
        %v4400 = vrot.slane %v4318, 5
        %v4401 = vrot.slane %v4400, 4
        %v4402 = vrot.slane %v3595, 5
        %v4403 = vsel %vm1238, %v4401, %v4402
        %v4404 = vrot.slane %v4402, 4
        %v4405 = vrot.slane %v3596, 5
        %v4406 = vsel %vm1238, %v4404, %v4405
        %v4407 = vrot.slane %v4319, 5
        %v4408 = vrot.slane %v4407, 4
        %v4409 = vrot.slane %v3598, 5
        %v4410 = vsel %vm1238, %v4408, %v4409
        %v4411 = vrot.slane %v4409, 4
        %v4412 = vrot.slane %v3599, 5
        %v4413 = vsel %vm1238, %v4411, %v4412
        %v4414 = vrot.slane %v4320, 5
        %v4415 = vrot.slane %v4414, 4
        %v4416 = vrot.slane %v3601, 5
        %v4417 = vsel %vm1238, %v4415, %v4416
        %v4418 = vrot.slane %v4416, 4
        %v4419 = vrot.slane %v3602, 5
        %v4420 = vsel %vm1238, %v4418, %v4419
        %v4421 = vrot.slane %v4321, 5
        %v4422 = vrot.slane %v4421, 4
        %v4423 = vrot.slane %v3604, 5
        %v4424 = vsel %vm1238, %v4422, %v4423
        %v4425 = vrot.slane %v4423, 4
        %v4426 = vrot.slane %v3605, 5
        %v4427 = vsel %vm1238, %v4425, %v4426
        %v4428 = vrot.slane %v4322, 5
        %v4429 = vrot.slane %v4428, 4
        %v4430 = vrot.slane %v3607, 5
        %v4431 = vsel %vm1238, %v4429, %v4430
        %v4432 = vrot.slane %v4430, 4
        %v4433 = vrot.slane %v3608, 5
        %v4434 = vsel %vm1238, %v4432, %v4433
        %v4435 = vrot.slane %v4323, 5
        %v4436 = vrot.slane %v4435, 4
        %v4437 = vrot.slane %v3610, 5
        %v4438 = vsel %vm1238, %v4436, %v4437
        %v4439 = vrot.slane %v4437, 4
        %v4440 = vrot.slane %v3611, 5
        %v4441 = vsel %vm1238, %v4439, %v4440
        %v4442 = vrot.slane %v4324, 5
        %v4443 = vrot.slane %v4442, 4
        %v4444 = vrot.slane %v3613, 5
        %v4445 = vsel %vm1238, %v4443, %v4444
        %v4446 = vrot.slane %v4444, 4
        %v4447 = vrot.slane %v3614, 5
        %v4448 = vsel %vm1238, %v4446, %v4447
        %v4449 = vrot.slane %v4325, 5
        %v4450 = vrot.slane %v4449, 4
        %v4451 = vrot.slane %v3616, 5
        %v4452 = vsel %vm1238, %v4450, %v4451
        %v4453 = vrot.slane %v4451, 4
        %v4454 = vrot.slane %v3617, 5
        %v4455 = vsel %vm1238, %v4453, %v4454
        %v4456 = vrot.slane %v4326, 5
        %v4457 = vrot.slane %v4456, 4
        %v4458 = vrot.slane %v3619, 5
        %v4459 = vsel %vm1238, %v4457, %v4458
        %v4460 = vrot.slane %v4458, 4
        %v4461 = vrot.slane %v3620, 5
        %v4462 = vsel %vm1238, %v4460, %v4461
        %v4463 = vrot.slane %v4327, 5
        %v4464 = vrot.slane %v4463, 4
        %v4465 = vrot.slane %v3622, 5
        %v4466 = vsel %vm1238, %v4464, %v4465
        %v4467 = vrot.slane %v4465, 4
        %v4468 = vrot.slane %v3623, 5
        %v4469 = vsel %vm1238, %v4467, %v4468
        %v4470 = vrot.slane %v4328, 5
        %v4471 = vrot.slane %v4470, 4
        %v4472 = vrot.slane %v3625, 5
        %v4473 = vsel %vm1238, %v4471, %v4472
        %v4474 = vrot.slane %v4472, 4
        %v4475 = vrot.slane %v3626, 5
        %v4476 = vsel %vm1238, %v4474, %v4475
        %v4477 = vrot.slane %v4329, 5
        %v4478 = vrot.slane %v4477, 4
        %v4479 = vrot.slane %v3628, 5
        %v4480 = vsel %vm1238, %v4478, %v4479
        %v4481 = vrot.slane %v4479, 4
        %v4482 = vrot.slane %v3629, 5
        %v4483 = vsel %vm1238, %v4481, %v4482
        %v4484 = vrot.slane %v4330, 5
        %v4485 = vrot.slane %v4484, 4
        %v4486 = vrot.slane %v3631, 5
        %v4487 = vsel %vm1238, %v4485, %v4486
        %v4488 = vrot.slane %v4486, 4
        %v4489 = vrot.slane %v3632, 5
        %v4490 = vsel %vm1238, %v4488, %v4489
        %s4491 = scalar_lea.vmem %s1, 64
        %v4492 = vld [vmem:[%s4491] sm:$0xf]
        %v4493 = vld [vmem:[%s4491 + $0x4] sm:$0xf]
        %v4494 = vunpack.c.l.b16 %v4382
        %v4495 = vunpack.c.l.b16 %v4385
        %v4496 = vunpack.c.l.b16 %v4389
        %v4497 = vunpack.c.l.b16 %v4392
        %v4498 = vunpack.c.l.b16 %v4396
        %v4499 = vunpack.c.l.b16 %v4399
        %v4500 = vunpack.c.l.b16 %v4403
        %v4501 = vunpack.c.l.b16 %v4406
        %v4502 = vunpack.c.l.b16 %v4410
        %v4503 = vunpack.c.l.b16 %v4413
        %v4504 = vunpack.c.l.b16 %v4417
        %v4505 = vunpack.c.l.b16 %v4420
        %v4506 = vunpack.c.l.b16 %v4424
        %v4507 = vunpack.c.l.b16 %v4427
        %v4508 = vunpack.c.l.b16 %v4431
        %v4509 = vunpack.c.l.b16 %v4434
        %v4510 = vunpack.c.l.b16 %v4438
        %v4511 = vunpack.c.l.b16 %v4441
        %v4512 = vunpack.c.l.b16 %v4445
        %v4513 = vunpack.c.l.b16 %v4448
        %v4514 = vunpack.c.l.b16 %v4452
        %v4515 = vunpack.c.l.b16 %v4455
        %v4516 = vunpack.c.l.b16 %v4459
        %v4517 = vunpack.c.l.b16 %v4462
        %v4518 = vunpack.c.l.b16 %v4466
        %v4519 = vunpack.c.l.b16 %v4469
        %v4520 = vunpack.c.l.b16 %v4473
        %v4521 = vunpack.c.l.b16 %v4476
        %v4522 = vunpack.c.l.b16 %v4480
        %v4523 = vunpack.c.l.b16 %v4483
        %v4524 = vunpack.c.l.b16 %v4487
        %v4525 = vunpack.c.l.b16 %v4490
        %v4526 = vpack.c.b16 %v4495, %v4494
        %v4527 = vpack.c.b16 %v4497, %v4496
        %v4528 = vpack.c.b16 %v4499, %v4498
        %v4529 = vpack.c.b16 %v4501, %v4500
        %v4530 = vpack.c.b16 %v4503, %v4502
        %v4531 = vpack.c.b16 %v4505, %v4504
        %v4532 = vpack.c.b16 %v4507, %v4506
        %v4533 = vpack.c.b16 %v4509, %v4508
        %v4534 = vpack.c.b16 %v4511, %v4510
        %v4535 = vpack.c.b16 %v4513, %v4512
        %v4536 = vpack.c.b16 %v4515, %v4514
        %v4537 = vpack.c.b16 %v4517, %v4516
        %v4538 = vpack.c.b16 %v4519, %v4518
        %v4539 = vpack.c.b16 %v4521, %v4520
        %v4540 = vpack.c.b16 %v4523, %v4522
        %v4541 = vpack.c.b16 %v4525, %v4524
        %v4544 = vunpack.c.l.b16 %v4492
        %v4545 = vunpack.c.l.b16 %v4493
        %v4546 = vpack.c.b16 %v4545, %v4544
        %v4549 = vsel %vm683, %v4526, 0
        %v4552 = vsel %vm683, %v4527, 0
        %v4555 = vsel %vm683, %v4528, 0
        %v4558 = vsel %vm683, %v4529, 0
        %v4561 = vsel %vm683, %v4530, 0
        %v4564 = vsel %vm683, %v4531, 0
        %v4567 = vsel %vm683, %v4532, 0
        %v4570 = vsel %vm683, %v4533, 0
        %v4573 = vsel %vm683, %v4534, 0
        %v4576 = vsel %vm683, %v4535, 0
        %v4579 = vsel %vm683, %v4536, 0
        %v4582 = vsel %vm683, %v4537, 0
        %v4585 = vsel %vm683, %v4538, 0
        %v4588 = vsel %vm683, %v4539, 0
        %v4591 = vsel %vm683, %v4540, 0
        %v4594 = vsel %vm683, %v4541, 0
        %4596 = vmatprep.subr.bf16.mxu0 0
        %4597 = vmatpush1.bf16.msra.mxu0 %v4546
        %4598 = vmatprep.subr.bf16.mxu0 0
        %4599 = vmatpush1.bf16.msra.mxu0 0
        %4600 = vmatprep.subr.bf16.mxu0 0
        %4601 = vmatpush1.bf16.msra.mxu0 0
        %4602 = vmatprep.subr.bf16.mxu0 0
        %4603 = vmatpush1.bf16.msra.mxu0 0
        %4604 = vmatprep.subr.bf16.mxu0 0
        %4605 = vmatpush1.bf16.msra.mxu0 0
        %4606 = vmatprep.subr.bf16.mxu0 0
        %4607 = vmatpush1.bf16.msra.mxu0 0
        %4608 = vmatprep.subr.bf16.mxu0 0
        %4609 = vmatpush1.bf16.msra.mxu0 0
        %4610 = vmatprep.subr.bf16.mxu0 0
        %4611 = vmatpush1.bf16.msra.mxu0 0
        %4612 = vmatprep.subr.bf16.mxu0 0
        %4613 = vmatpush1.bf16.msra.mxu0 0
        %4614 = vmatprep.subr.bf16.mxu0 0
        %4615 = vmatpush1.bf16.msra.mxu0 0
        %4616 = vmatprep.subr.bf16.mxu0 0
        %4617 = vmatpush1.bf16.msra.mxu0 0
        %4618 = vmatprep.subr.bf16.mxu0 0
        %4619 = vmatpush1.bf16.msra.mxu0 0
        %4620 = vmatprep.subr.bf16.mxu0 0
        %4621 = vmatpush1.bf16.msra.mxu0 0
        %4622 = vmatprep.subr.bf16.mxu0 0
        %4623 = vmatpush1.bf16.msra.mxu0 0
        %4624 = vmatprep.subr.bf16.mxu0 0
        %4625 = vmatpush1.bf16.msra.mxu0 0
        %4626 = vmatprep.subr.bf16.mxu0 0
        %4627 = vmatpush1.bf16.msra.mxu0 0
        %4628 = vmatprep.mubr.bf16.mxu0 0
        %4629 = vmatmul.mubr.bf16.gmra.mrb[0].mxu0 %v4549
        %v4630 = vpop.f32.mrb[0].mxu0
        %v4631 = vadd.f32 0.0, %v4630
        %v4632 = vpop.f32.mrb[0].mxu0
        %v4633 = vpop.f32.mrb[0].mxu0
        %v4634 = vadd.f32 0.0, %v4633
        %v4635 = vpop.f32.mrb[0].mxu0
        %4636 = vmatprep.mubr.bf16.mxu0 0
        %4637 = vmatmul.mubr.bf16.gmra.mrb[0].mxu0 %v4552
        %v4638 = vpop.f32.mrb[0].mxu0
        %v4639 = vadd.f32 0.0, %v4638
        %v4640 = vpop.f32.mrb[0].mxu0
        %v4641 = vpop.f32.mrb[0].mxu0
        %v4642 = vadd.f32 0.0, %v4641
        %v4643 = vpop.f32.mrb[0].mxu0
        %4644 = vmatprep.mubr.bf16.mxu0 0
        %4645 = vmatmul.mubr.bf16.gmra.mrb[0].mxu0 %v4555
        %v4646 = vpop.f32.mrb[0].mxu0
        %v4647 = vadd.f32 0.0, %v4646
        %v4648 = vpop.f32.mrb[0].mxu0
        %v4649 = vpop.f32.mrb[0].mxu0
        %v4650 = vadd.f32 0.0, %v4649
        %v4651 = vpop.f32.mrb[0].mxu0
        %4652 = vmatprep.mubr.bf16.mxu0 0
        %4653 = vmatmul.mubr.bf16.gmra.mrb[0].mxu0 %v4558
        %v4654 = vpop.f32.mrb[0].mxu0
        %v4655 = vadd.f32 0.0, %v4654
        %v4656 = vpop.f32.mrb[0].mxu0
        %v4657 = vpop.f32.mrb[0].mxu0
        %v4658 = vadd.f32 0.0, %v4657
        %v4659 = vpop.f32.mrb[0].mxu0
        %4660 = vmatprep.mubr.bf16.mxu0 0
        %4661 = vmatmul.mubr.bf16.gmra.mrb[0].mxu0 %v4561
        %v4662 = vpop.f32.mrb[0].mxu0
        %v4663 = vadd.f32 0.0, %v4662
        %v4664 = vpop.f32.mrb[0].mxu0
        %v4665 = vpop.f32.mrb[0].mxu0
        %v4666 = vadd.f32 0.0, %v4665
        %v4667 = vpop.f32.mrb[0].mxu0
        %4668 = vmatprep.mubr.bf16.mxu0 0
        %4669 = vmatmul.mubr.bf16.gmra.mrb[0].mxu0 %v4564
        %v4670 = vpop.f32.mrb[0].mxu0
        %v4671 = vadd.f32 0.0, %v4670
        %v4672 = vpop.f32.mrb[0].mxu0
        %v4673 = vpop.f32.mrb[0].mxu0
        %v4674 = vadd.f32 0.0, %v4673
        %v4675 = vpop.f32.mrb[0].mxu0
        %4676 = vmatprep.mubr.bf16.mxu0 0
        %4677 = vmatmul.mubr.bf16.gmra.mrb[0].mxu0 %v4567
        %v4678 = vpop.f32.mrb[0].mxu0
        %v4679 = vadd.f32 0.0, %v4678
        %v4680 = vpop.f32.mrb[0].mxu0
        %v4681 = vpop.f32.mrb[0].mxu0
        %v4682 = vadd.f32 0.0, %v4681
        %v4683 = vpop.f32.mrb[0].mxu0
        %4684 = vmatprep.mubr.bf16.mxu0 0
        %4685 = vmatmul.mubr.bf16.gmra.mrb[0].mxu0 %v4570
        %v4686 = vpop.f32.mrb[0].mxu0
        %v4687 = vadd.f32 0.0, %v4686
        %v4688 = vpop.f32.mrb[0].mxu0
        %v4689 = vpop.f32.mrb[0].mxu0
        %v4690 = vadd.f32 0.0, %v4689
        %v4691 = vpop.f32.mrb[0].mxu0
        %4692 = vmatprep.mubr.bf16.mxu0 0
        %4693 = vmatmul.mubr.bf16.gmra.mrb[0].mxu0 %v4573
        %v4694 = vpop.f32.mrb[0].mxu0
        %v4695 = vadd.f32 0.0, %v4694
        %v4696 = vpop.f32.mrb[0].mxu0
        %v4697 = vpop.f32.mrb[0].mxu0
        %v4698 = vadd.f32 0.0, %v4697
        %v4699 = vpop.f32.mrb[0].mxu0
        %4700 = vmatprep.mubr.bf16.mxu0 0
        %4701 = vmatmul.mubr.bf16.gmra.mrb[0].mxu0 %v4576
        %v4702 = vpop.f32.mrb[0].mxu0
        %v4703 = vadd.f32 0.0, %v4702
        %v4704 = vpop.f32.mrb[0].mxu0
        %v4705 = vpop.f32.mrb[0].mxu0
        %v4706 = vadd.f32 0.0, %v4705
        %v4707 = vpop.f32.mrb[0].mxu0
        %4708 = vmatprep.mubr.bf16.mxu0 0
        %4709 = vmatmul.mubr.bf16.gmra.mrb[0].mxu0 %v4579
        %v4710 = vpop.f32.mrb[0].mxu0
        %v4711 = vadd.f32 0.0, %v4710
        %v4712 = vpop.f32.mrb[0].mxu0
        %v4713 = vpop.f32.mrb[0].mxu0
        %v4714 = vadd.f32 0.0, %v4713
        %v4715 = vpop.f32.mrb[0].mxu0
        %4716 = vmatprep.mubr.bf16.mxu0 0
        %4717 = vmatmul.mubr.bf16.gmra.mrb[0].mxu0 %v4582
        %v4718 = vpop.f32.mrb[0].mxu0
        %v4719 = vadd.f32 0.0, %v4718
        %v4720 = vpop.f32.mrb[0].mxu0
        %v4721 = vpop.f32.mrb[0].mxu0
        %v4722 = vadd.f32 0.0, %v4721
        %v4723 = vpop.f32.mrb[0].mxu0
        %4724 = vmatprep.mubr.bf16.mxu0 0
        %4725 = vmatmul.mubr.bf16.gmra.mrb[0].mxu0 %v4585
        %v4726 = vpop.f32.mrb[0].mxu0
        %v4727 = vadd.f32 0.0, %v4726
        %v4728 = vpop.f32.mrb[0].mxu0
        %v4729 = vpop.f32.mrb[0].mxu0
        %v4730 = vadd.f32 0.0, %v4729
        %v4731 = vpop.f32.mrb[0].mxu0
        %4732 = vmatprep.mubr.bf16.mxu0 0
        %4733 = vmatmul.mubr.bf16.gmra.mrb[0].mxu0 %v4588
        %v4734 = vpop.f32.mrb[0].mxu0
        %v4735 = vadd.f32 0.0, %v4734
        %v4736 = vpop.f32.mrb[0].mxu0
        %v4737 = vpop.f32.mrb[0].mxu0
        %v4738 = vadd.f32 0.0, %v4737
        %v4739 = vpop.f32.mrb[0].mxu0
        %4740 = vmatprep.mubr.bf16.mxu0 0
        %4741 = vmatmul.mubr.bf16.gmra.mrb[0].mxu0 %v4591
        %v4742 = vpop.f32.mrb[0].mxu0
        %v4743 = vadd.f32 0.0, %v4742
        %v4744 = vpop.f32.mrb[0].mxu0
        %v4745 = vpop.f32.mrb[0].mxu0
        %v4746 = vadd.f32 0.0, %v4745
        %v4747 = vpop.f32.mrb[0].mxu0
        %4748 = vmatprep.mubr.bf16.mxu0 0
        %4749 = vmatmul.mubr.bf16.gmra.mrb[0].mxu0 %v4594
        %v4750 = vpop.f32.mrb[0].mxu0
        %v4751 = vadd.f32 0.0, %v4750
        %v4752 = vpop.f32.mrb[0].mxu0
        %v4753 = vpop.f32.mrb[0].mxu0
        %v4754 = vadd.f32 0.0, %v4753
        %v4755 = vpop.f32.mrb[0].mxu0
        %4756 = vdwg.mxu0
        %v4757 = vadd.f32 %v4283, %v4631
        %v4758 = vadd.f32 %v4284, %v4634
        %v4759 = vadd.f32 %v4285, %v4639
        %v4760 = vadd.f32 %v4286, %v4642
        %v4761 = vadd.f32 %v4287, %v4647
        %v4762 = vadd.f32 %v4288, %v4650
        %v4763 = vadd.f32 %v4289, %v4655
        %v4764 = vadd.f32 %v4290, %v4658
        %v4765 = vadd.f32 %v4291, %v4663
        %v4766 = vadd.f32 %v4292, %v4666
        %v4767 = vadd.f32 %v4293, %v4671
        %v4768 = vadd.f32 %v4294, %v4674
        %v4769 = vadd.f32 %v4295, %v4679
        %v4770 = vadd.f32 %v4296, %v4682
        %v4771 = vadd.f32 %v4297, %v4687
        %v4772 = vadd.f32 %v4298, %v4690
        %v4773 = vadd.f32 %v4299, %v4695
        %v4774 = vadd.f32 %v4300, %v4698
        %v4775 = vadd.f32 %v4301, %v4703
        %v4776 = vadd.f32 %v4302, %v4706
        %v4777 = vadd.f32 %v4303, %v4711
        %v4778 = vadd.f32 %v4304, %v4714
        %v4779 = vadd.f32 %v4305, %v4719
        %v4780 = vadd.f32 %v4306, %v4722
        %v4781 = vadd.f32 %v4307, %v4727
        %v4782 = vadd.f32 %v4308, %v4730
        %v4783 = vadd.f32 %v4309, %v4735
        %v4784 = vadd.f32 %v4310, %v4738
        %v4785 = vadd.f32 %v4311, %v4743
        %v4786 = vadd.f32 %v4312, %v4746
        %v4787 = vadd.f32 %v4313, %v4751
        %v4788 = vadd.f32 %v4314, %v4754
        %v4789 = vld [vmem:[%s2] sm:$0x1]
        %v4791 = vlaneseq
        %v4792 = vshrl.u32 %v4791, 7
        %v4793 = vsub.s32 0, %v4792
        %v4794 = vrot.slane %v4789, %v4793
        %v4796 = vadd.f32 %v4757, %v4794
        %v4797 = vadd.f32 %v4758, %v4794
        %v4798 = vadd.f32 %v4759, %v4794
        %v4799 = vadd.f32 %v4760, %v4794
        %v4800 = vadd.f32 %v4761, %v4794
        %v4801 = vadd.f32 %v4762, %v4794
        %v4802 = vadd.f32 %v4763, %v4794
        %v4803 = vadd.f32 %v4764, %v4794
        %v4804 = vadd.f32 %v4765, %v4794
        %v4805 = vadd.f32 %v4766, %v4794
        %v4806 = vadd.f32 %v4767, %v4794
        %v4807 = vadd.f32 %v4768, %v4794
        %v4808 = vadd.f32 %v4769, %v4794
        %v4809 = vadd.f32 %v4770, %v4794
        %v4810 = vadd.f32 %v4771, %v4794
        %v4811 = vadd.f32 %v4772, %v4794
        %v4812 = vadd.f32 %v4773, %v4794
        %v4813 = vadd.f32 %v4774, %v4794
        %v4814 = vadd.f32 %v4775, %v4794
        %v4815 = vadd.f32 %v4776, %v4794
        %v4816 = vadd.f32 %v4777, %v4794
        %v4817 = vadd.f32 %v4778, %v4794
        %v4818 = vadd.f32 %v4779, %v4794
        %v4819 = vadd.f32 %v4780, %v4794
        %v4820 = vadd.f32 %v4781, %v4794
        %v4821 = vadd.f32 %v4782, %v4794
        %v4822 = vadd.f32 %v4783, %v4794
        %v4823 = vadd.f32 %v4784, %v4794
        %v4824 = vadd.f32 %v4785, %v4794
        %v4825 = vadd.f32 %v4786, %v4794
        %v4826 = vadd.f32 %v4787, %v4794
        %v4827 = vadd.f32 %v4788, %v4794
        %v4828 = vmax.f32 %v4796, 0.0
        %v4829 = vmax.f32 %v4797, 0.0
        %v4830 = vmax.f32 %v4798, 0.0
        %v4831 = vmax.f32 %v4799, 0.0
        %v4832 = vmax.f32 %v4800, 0.0
        %v4833 = vmax.f32 %v4801, 0.0
        %v4834 = vmax.f32 %v4802, 0.0
        %v4835 = vmax.f32 %v4803, 0.0
        %v4836 = vmax.f32 %v4804, 0.0
        %v4837 = vmax.f32 %v4805, 0.0
        %v4838 = vmax.f32 %v4806, 0.0
        %v4839 = vmax.f32 %v4807, 0.0
        %v4840 = vmax.f32 %v4808, 0.0
        %v4841 = vmax.f32 %v4809, 0.0
        %v4842 = vmax.f32 %v4810, 0.0
        %v4843 = vmax.f32 %v4811, 0.0
        %v4844 = vmax.f32 %v4812, 0.0
        %v4845 = vmax.f32 %v4813, 0.0
        %v4846 = vmax.f32 %v4814, 0.0
        %v4847 = vmax.f32 %v4815, 0.0
        %v4848 = vmax.f32 %v4816, 0.0
        %v4849 = vmax.f32 %v4817, 0.0
        %v4850 = vmax.f32 %v4818, 0.0
        %v4851 = vmax.f32 %v4819, 0.0
        %v4852 = vmax.f32 %v4820, 0.0
        %v4853 = vmax.f32 %v4821, 0.0
        %v4854 = vmax.f32 %v4822, 0.0
        %v4855 = vmax.f32 %v4823, 0.0
        %v4856 = vmax.f32 %v4824, 0.0
        %v4857 = vmax.f32 %v4825, 0.0
        %v4858 = vmax.f32 %v4826, 0.0
        %v4859 = vmax.f32 %v4827, 0.0
        %4860 = vst [vmem:[%s177] sm:$0xff] %v4828
        %4861 = vst [vmem:[%s177 + $0x8] sm:$0xff] %v4829
        %4862 = vst [vmem:[%s177 + $0x10] sm:$0xff] %v4830
        %4863 = vst [vmem:[%s177 + $0x18] sm:$0xff] %v4831
        %4864 = vst [vmem:[%s177 + $0x20] sm:$0xff] %v4832
        %4865 = vst [vmem:[%s177 + $0x28] sm:$0xff] %v4833
        %4866 = vst [vmem:[%s177 + $0x30] sm:$0xff] %v4834
        %4867 = vst [vmem:[%s177 + $0x38] sm:$0xff] %v4835
        %4868 = vst [vmem:[%s177 + $0x40] sm:$0xff] %v4836
        %4869 = vst [vmem:[%s177 + $0x48] sm:$0xff] %v4837
        %4870 = vst [vmem:[%s177 + $0x50] sm:$0xff] %v4838
        %4871 = vst [vmem:[%s177 + $0x58] sm:$0xff] %v4839
        %4872 = vst [vmem:[%s177 + $0x60] sm:$0xff] %v4840
        %4873 = vst [vmem:[%s177 + $0x68] sm:$0xff] %v4841
        %4874 = vst [vmem:[%s177 + $0x70] sm:$0xff] %v4842
        %4875 = vst [vmem:[%s177 + $0x78] sm:$0xff] %v4843
        %4876 = vst [vmem:[%s177 + $0x80] sm:$0xff] %v4844
        %4877 = vst [vmem:[%s177 + $0x88] sm:$0xff] %v4845
        %4878 = vst [vmem:[%s177 + $0x90] sm:$0xff] %v4846
        %4879 = vst [vmem:[%s177 + $0x98] sm:$0xff] %v4847
        %4880 = vst [vmem:[%s177 + $0xa0] sm:$0xff] %v4848
        %4881 = vst [vmem:[%s177 + $0xa8] sm:$0xff] %v4849
        %4882 = vst [vmem:[%s177 + $0xb0] sm:$0xff] %v4850
        %4883 = vst [vmem:[%s177 + $0xb8] sm:$0xff] %v4851
        %4884 = vst [vmem:[%s177 + $0xc0] sm:$0xff] %v4852
        %4885 = vst [vmem:[%s177 + $0xc8] sm:$0xff] %v4853
        %4886 = vst [vmem:[%s177 + $0xd0] sm:$0xff] %v4854
        %4887 = vst [vmem:[%s177 + $0xd8] sm:$0xff] %v4855
        %4888 = vst [vmem:[%s177 + $0xe0] sm:$0xff] %v4856
        %4889 = vst [vmem:[%s177 + $0xe8] sm:$0xff] %v4857
        %4890 = vst [vmem:[%s177 + $0xf0] sm:$0xff] %v4858
        %4891 = vst [vmem:[%s177 + $0xf8] sm:$0xff] %v4859
        %s4892 = sand.u32 %s107, 1
        %s4893 = scalar_lea.sflag [#allocation3], %s4892
        %s4894 = sand.u32 %s107, 1
        %s4895 = smul.addr %s4894, 256
        %s4896 = scalar_lea.vmem [#allocation2], %s4895
        // Predicated region
        $region33: #{tpu_custom_call.1} parent=31 // pred_check
          %p4897 = pneg %p117
        $region34: #{tpu_custom_call.1} parent=31 // pred_check_branch
          %4899 = sbr.rel (%p4897) target = $region36
        $region35: #{tpu_custom_call.1} parent=31 // pred_region
          %s4900 = smul.u32 32, %s22
          %s4902 = ssub.s32 4096, 4096
          %4903 = vsyncadd %s4893, %s4902
          %s4904 = smul.addr %s21, 32
          %s4905 = sadd.s32 %s4900, %s4904
          %s4906 = smul.addr %s4905, 128
          %s4907 = scalar_lea.hbm %s3, %s4906
          %s4908 = sshll.u32 %s4896, 4
          %s4909 = int_to_ptr.vmem [resolvable:$true] %s4908
          %4914 = dma.vmem_to_hbm [thread:$0]  %s4909, 4096, %s4907, %s4893, 128, 128, 8
        $region36: #{tpu_custom_call.1} parent=31 // pred_fallthru
          _
      $region32: #{tpu_custom_call.1} parent=5 // pred_fallthru
        _
      %p4915 = scmp.le.s32.totalorder 2, %s12
      // Predicated region
      $region37: #{tpu_custom_call.1} parent=5 // pred_check
        %p4916 = pneg %p4915
      $region38: #{tpu_custom_call.1} parent=5 // pred_check_branch
        %4918 = sbr.rel (%p4916) target = $region40
      $region39: #{tpu_custom_call.1} parent=5 // pred_region
        %s4919 = ssub.s32 %s12, 2
        // Predicated region
        $region41: #{tpu_custom_call.1} parent=39 // pred_check
          %p4920 = pneg %p123
        $region42: #{tpu_custom_call.1} parent=39 // pred_check_branch
          %4922 = sbr.rel (%p4920) target = $region44
        $region43: #{tpu_custom_call.1} parent=39 // pred_region
          %s4923 = sand.u32 %s108, 1
          %s4924 = scalar_lea.sflag [#allocation3], %s4923
          %s4925 = sand.u32 %s108, 1
          %s4926 = smul.addr %s4925, 256
          %s4927 = scalar_lea.vmem [#allocation2], %s4926
          %4928 = dma.done %s4924, 4096
        $region44: #{tpu_custom_call.1} parent=39 // pred_fallthru
          _
      $region40: #{tpu_custom_call.1} parent=5 // pred_fallthru
        _
    $region6: #{tpu_custom_call.1} parent=1 // loop_footer
      %s16 = sadd.s32 1, %s12
    $region7: #{tpu_custom_call.1} parent=1 // loop_footer_branch
      %11 = sbr.rel target = $region3
    $region8: #{tpu_custom_call.1} parent=1 // loop_exit
      _
    %4929 = vsyncpa [#allocation3], 1
    %s4930 = scalar_lea.sflag [#allocation3], 1
    %4931 = vsyncpa %s4930, 1

</llo_original>
